<compile_context>
chip_gen: v5e
topology: v5e:2x2
jax: 0.10.0
libtpu: 0.0.40
codegen_flags: <defaults>
</compile_context>

<pallas_src>
import jax
import jax.numpy as jnp
from jax.experimental import pallas as pl
from jax.experimental.pallas import tpu as pltpu

HIDDEN = 768
NUM_CLASSES = 2


def _round_up(x, m):
    return ((x + m - 1) // m) * m


def _head_kernel(xt_ref, w1_ref, b1_ref, w2_ref, b2_ref, out_ref):
    # xt : [HIDDEN, tm]          bf16  (columns = token feature vectors)
    # w1 : [HIDDEN, HIDDEN]      bf16  (PyTorch [out, in] layout)
    # b1 : [HIDDEN, 1]           f32
    # w2 : [NUM_CLASSES, HIDDEN] bf16
    # b2 : [NUM_CLASSES, 1]      f32
    # out: [NUM_CLASSES, tm]     f32   (lane-dense: last dim is the row tile)
    h = jnp.dot(w1_ref[...], xt_ref[...], preferred_element_type=jnp.float32)
    h = jnp.tanh(h + b1_ref[...])
    logits = jnp.dot(w2_ref[...], h.astype(jnp.bfloat16),
                     preferred_element_type=jnp.float32)
    out_ref[...] = (logits + b2_ref[...]).astype(out_ref.dtype)


def classification_head(x2d, params):
    """x2d: [N, 768] float -> logits [N, 2] float32 (dense -> tanh -> out_proj)."""
    w1, b1, w2, b2 = params
    n = x2d.shape[0]

    # Lane-align the row count (columns of x^T) to 128, then pick the largest row
    # tile in {512, 256, 128} that divides it.  Large tiles amortize the ~0.35us
    # per-grid-step overhead; multiple steps let the "parallel" axis use both
    # v7x TensorCores for big batches.
    n_pad = max(_round_up(n, 128), 128)
    if n_pad <= 512:
        tm = n_pad
    elif n_pad % 512 == 0:
        tm = 512
    elif n_pad % 256 == 0:
        tm = 256
    else:
        tm = 128

    # Column-major bf16 activations: halves activation DMA bytes and makes the
    # [2, tm] output store lane-dense.  Pad + cast + transpose fuse in XLA.
    xt = jnp.pad(x2d, ((0, n_pad - n), (0, 0))).astype(jnp.bfloat16).T  # [HIDDEN, n_pad]

    cost = pl.CostEstimate(
        flops=2 * n_pad * HIDDEN * (HIDDEN + NUM_CLASSES),
        transcendentals=n_pad * HIDDEN,              # tanh
        bytes_accessed=(n_pad * HIDDEN * 2           # x (bf16)
                        + HIDDEN * HIDDEN * 2        # w1 (bf16)
                        + NUM_CLASSES * HIDDEN * 2   # w2 (bf16)
                        + (HIDDEN + NUM_CLASSES) * 4  # biases (f32)
                        + n_pad * NUM_CLASSES * 4),  # logits (f32)
    )

    logits_t = pl.pallas_call(
        _head_kernel,
        out_shape=jax.ShapeDtypeStruct((NUM_CLASSES, n_pad), jnp.float32),
        grid_spec=pltpu.PrefetchScalarGridSpec(
            num_scalar_prefetch=0,
            grid=(n_pad // tm,),
            in_specs=[
                pl.BlockSpec((HIDDEN, tm), lambda i: (0, i)),
                pl.BlockSpec((HIDDEN, HIDDEN), lambda i: (0, 0)),
                pl.BlockSpec((HIDDEN, 1), lambda i: (0, 0)),
                pl.BlockSpec((NUM_CLASSES, HIDDEN), lambda i: (0, 0)),
                pl.BlockSpec((NUM_CLASSES, 1), lambda i: (0, 0)),
            ],
            out_specs=pl.BlockSpec((NUM_CLASSES, tm), lambda i: (0, i)),
        ),
        compiler_params=pltpu.CompilerParams(
            dimension_semantics=("parallel",),
        ),
        cost_estimate=cost,
    )(xt, w1, b1, w2, b2)

    return logits_t.T[:n]  # [n, NUM_CLASSES] float32


def roberta_classification_head(params, features):
    """Mirrors RobertaClassificationHead.forward in eval mode (dropout = identity)."""
    B, S, H = features.shape
    assert H == HIDDEN
    logits = classification_head(features.reshape(B * S, H), params)
    return logits.reshape(B, S, NUM_CLASSES)


def policy_probs(logits):
    """policyNet glue: softmax + clamp on the tiny [.., 2] logits, outside the kernel."""
    prob = jax.nn.softmax(logits, axis=-1)
    c_prob = jnp.clip(prob, 1e-10, 1.0 - 1e-10)
    return prob, c_prob


def init_params(key):
    """PyTorch nn.Linear default init (U(+-1/sqrt(fan_in))); weights stored bf16."""
    k1, k2, k3, k4 = jax.random.split(key, 4)
    bound = 1.0 / jnp.sqrt(jnp.float32(HIDDEN))
    w1 = jax.random.uniform(k1, (HIDDEN, HIDDEN), jnp.float32, -bound, bound)
    b1 = jax.random.uniform(k2, (HIDDEN, 1), jnp.float32, -bound, bound)
    w2 = jax.random.uniform(k3, (NUM_CLASSES, HIDDEN), jnp.float32, -bound, bound)
    b2 = jax.random.uniform(k4, (NUM_CLASSES, 1), jnp.float32, -bound, bound)
    return w1.astype(jnp.bfloat16), b1, w2.astype(jnp.bfloat16), b2


def _reference(x2d, params):
    """Pure-JAX reference with matching bf16 matmul / f32 accumulation precision."""
    w1, b1, w2, b2 = params
    xb = x2d.astype(jnp.bfloat16)
    h = jnp.dot(xb, w1.T, preferred_element_type=jnp.float32) + b1[:, 0][None, :]
    h = jnp.tanh(h)
    logits = (jnp.dot(h.astype(jnp.bfloat16), w2.T, preferred_element_type=jnp.float32)
              + b2[:, 0][None, :])
    return logits


if __name__ == "__main__":
    key = jax.random.PRNGKey(0)
    kp, kx = jax.random.split(key)

    B, S = 2, 8  # small demo shapes; hidden is fixed at 768 by the module
    params = init_params(kp)
    features = jax.random.normal(kx, (B, S, HIDDEN), dtype=jnp.float32)

    logits = roberta_classification_head(params, features)
    jax.block_until_ready(logits)

    assert logits.shape == (B, S, NUM_CLASSES)
    ref = _reference(features.reshape(B * S, HIDDEN), params).reshape(B, S, NUM_CLASSES)
    assert bool(jnp.allclose(logits, ref, atol=1e-2)), "kernel mismatch vs reference"

    # downstream policyNet usage (softmax + clamp) stays in plain XLA
    prob, c_prob = policy_probs(logits)
    jax.block_until_ready(c_prob)
    assert bool(jnp.allclose(jnp.sum(prob, axis=-1), 1.0, atol=1e-5))
    assert prob.shape == (B, S, NUM_CLASSES) and c_prob.shape == (B, S, NUM_CLASSES)

    print("KERNEL_OK")
</pallas_src>

<mosaic_0001>
module attributes {stable_mosaic.version = 11 : i64} {
  func.func @_head_kernel(%arg0: i32, %arg1: memref<768x128xbf16, #tpu.memory_space<vmem>>, %arg2: memref<768x768xbf16, #tpu.memory_space<vmem>>, %arg3: memref<768x1xf32, #tpu.memory_space<vmem>>, %arg4: memref<2x768xbf16, #tpu.memory_space<vmem>>, %arg5: memref<2x1xf32, #tpu.memory_space<vmem>>, %arg6: memref<2x128xf32, #tpu.memory_space<vmem>>) attributes {dimension_semantics = [#tpu.dimension_semantics<parallel>], iteration_bounds = array<i64: 1>, scalar_prefetch = 0 : i64, scratch_operands = 0 : i64, tpu.core_type = #tpu.core_type<tc>, window_params = [{transform_indices = @transform_0, window_bounds = array<i64: 768, 128>}, {pipeline_mode = #tpu.pipeline_mode<synchronous>, transform_indices = @transform_1, window_bounds = array<i64: 768, 768>}, {pipeline_mode = #tpu.pipeline_mode<synchronous>, transform_indices = @transform_2, window_bounds = array<i64: 768, 1>}, {pipeline_mode = #tpu.pipeline_mode<synchronous>, transform_indices = @transform_3, window_bounds = array<i64: 2, 768>}, {pipeline_mode = #tpu.pipeline_mode<synchronous>, transform_indices = @transform_4, window_bounds = array<i64: 2, 1>}, {transform_indices = @transform_5, window_bounds = array<i64: 2, 128>}]} {
    %c0 = arith.constant 0 : index
    %c0_0 = arith.constant 0 : index
    %0 = vector.load %arg2[%c0, %c0_0] : memref<768x768xbf16, #tpu.memory_space<vmem>>, vector<768x768xbf16>
    %c0_1 = arith.constant 0 : index
    %c0_2 = arith.constant 0 : index
    %1 = vector.load %arg1[%c0_1, %c0_2] : memref<768x128xbf16, #tpu.memory_space<vmem>>, vector<768x128xbf16>
    %cst = arith.constant dense<0.000000e+00> : vector<768x128xf32>
    %2 = tpu.matmul %0, %1, %cst {dimension_numbers = #tpu.dot_dimension_numbers<[1], [0], [0], [1], [0, 0, 1, 1], [], []>} : vector<768x768xbf16>, vector<768x128xbf16>, vector<768x128xf32> -> vector<768x128xf32>
    %c0_3 = arith.constant 0 : index
    %c0_4 = arith.constant 0 : index
    %3 = vector.load %arg3[%c0_3, %c0_4] : memref<768x1xf32, #tpu.memory_space<vmem>>, vector<768x1xf32>
    %4 = vector.broadcast %3 : vector<768x1xf32> to vector<768x128xf32>
    %5 = arith.addf %2, %4 : vector<768x128xf32>
    %6 = math.tanh %5 : vector<768x128xf32>
    %c0_5 = arith.constant 0 : index
    %c0_6 = arith.constant 0 : index
    %7 = vector.load %arg4[%c0_5, %c0_6] : memref<2x768xbf16, #tpu.memory_space<vmem>>, vector<2x768xbf16>
    %8 = arith.truncf %6 : vector<768x128xf32> to vector<768x128xbf16>
    %cst_7 = arith.constant dense<0.000000e+00> : vector<2x128xf32>
    %9 = tpu.matmul %7, %8, %cst_7 {dimension_numbers = #tpu.dot_dimension_numbers<[1], [0], [0], [1], [0, 0, 1, 1], [], []>} : vector<2x768xbf16>, vector<768x128xbf16>, vector<2x128xf32> -> vector<2x128xf32>
    %c0_8 = arith.constant 0 : index
    %c0_9 = arith.constant 0 : index
    %10 = vector.load %arg5[%c0_8, %c0_9] : memref<2x1xf32, #tpu.memory_space<vmem>>, vector<2x1xf32>
    %11 = vector.broadcast %10 : vector<2x1xf32> to vector<2x128xf32>
    %12 = arith.addf %9, %11 : vector<2x128xf32>
    %c0_10 = arith.constant 0 : index
    %c0_11 = arith.constant 0 : index
    %13 = vector.load %arg6[%c0_10, %c0_11] : memref<2x128xf32, #tpu.memory_space<vmem>>, vector<2x128xf32>
    tpu.vector_store %arg6[%c0_10, %c0_11], %12 {strides = array<i32>} : memref<2x128xf32, #tpu.memory_space<vmem>>, vector<2x128xf32>,
    return
  }
  func.func @transform_0(%arg0: i32) -> (i32, i32) {
    %c0_i32 = arith.constant 0 : i32
    %c0_i32_0 = arith.constant 0 : i32
    return %c0_i32, %arg0 : i32, i32
  }
  func.func @transform_1(%arg0: i32) -> (i32, i32) {
    %c0_i32 = arith.constant 0 : i32
    %c0_i32_0 = arith.constant 0 : i32
    %c0_i32_1 = arith.constant 0 : i32
    return %c0_i32, %c0_i32_0 : i32, i32
  }
  func.func @transform_2(%arg0: i32) -> (i32, i32) {
    %c0_i32 = arith.constant 0 : i32
    %c0_i32_0 = arith.constant 0 : i32
    %c0_i32_1 = arith.constant 0 : i32
    return %c0_i32, %c0_i32_0 : i32, i32
  }
  func.func @transform_3(%arg0: i32) -> (i32, i32) {
    %c0_i32 = arith.constant 0 : i32
    %c0_i32_0 = arith.constant 0 : i32
    %c0_i32_1 = arith.constant 0 : i32
    return %c0_i32, %c0_i32_0 : i32, i32
  }
  func.func @transform_4(%arg0: i32) -> (i32, i32) {
    %c0_i32 = arith.constant 0 : i32
    %c0_i32_0 = arith.constant 0 : i32
    %c0_i32_1 = arith.constant 0 : i32
    return %c0_i32, %c0_i32_0 : i32, i32
  }
  func.func @transform_5(%arg0: i32) -> (i32, i32) {
    %c0_i32 = arith.constant 0 : i32
    %c0_i32_0 = arith.constant 0 : i32
    return %c0_i32, %arg0 : i32, i32
  }
}

</mosaic_0001>

<llo_original>
// kernel: tpu_custom_call.1
$region0: #{tpu_custom_call.1}
  #allocation0 [shape = 'u32[]', space=smem, size = 0x4, offset = 0x4, fixed_abs, tag = 'smem constant byte address 0x4 - core index']
  #allocation1 [shape = 'u32[72,128]{1,0:T(1,128)}', space=vmem, size = 0x9000, scoped, tag = 'internal scratch']
  %s0 = inlined_call_operand.hbm [shape: bf16[768,128], index: 0, kind: input, shape index: {}]
  %s1 = inlined_call_operand.hbm [shape: bf16[768,768], index: 1, kind: input, shape index: {}]
  %s2 = inlined_call_operand.vmem [shape: f32[768,1], index: 2, kind: input, shape index: {}]
  %s3 = inlined_call_operand.hbm [shape: bf16[2,768], index: 3, kind: input, shape index: {}]
  %s4 = inlined_call_operand.vmem [shape: f32[2,1], index: 4, kind: input, shape index: {}]
  %s5 = inlined_call_operand.hbm [shape: f32[2,128], index: 5, kind: output, shape index: {}]
  %s6 = sld [smem:[#allocation0]]
  $region42: #{tpu_custom_call.1} parent=0
    _
  %s8 = ssub.s32 1, %s6
  %s9 = scalar_select 0, %s8, %s6
  $region1: #{tpu_custom_call.1} parent=0
    #allocation2 [shape = 'u8[196608]{0}', space=vmem, size = 0x30000, scoped, tag = 'input window, operand 0, single buffered']
    #allocation3 [shape = 's32[1]{0}', space=sflag, size = 0x4, scoped, tag = 'scoped memory for tpu_custom_call.1']
    #allocation4 [shape = 's32[1]{0}', space=sflag, size = 0x4, scoped, tag = 'scoped memory for tpu_custom_call.1']
    #allocation5 [shape = 'u8[1179648]{0}', space=vmem, size = 0x120000, scoped, tag = 'input window, operand 1, single buffered']
    #allocation6 [shape = 's32[1]{0}', space=sflag, size = 0x4, scoped, tag = 'scoped memory for tpu_custom_call.1']
    #allocation7 [shape = 'u8[3072]{0}', space=vmem, size = 0xc00, scoped, tag = 'input window, operand 3, single buffered']
    #allocation8 [shape = 'u8[1024]{0}', space=vmem, size = 0x400, scoped, tag = 'output window, operand 0, single buffered']
    %10 = vsyncpa [#allocation3], 0
    %11 = vsyncpa [#allocation6], 0
    %12 = vsyncpa [#allocation4], 0
    // Predicated region
    $region2: #{tpu_custom_call.1} parent=1 // pred_check
      _
    $region3: #{tpu_custom_call.1} parent=1 // pred_check_branch
      %14 = sbr.rel (0) target = $region5
    $region4: #{tpu_custom_call.1} parent=1 // pred_region
      %16 = vsyncadd [#allocation3], 0
      %s17 = sshll.u32 %s0, 4
      %s18 = int_to_ptr.hbm [resolvable:$true] %s17
      %s19 = sshll.u32 [#allocation2], 4
      %s20 = int_to_ptr.vmem [resolvable:$true] %s19
      %25 = dma.hbm_to_vmem [thread:$0]  %s18, 6144, %s20, [#allocation3], 64, 64, 4
    $region5: #{tpu_custom_call.1} parent=1 // pred_fallthru
      _
    // Predicated region
    $region6: #{tpu_custom_call.1} parent=1 // pred_check
      _
    $region7: #{tpu_custom_call.1} parent=1 // pred_check_branch
      %27 = sbr.rel (0) target = $region9
    $region8: #{tpu_custom_call.1} parent=1 // pred_region
      %29 = vsyncadd [#allocation6], 0
      %s30 = sshll.u32 %s1, 4
      %s31 = int_to_ptr.hbm [resolvable:$true] %s30
      %s32 = sshll.u32 [#allocation5], 4
      %s33 = int_to_ptr.vmem [resolvable:$true] %s32
      %38 = dma.hbm_to_vmem [thread:$0]  %s31, 36864, %s33, [#allocation6], 384, 384, 24
    $region9: #{tpu_custom_call.1} parent=1 // pred_fallthru
      _
    // Predicated region
    $region10: #{tpu_custom_call.1} parent=1 // pred_check
      _
    $region11: #{tpu_custom_call.1} parent=1 // pred_check_branch
      %40 = sbr.rel (0) target = $region13
    $region12: #{tpu_custom_call.1} parent=1 // pred_region
      _
    $region13: #{tpu_custom_call.1} parent=1 // pred_fallthru
      _
    // Predicated region
    $region14: #{tpu_custom_call.1} parent=1 // pred_check
      _
    $region15: #{tpu_custom_call.1} parent=1 // pred_check_branch
      %42 = sbr.rel (0) target = $region17
    $region16: #{tpu_custom_call.1} parent=1 // pred_region
      %44 = vsyncadd [#allocation6], 0
      %s46 = sshll.u32 %s3, 4
      %s47 = int_to_ptr.hbm [resolvable:$true] %s46
      %s48 = sshll.u32 [#allocation7], 4
      %s49 = int_to_ptr.vmem [resolvable:$true] %s48
      %51 = dma.hbm_to_vmem [thread:$0]  %s47, 96, %s49, [#allocation6]
    $region17: #{tpu_custom_call.1} parent=1 // pred_fallthru
      _
    // Predicated region
    $region18: #{tpu_custom_call.1} parent=1 // pred_check
      _
    $region19: #{tpu_custom_call.1} parent=1 // pred_check_branch
      %53 = sbr.rel (0) target = $region21
    $region20: #{tpu_custom_call.1} parent=1 // pred_region
      _
    $region21: #{tpu_custom_call.1} parent=1 // pred_fallthru
      _
    // Predicated region
    $region22: #{tpu_custom_call.1} parent=1 // pred_check
      _
    $region23: #{tpu_custom_call.1} parent=1 // pred_check_branch
      %55 = sbr.rel (0) target = $region25
    $region24: #{tpu_custom_call.1} parent=1 // pred_region
      %57 = dma.done [#allocation3], 6144
    $region25: #{tpu_custom_call.1} parent=1 // pred_fallthru
      _
    // Predicated region
    $region26: #{tpu_custom_call.1} parent=1 // pred_check
      _
    $region27: #{tpu_custom_call.1} parent=1 // pred_check_branch
      %59 = sbr.rel (0) target = $region29
    $region28: #{tpu_custom_call.1} parent=1 // pred_region
      %61 = dma.done [#allocation6], 36864
    $region29: #{tpu_custom_call.1} parent=1 // pred_fallthru
      _
    // Predicated region
    $region30: #{tpu_custom_call.1} parent=1 // pred_check
      _
    $region31: #{tpu_custom_call.1} parent=1 // pred_check_branch
      %63 = sbr.rel (0) target = $region33
    $region32: #{tpu_custom_call.1} parent=1 // pred_region
      %65 = dma.done [#allocation6], 96
    $region33: #{tpu_custom_call.1} parent=1 // pred_fallthru
      _
    %v66 = vld [vmem:[#allocation5] sm:$0xff]
    %v67 = vld [vmem:[#allocation5 + $0x8] sm:$0xff]
    %v68 = vld [vmem:[#allocation5 + $0x10] sm:$0xff]
    %v69 = vld [vmem:[#allocation5 + $0x18] sm:$0xff]
    %v70 = vld [vmem:[#allocation5 + $0x20] sm:$0xff]
    %v71 = vld [vmem:[#allocation5 + $0x28] sm:$0xff]
    %v72 = vld [vmem:[#allocation5 + $0x30] sm:$0xff]
    %v73 = vld [vmem:[#allocation5 + $0x38] sm:$0xff]
    %v74 = vld [vmem:[#allocation5 + $0x40] sm:$0xff]
    %v75 = vld [vmem:[#allocation5 + $0x48] sm:$0xff]
    %v76 = vld [vmem:[#allocation5 + $0x50] sm:$0xff]
    %v77 = vld [vmem:[#allocation5 + $0x58] sm:$0xff]
    %v78 = vld [vmem:[#allocation5 + $0x60] sm:$0xff]
    %v79 = vld [vmem:[#allocation5 + $0x68] sm:$0xff]
    %v80 = vld [vmem:[#allocation5 + $0x70] sm:$0xff]
    %v81 = vld [vmem:[#allocation5 + $0x78] sm:$0xff]
    %v82 = vld [vmem:[#allocation5 + $0x80] sm:$0xff]
    %v83 = vld [vmem:[#allocation5 + $0x88] sm:$0xff]
    %v84 = vld [vmem:[#allocation5 + $0x90] sm:$0xff]
    %v85 = vld [vmem:[#allocation5 + $0x98] sm:$0xff]
    %v86 = vld [vmem:[#allocation5 + $0xa0] sm:$0xff]
    %v87 = vld [vmem:[#allocation5 + $0xa8] sm:$0xff]
    %v88 = vld [vmem:[#allocation5 + $0xb0] sm:$0xff]
    %v89 = vld [vmem:[#allocation5 + $0xb8] sm:$0xff]
    %v90 = vld [vmem:[#allocation5 + $0xc0] sm:$0xff]
    %v91 = vld [vmem:[#allocation5 + $0xc8] sm:$0xff]
    %v92 = vld [vmem:[#allocation5 + $0xd0] sm:$0xff]
    %v93 = vld [vmem:[#allocation5 + $0xd8] sm:$0xff]
    %v94 = vld [vmem:[#allocation5 + $0xe0] sm:$0xff]
    %v95 = vld [vmem:[#allocation5 + $0xe8] sm:$0xff]
    %v96 = vld [vmem:[#allocation5 + $0xf0] sm:$0xff]
    %v97 = vld [vmem:[#allocation5 + $0xf8] sm:$0xff]
    %v98 = vld [vmem:[#allocation5 + $0x100] sm:$0xff]
    %v99 = vld [vmem:[#allocation5 + $0x108] sm:$0xff]
    %v100 = vld [vmem:[#allocation5 + $0x110] sm:$0xff]
    %v101 = vld [vmem:[#allocation5 + $0x118] sm:$0xff]
    %v102 = vld [vmem:[#allocation5 + $0x120] sm:$0xff]
    %v103 = vld [vmem:[#allocation5 + $0x128] sm:$0xff]
    %v104 = vld [vmem:[#allocation5 + $0x130] sm:$0xff]
    %v105 = vld [vmem:[#allocation5 + $0x138] sm:$0xff]
    %v106 = vld [vmem:[#allocation5 + $0x140] sm:$0xff]
    %v107 = vld [vmem:[#allocation5 + $0x148] sm:$0xff]
    %v108 = vld [vmem:[#allocation5 + $0x150] sm:$0xff]
    %v109 = vld [vmem:[#allocation5 + $0x158] sm:$0xff]
    %v110 = vld [vmem:[#allocation5 + $0x160] sm:$0xff]
    %v111 = vld [vmem:[#allocation5 + $0x168] sm:$0xff]
    %v112 = vld [vmem:[#allocation5 + $0x170] sm:$0xff]
    %v113 = vld [vmem:[#allocation5 + $0x178] sm:$0xff]
    %v114 = vld [vmem:[#allocation5 + $0x180] sm:$0xff]
    %v115 = vld [vmem:[#allocation5 + $0x188] sm:$0xff]
    %v116 = vld [vmem:[#allocation5 + $0x190] sm:$0xff]
    %v117 = vld [vmem:[#allocation5 + $0x198] sm:$0xff]
    %v118 = vld [vmem:[#allocation5 + $0x1a0] sm:$0xff]
    %v119 = vld [vmem:[#allocation5 + $0x1a8] sm:$0xff]
    %v120 = vld [vmem:[#allocation5 + $0x1b0] sm:$0xff]
    %v121 = vld [vmem:[#allocation5 + $0x1b8] sm:$0xff]
    %v122 = vld [vmem:[#allocation5 + $0x1c0] sm:$0xff]
    %v123 = vld [vmem:[#allocation5 + $0x1c8] sm:$0xff]
    %v124 = vld [vmem:[#allocation5 + $0x1d0] sm:$0xff]
    %v125 = vld [vmem:[#allocation5 + $0x1d8] sm:$0xff]
    %v126 = vld [vmem:[#allocation5 + $0x1e0] sm:$0xff]
    %v127 = vld [vmem:[#allocation5 + $0x1e8] sm:$0xff]
    %v128 = vld [vmem:[#allocation5 + $0x1f0] sm:$0xff]
    %v129 = vld [vmem:[#allocation5 + $0x1f8] sm:$0xff]
    %v130 = vld [vmem:[#allocation5 + $0x200] sm:$0xff]
    %v131 = vld [vmem:[#allocation5 + $0x208] sm:$0xff]
    %v132 = vld [vmem:[#allocation5 + $0x210] sm:$0xff]
    %v133 = vld [vmem:[#allocation5 + $0x218] sm:$0xff]
    %v134 = vld [vmem:[#allocation5 + $0x220] sm:$0xff]
    %v135 = vld [vmem:[#allocation5 + $0x228] sm:$0xff]
    %v136 = vld [vmem:[#allocation5 + $0x230] sm:$0xff]
    %v137 = vld [vmem:[#allocation5 + $0x238] sm:$0xff]
    %v138 = vld [vmem:[#allocation5 + $0x240] sm:$0xff]
    %v139 = vld [vmem:[#allocation5 + $0x248] sm:$0xff]
    %v140 = vld [vmem:[#allocation5 + $0x250] sm:$0xff]
    %v141 = vld [vmem:[#allocation5 + $0x258] sm:$0xff]
    %v142 = vld [vmem:[#allocation5 + $0x260] sm:$0xff]
    %v143 = vld [vmem:[#allocation5 + $0x268] sm:$0xff]
    %v144 = vld [vmem:[#allocation5 + $0x270] sm:$0xff]
    %v145 = vld [vmem:[#allocation5 + $0x278] sm:$0xff]
    %v146 = vld [vmem:[#allocation5 + $0x280] sm:$0xff]
    %v147 = vld [vmem:[#allocation5 + $0x288] sm:$0xff]
    %v148 = vld [vmem:[#allocation5 + $0x290] sm:$0xff]
    %v149 = vld [vmem:[#allocation5 + $0x298] sm:$0xff]
    %v150 = vld [vmem:[#allocation5 + $0x2a0] sm:$0xff]
    %v151 = vld [vmem:[#allocation5 + $0x2a8] sm:$0xff]
    %v152 = vld [vmem:[#allocation5 + $0x2b0] sm:$0xff]
    %v153 = vld [vmem:[#allocation5 + $0x2b8] sm:$0xff]
    %v154 = vld [vmem:[#allocation5 + $0x2c0] sm:$0xff]
    %v155 = vld [vmem:[#allocation5 + $0x2c8] sm:$0xff]
    %v156 = vld [vmem:[#allocation5 + $0x2d0] sm:$0xff]
    %v157 = vld [vmem:[#allocation5 + $0x2d8] sm:$0xff]
    %v158 = vld [vmem:[#allocation5 + $0x2e0] sm:$0xff]
    %v159 = vld [vmem:[#allocation5 + $0x2e8] sm:$0xff]
    %v160 = vld [vmem:[#allocation5 + $0x2f0] sm:$0xff]
    %v161 = vld [vmem:[#allocation5 + $0x2f8] sm:$0xff]
    %v162 = vld [vmem:[#allocation5 + $0x300] sm:$0xff]
    %v163 = vld [vmem:[#allocation5 + $0x308] sm:$0xff]
    %v164 = vld [vmem:[#allocation5 + $0x310] sm:$0xff]
    %v165 = vld [vmem:[#allocation5 + $0x318] sm:$0xff]
    %v166 = vld [vmem:[#allocation5 + $0x320] sm:$0xff]
    %v167 = vld [vmem:[#allocation5 + $0x328] sm:$0xff]
    %v168 = vld [vmem:[#allocation5 + $0x330] sm:$0xff]
    %v169 = vld [vmem:[#allocation5 + $0x338] sm:$0xff]
    %v170 = vld [vmem:[#allocation5 + $0x340] sm:$0xff]
    %v171 = vld [vmem:[#allocation5 + $0x348] sm:$0xff]
    %v172 = vld [vmem:[#allocation5 + $0x350] sm:$0xff]
    %v173 = vld [vmem:[#allocation5 + $0x358] sm:$0xff]
    %v174 = vld [vmem:[#allocation5 + $0x360] sm:$0xff]
    %v175 = vld [vmem:[#allocation5 + $0x368] sm:$0xff]
    %v176 = vld [vmem:[#allocation5 + $0x370] sm:$0xff]
    %v177 = vld [vmem:[#allocation5 + $0x378] sm:$0xff]
    %v178 = vld [vmem:[#allocation5 + $0x380] sm:$0xff]
    %v179 = vld [vmem:[#allocation5 + $0x388] sm:$0xff]
    %v180 = vld [vmem:[#allocation5 + $0x390] sm:$0xff]
    %v181 = vld [vmem:[#allocation5 + $0x398] sm:$0xff]
    %v182 = vld [vmem:[#allocation5 + $0x3a0] sm:$0xff]
    %v183 = vld [vmem:[#allocation5 + $0x3a8] sm:$0xff]
    %v184 = vld [vmem:[#allocation5 + $0x3b0] sm:$0xff]
    %v185 = vld [vmem:[#allocation5 + $0x3b8] sm:$0xff]
    %v186 = vld [vmem:[#allocation5 + $0x3c0] sm:$0xff]
    %v187 = vld [vmem:[#allocation5 + $0x3c8] sm:$0xff]
    %v188 = vld [vmem:[#allocation5 + $0x3d0] sm:$0xff]
    %v189 = vld [vmem:[#allocation5 + $0x3d8] sm:$0xff]
    %v190 = vld [vmem:[#allocation5 + $0x3e0] sm:$0xff]
    %v191 = vld [vmem:[#allocation5 + $0x3e8] sm:$0xff]
    %v192 = vld [vmem:[#allocation5 + $0x3f0] sm:$0xff]
    %v193 = vld [vmem:[#allocation5 + $0x3f8] sm:$0xff]
    %v194 = vld [vmem:[#allocation5 + $0x400] sm:$0xff]
    %v195 = vld [vmem:[#allocation5 + $0x408] sm:$0xff]
    %v196 = vld [vmem:[#allocation5 + $0x410] sm:$0xff]
    %v197 = vld [vmem:[#allocation5 + $0x418] sm:$0xff]
    %v198 = vld [vmem:[#allocation5 + $0x420] sm:$0xff]
    %v199 = vld [vmem:[#allocation5 + $0x428] sm:$0xff]
    %v200 = vld [vmem:[#allocation5 + $0x430] sm:$0xff]
    %v201 = vld [vmem:[#allocation5 + $0x438] sm:$0xff]
    %v202 = vld [vmem:[#allocation5 + $0x440] sm:$0xff]
    %v203 = vld [vmem:[#allocation5 + $0x448] sm:$0xff]
    %v204 = vld [vmem:[#allocation5 + $0x450] sm:$0xff]
    %v205 = vld [vmem:[#allocation5 + $0x458] sm:$0xff]
    %v206 = vld [vmem:[#allocation5 + $0x460] sm:$0xff]
    %v207 = vld [vmem:[#allocation5 + $0x468] sm:$0xff]
    %v208 = vld [vmem:[#allocation5 + $0x470] sm:$0xff]
    %v209 = vld [vmem:[#allocation5 + $0x478] sm:$0xff]
    %v210 = vld [vmem:[#allocation5 + $0x480] sm:$0xff]
    %v211 = vld [vmem:[#allocation5 + $0x488] sm:$0xff]
    %v212 = vld [vmem:[#allocation5 + $0x490] sm:$0xff]
    %v213 = vld [vmem:[#allocation5 + $0x498] sm:$0xff]
    %v214 = vld [vmem:[#allocation5 + $0x4a0] sm:$0xff]
    %v215 = vld [vmem:[#allocation5 + $0x4a8] sm:$0xff]
    %v216 = vld [vmem:[#allocation5 + $0x4b0] sm:$0xff]
    %v217 = vld [vmem:[#allocation5 + $0x4b8] sm:$0xff]
    %v218 = vld [vmem:[#allocation5 + $0x4c0] sm:$0xff]
    %v219 = vld [vmem:[#allocation5 + $0x4c8] sm:$0xff]
    %v220 = vld [vmem:[#allocation5 + $0x4d0] sm:$0xff]
    %v221 = vld [vmem:[#allocation5 + $0x4d8] sm:$0xff]
    %v222 = vld [vmem:[#allocation5 + $0x4e0] sm:$0xff]
    %v223 = vld [vmem:[#allocation5 + $0x4e8] sm:$0xff]
    %v224 = vld [vmem:[#allocation5 + $0x4f0] sm:$0xff]
    %v225 = vld [vmem:[#allocation5 + $0x4f8] sm:$0xff]
    %v226 = vld [vmem:[#allocation5 + $0x500] sm:$0xff]
    %v227 = vld [vmem:[#allocation5 + $0x508] sm:$0xff]
    %v228 = vld [vmem:[#allocation5 + $0x510] sm:$0xff]
    %v229 = vld [vmem:[#allocation5 + $0x518] sm:$0xff]
    %v230 = vld [vmem:[#allocation5 + $0x520] sm:$0xff]
    %v231 = vld [vmem:[#allocation5 + $0x528] sm:$0xff]
    %v232 = vld [vmem:[#allocation5 + $0x530] sm:$0xff]
    %v233 = vld [vmem:[#allocation5 + $0x538] sm:$0xff]
    %v234 = vld [vmem:[#allocation5 + $0x540] sm:$0xff]
    %v235 = vld [vmem:[#allocation5 + $0x548] sm:$0xff]
    %v236 = vld [vmem:[#allocation5 + $0x550] sm:$0xff]
    %v237 = vld [vmem:[#allocation5 + $0x558] sm:$0xff]
    %v238 = vld [vmem:[#allocation5 + $0x560] sm:$0xff]
    %v239 = vld [vmem:[#allocation5 + $0x568] sm:$0xff]
    %v240 = vld [vmem:[#allocation5 + $0x570] sm:$0xff]
    %v241 = vld [vmem:[#allocation5 + $0x578] sm:$0xff]
    %v242 = vld [vmem:[#allocation5 + $0x580] sm:$0xff]
    %v243 = vld [vmem:[#allocation5 + $0x588] sm:$0xff]
    %v244 = vld [vmem:[#allocation5 + $0x590] sm:$0xff]
    %v245 = vld [vmem:[#allocation5 + $0x598] sm:$0xff]
    %v246 = vld [vmem:[#allocation5 + $0x5a0] sm:$0xff]
    %v247 = vld [vmem:[#allocation5 + $0x5a8] sm:$0xff]
    %v248 = vld [vmem:[#allocation5 + $0x5b0] sm:$0xff]
    %v249 = vld [vmem:[#allocation5 + $0x5b8] sm:$0xff]
    %v250 = vld [vmem:[#allocation5 + $0x5c0] sm:$0xff]
    %v251 = vld [vmem:[#allocation5 + $0x5c8] sm:$0xff]
    %v252 = vld [vmem:[#allocation5 + $0x5d0] sm:$0xff]
    %v253 = vld [vmem:[#allocation5 + $0x5d8] sm:$0xff]
    %v254 = vld [vmem:[#allocation5 + $0x5e0] sm:$0xff]
    %v255 = vld [vmem:[#allocation5 + $0x5e8] sm:$0xff]
    %v256 = vld [vmem:[#allocation5 + $0x5f0] sm:$0xff]
    %v257 = vld [vmem:[#allocation5 + $0x5f8] sm:$0xff]
    %v258 = vld [vmem:[#allocation5 + $0x600] sm:$0xff]
    %v259 = vld [vmem:[#allocation5 + $0x608] sm:$0xff]
    %v260 = vld [vmem:[#allocation5 + $0x610] sm:$0xff]
    %v261 = vld [vmem:[#allocation5 + $0x618] sm:$0xff]
    %v262 = vld [vmem:[#allocation5 + $0x620] sm:$0xff]
    %v263 = vld [vmem:[#allocation5 + $0x628] sm:$0xff]
    %v264 = vld [vmem:[#allocation5 + $0x630] sm:$0xff]
    %v265 = vld [vmem:[#allocation5 + $0x638] sm:$0xff]
    %v266 = vld [vmem:[#allocation5 + $0x640] sm:$0xff]
    %v267 = vld [vmem:[#allocation5 + $0x648] sm:$0xff]
    %v268 = vld [vmem:[#allocation5 + $0x650] sm:$0xff]
    %v269 = vld [vmem:[#allocation5 + $0x658] sm:$0xff]
    %v270 = vld [vmem:[#allocation5 + $0x660] sm:$0xff]
    %v271 = vld [vmem:[#allocation5 + $0x668] sm:$0xff]
    %v272 = vld [vmem:[#allocation5 + $0x670] sm:$0xff]
    %v273 = vld [vmem:[#allocation5 + $0x678] sm:$0xff]
    %v274 = vld [vmem:[#allocation5 + $0x680] sm:$0xff]
    %v275 = vld [vmem:[#allocation5 + $0x688] sm:$0xff]
    %v276 = vld [vmem:[#allocation5 + $0x690] sm:$0xff]
    %v277 = vld [vmem:[#allocation5 + $0x698] sm:$0xff]
    %v278 = vld [vmem:[#allocation5 + $0x6a0] sm:$0xff]
    %v279 = vld [vmem:[#allocation5 + $0x6a8] sm:$0xff]
    %v280 = vld [vmem:[#allocation5 + $0x6b0] sm:$0xff]
    %v281 = vld [vmem:[#allocation5 + $0x6b8] sm:$0xff]
    %v282 = vld [vmem:[#allocation5 + $0x6c0] sm:$0xff]
    %v283 = vld [vmem:[#allocation5 + $0x6c8] sm:$0xff]
    %v284 = vld [vmem:[#allocation5 + $0x6d0] sm:$0xff]
    %v285 = vld [vmem:[#allocation5 + $0x6d8] sm:$0xff]
    %v286 = vld [vmem:[#allocation5 + $0x6e0] sm:$0xff]
    %v287 = vld [vmem:[#allocation5 + $0x6e8] sm:$0xff]
    %v288 = vld [vmem:[#allocation5 + $0x6f0] sm:$0xff]
    %v289 = vld [vmem:[#allocation5 + $0x6f8] sm:$0xff]
    %v290 = vld [vmem:[#allocation5 + $0x700] sm:$0xff]
    %v291 = vld [vmem:[#allocation5 + $0x708] sm:$0xff]
    %v292 = vld [vmem:[#allocation5 + $0x710] sm:$0xff]
    %v293 = vld [vmem:[#allocation5 + $0x718] sm:$0xff]
    %v294 = vld [vmem:[#allocation5 + $0x720] sm:$0xff]
    %v295 = vld [vmem:[#allocation5 + $0x728] sm:$0xff]
    %v296 = vld [vmem:[#allocation5 + $0x730] sm:$0xff]
    %v297 = vld [vmem:[#allocation5 + $0x738] sm:$0xff]
    %v298 = vld [vmem:[#allocation5 + $0x740] sm:$0xff]
    %v299 = vld [vmem:[#allocation5 + $0x748] sm:$0xff]
    %v300 = vld [vmem:[#allocation5 + $0x750] sm:$0xff]
    %v301 = vld [vmem:[#allocation5 + $0x758] sm:$0xff]
    %v302 = vld [vmem:[#allocation5 + $0x760] sm:$0xff]
    %v303 = vld [vmem:[#allocation5 + $0x768] sm:$0xff]
    %v304 = vld [vmem:[#allocation5 + $0x770] sm:$0xff]
    %v305 = vld [vmem:[#allocation5 + $0x778] sm:$0xff]
    %v306 = vld [vmem:[#allocation5 + $0x780] sm:$0xff]
    %v307 = vld [vmem:[#allocation5 + $0x788] sm:$0xff]
    %v308 = vld [vmem:[#allocation5 + $0x790] sm:$0xff]
    %v309 = vld [vmem:[#allocation5 + $0x798] sm:$0xff]
    %v310 = vld [vmem:[#allocation5 + $0x7a0] sm:$0xff]
    %v311 = vld [vmem:[#allocation5 + $0x7a8] sm:$0xff]
    %v312 = vld [vmem:[#allocation5 + $0x7b0] sm:$0xff]
    %v313 = vld [vmem:[#allocation5 + $0x7b8] sm:$0xff]
    %v314 = vld [vmem:[#allocation5 + $0x7c0] sm:$0xff]
    %v315 = vld [vmem:[#allocation5 + $0x7c8] sm:$0xff]
    %v316 = vld [vmem:[#allocation5 + $0x7d0] sm:$0xff]
    %v317 = vld [vmem:[#allocation5 + $0x7d8] sm:$0xff]
    %v318 = vld [vmem:[#allocation5 + $0x7e0] sm:$0xff]
    %v319 = vld [vmem:[#allocation5 + $0x7e8] sm:$0xff]
    %v320 = vld [vmem:[#allocation5 + $0x7f0] sm:$0xff]
    %v321 = vld [vmem:[#allocation5 + $0x7f8] sm:$0xff]
    %v322 = vld [vmem:[#allocation5 + $0x800] sm:$0xff]
    %v323 = vld [vmem:[#allocation5 + $0x808] sm:$0xff]
    %v324 = vld [vmem:[#allocation5 + $0x810] sm:$0xff]
    %v325 = vld [vmem:[#allocation5 + $0x818] sm:$0xff]
    %v326 = vld [vmem:[#allocation5 + $0x820] sm:$0xff]
    %v327 = vld [vmem:[#allocation5 + $0x828] sm:$0xff]
    %v328 = vld [vmem:[#allocation5 + $0x830] sm:$0xff]
    %v329 = vld [vmem:[#allocation5 + $0x838] sm:$0xff]
    %v330 = vld [vmem:[#allocation5 + $0x840] sm:$0xff]
    %v331 = vld [vmem:[#allocation5 + $0x848] sm:$0xff]
    %v332 = vld [vmem:[#allocation5 + $0x850] sm:$0xff]
    %v333 = vld [vmem:[#allocation5 + $0x858] sm:$0xff]
    %v334 = vld [vmem:[#allocation5 + $0x860] sm:$0xff]
    %v335 = vld [vmem:[#allocation5 + $0x868] sm:$0xff]
    %v336 = vld [vmem:[#allocation5 + $0x870] sm:$0xff]
    %v337 = vld [vmem:[#allocation5 + $0x878] sm:$0xff]
    %v338 = vld [vmem:[#allocation5 + $0x880] sm:$0xff]
    %v339 = vld [vmem:[#allocation5 + $0x888] sm:$0xff]
    %v340 = vld [vmem:[#allocation5 + $0x890] sm:$0xff]
    %v341 = vld [vmem:[#allocation5 + $0x898] sm:$0xff]
    %v342 = vld [vmem:[#allocation5 + $0x8a0] sm:$0xff]
    %v343 = vld [vmem:[#allocation5 + $0x8a8] sm:$0xff]
    %v344 = vld [vmem:[#allocation5 + $0x8b0] sm:$0xff]
    %v345 = vld [vmem:[#allocation5 + $0x8b8] sm:$0xff]
    %v346 = vld [vmem:[#allocation5 + $0x8c0] sm:$0xff]
    %v347 = vld [vmem:[#allocation5 + $0x8c8] sm:$0xff]
    %v348 = vld [vmem:[#allocation5 + $0x8d0] sm:$0xff]
    %v349 = vld [vmem:[#allocation5 + $0x8d8] sm:$0xff]
    %v350 = vld [vmem:[#allocation5 + $0x8e0] sm:$0xff]
    %v351 = vld [vmem:[#allocation5 + $0x8e8] sm:$0xff]
    %v352 = vld [vmem:[#allocation5 + $0x8f0] sm:$0xff]
    %v353 = vld [vmem:[#allocation5 + $0x8f8] sm:$0xff]
    %v354 = vld [vmem:[#allocation2] sm:$0xf]
    %v355 = vld [vmem:[#allocation2 + $0x4] sm:$0xf]
    %v356 = vld [vmem:[#allocation2 + $0x8] sm:$0xf]
    %v357 = vld [vmem:[#allocation2 + $0xc] sm:$0xf]
    %v358 = vld [vmem:[#allocation2 + $0x10] sm:$0xf]
    %v359 = vld [vmem:[#allocation2 + $0x14] sm:$0xf]
    %v360 = vld [vmem:[#allocation2 + $0x18] sm:$0xf]
    %v361 = vld [vmem:[#allocation2 + $0x1c] sm:$0xf]
    %v362 = vld [vmem:[#allocation2 + $0x20] sm:$0xf]
    %v363 = vld [vmem:[#allocation2 + $0x24] sm:$0xf]
    %v364 = vld [vmem:[#allocation2 + $0x28] sm:$0xf]
    %v365 = vld [vmem:[#allocation2 + $0x2c] sm:$0xf]
    %v366 = vld [vmem:[#allocation2 + $0x30] sm:$0xf]
    %v367 = vld [vmem:[#allocation2 + $0x34] sm:$0xf]
    %v368 = vld [vmem:[#allocation2 + $0x38] sm:$0xf]
    %v369 = vld [vmem:[#allocation2 + $0x3c] sm:$0xf]
    %v370 = vld [vmem:[#allocation2 + $0x40] sm:$0xf]
    %v371 = vld [vmem:[#allocation2 + $0x44] sm:$0xf]
    %v372 = vld [vmem:[#allocation2 + $0x48] sm:$0xf]
    %v373 = vld [vmem:[#allocation2 + $0x4c] sm:$0xf]
    %v374 = vld [vmem:[#allocation2 + $0x50] sm:$0xf]
    %v375 = vld [vmem:[#allocation2 + $0x54] sm:$0xf]
    %v376 = vld [vmem:[#allocation2 + $0x58] sm:$0xf]
    %v377 = vld [vmem:[#allocation2 + $0x5c] sm:$0xf]
    %v378 = vld [vmem:[#allocation2 + $0x60] sm:$0xf]
    %v379 = vld [vmem:[#allocation2 + $0x64] sm:$0xf]
    %v380 = vld [vmem:[#allocation2 + $0x68] sm:$0xf]
    %v381 = vld [vmem:[#allocation2 + $0x6c] sm:$0xf]
    %v382 = vld [vmem:[#allocation2 + $0x70] sm:$0xf]
    %v383 = vld [vmem:[#allocation2 + $0x74] sm:$0xf]
    %v384 = vld [vmem:[#allocation2 + $0x78] sm:$0xf]
    %v385 = vld [vmem:[#allocation2 + $0x7c] sm:$0xf]
    %v386 = vld [vmem:[#allocation2 + $0x80] sm:$0xf]
    %v387 = vld [vmem:[#allocation2 + $0x84] sm:$0xf]
    %v388 = vld [vmem:[#allocation2 + $0x88] sm:$0xf]
    %v389 = vld [vmem:[#allocation2 + $0x8c] sm:$0xf]
    %v390 = vld [vmem:[#allocation2 + $0x90] sm:$0xf]
    %v391 = vld [vmem:[#allocation2 + $0x94] sm:$0xf]
    %v392 = vld [vmem:[#allocation2 + $0x98] sm:$0xf]
    %v393 = vld [vmem:[#allocation2 + $0x9c] sm:$0xf]
    %v394 = vld [vmem:[#allocation2 + $0xa0] sm:$0xf]
    %v395 = vld [vmem:[#allocation2 + $0xa4] sm:$0xf]
    %v396 = vld [vmem:[#allocation2 + $0xa8] sm:$0xf]
    %v397 = vld [vmem:[#allocation2 + $0xac] sm:$0xf]
    %v398 = vld [vmem:[#allocation2 + $0xb0] sm:$0xf]
    %v399 = vld [vmem:[#allocation2 + $0xb4] sm:$0xf]
    %v400 = vld [vmem:[#allocation2 + $0xb8] sm:$0xf]
    %v401 = vld [vmem:[#allocation2 + $0xbc] sm:$0xf]
    %v402 = vld [vmem:[#allocation2 + $0xc0] sm:$0xf]
    %v403 = vld [vmem:[#allocation2 + $0xc4] sm:$0xf]
    %v404 = vld [vmem:[#allocation2 + $0xc8] sm:$0xf]
    %v405 = vld [vmem:[#allocation2 + $0xcc] sm:$0xf]
    %v406 = vld [vmem:[#allocation2 + $0xd0] sm:$0xf]
    %v407 = vld [vmem:[#allocation2 + $0xd4] sm:$0xf]
    %v408 = vld [vmem:[#allocation2 + $0xd8] sm:$0xf]
    %v409 = vld [vmem:[#allocation2 + $0xdc] sm:$0xf]
    %v410 = vld [vmem:[#allocation2 + $0xe0] sm:$0xf]
    %v411 = vld [vmem:[#allocation2 + $0xe4] sm:$0xf]
    %v412 = vld [vmem:[#allocation2 + $0xe8] sm:$0xf]
    %v413 = vld [vmem:[#allocation2 + $0xec] sm:$0xf]
    %v414 = vld [vmem:[#allocation2 + $0xf0] sm:$0xf]
    %v415 = vld [vmem:[#allocation2 + $0xf4] sm:$0xf]
    %v416 = vld [vmem:[#allocation2 + $0xf8] sm:$0xf]
    %v417 = vld [vmem:[#allocation2 + $0xfc] sm:$0xf]
    %v418 = vld [vmem:[#allocation2 + $0x100] sm:$0xf]
    %v419 = vld [vmem:[#allocation2 + $0x104] sm:$0xf]
    %v420 = vld [vmem:[#allocation2 + $0x108] sm:$0xf]
    %v421 = vld [vmem:[#allocation2 + $0x10c] sm:$0xf]
    %v422 = vld [vmem:[#allocation2 + $0x110] sm:$0xf]
    %v423 = vld [vmem:[#allocation2 + $0x114] sm:$0xf]
    %v424 = vld [vmem:[#allocation2 + $0x118] sm:$0xf]
    %v425 = vld [vmem:[#allocation2 + $0x11c] sm:$0xf]
    %v426 = vld [vmem:[#allocation2 + $0x120] sm:$0xf]
    %v427 = vld [vmem:[#allocation2 + $0x124] sm:$0xf]
    %v428 = vld [vmem:[#allocation2 + $0x128] sm:$0xf]
    %v429 = vld [vmem:[#allocation2 + $0x12c] sm:$0xf]
    %v430 = vld [vmem:[#allocation2 + $0x130] sm:$0xf]
    %v431 = vld [vmem:[#allocation2 + $0x134] sm:$0xf]
    %v432 = vld [vmem:[#allocation2 + $0x138] sm:$0xf]
    %v433 = vld [vmem:[#allocation2 + $0x13c] sm:$0xf]
    %v434 = vld [vmem:[#allocation2 + $0x140] sm:$0xf]
    %v435 = vld [vmem:[#allocation2 + $0x144] sm:$0xf]
    %v436 = vld [vmem:[#allocation2 + $0x148] sm:$0xf]
    %v437 = vld [vmem:[#allocation2 + $0x14c] sm:$0xf]
    %v438 = vld [vmem:[#allocation2 + $0x150] sm:$0xf]
    %v439 = vld [vmem:[#allocation2 + $0x154] sm:$0xf]
    %v440 = vld [vmem:[#allocation2 + $0x158] sm:$0xf]
    %v441 = vld [vmem:[#allocation2 + $0x15c] sm:$0xf]
    %v442 = vld [vmem:[#allocation2 + $0x160] sm:$0xf]
    %v443 = vld [vmem:[#allocation2 + $0x164] sm:$0xf]
    %v444 = vld [vmem:[#allocation2 + $0x168] sm:$0xf]
    %v445 = vld [vmem:[#allocation2 + $0x16c] sm:$0xf]
    %v446 = vld [vmem:[#allocation2 + $0x170] sm:$0xf]
    %v447 = vld [vmem:[#allocation2 + $0x174] sm:$0xf]
    %v448 = vld [vmem:[#allocation2 + $0x178] sm:$0xf]
    %v449 = vld [vmem:[#allocation2 + $0x17c] sm:$0xf]
    %v450 = vld [vmem:[%s2] sm:$0xff]
    %v451 = vld [vmem:[%s2 + $0x8] sm:$0xff]
    %v452 = vld [vmem:[%s2 + $0x10] sm:$0xff]
    %v453 = vld [vmem:[%s2 + $0x18] sm:$0xff]
    %v454 = vld [vmem:[%s2 + $0x20] sm:$0xff]
    %v455 = vld [vmem:[%s2 + $0x28] sm:$0xff]
    %v456 = vld [vmem:[%s2 + $0x30] sm:$0xff]
    %v457 = vld [vmem:[%s2 + $0x38] sm:$0xff]
    %v458 = vld [vmem:[%s2 + $0x40] sm:$0xff]
    %v459 = vld [vmem:[%s2 + $0x48] sm:$0xff]
    %v460 = vld [vmem:[%s2 + $0x50] sm:$0xff]
    %v461 = vld [vmem:[%s2 + $0x58] sm:$0xff]
    %v462 = vld [vmem:[%s2 + $0x60] sm:$0xff]
    %v463 = vld [vmem:[%s2 + $0x68] sm:$0xff]
    %v464 = vld [vmem:[%s2 + $0x70] sm:$0xff]
    %v465 = vld [vmem:[%s2 + $0x78] sm:$0xff]
    %v466 = vld [vmem:[%s2 + $0x80] sm:$0xff]
    %v467 = vld [vmem:[%s2 + $0x88] sm:$0xff]
    %v468 = vld [vmem:[%s2 + $0x90] sm:$0xff]
    %v469 = vld [vmem:[%s2 + $0x98] sm:$0xff]
    %v470 = vld [vmem:[%s2 + $0xa0] sm:$0xff]
    %v471 = vld [vmem:[%s2 + $0xa8] sm:$0xff]
    %v472 = vld [vmem:[%s2 + $0xb0] sm:$0xff]
    %v473 = vld [vmem:[%s2 + $0xb8] sm:$0xff]
    %v474 = vld [vmem:[%s2 + $0xc0] sm:$0xff]
    %v475 = vld [vmem:[%s2 + $0xc8] sm:$0xff]
    %v476 = vld [vmem:[%s2 + $0xd0] sm:$0xff]
    %v477 = vld [vmem:[%s2 + $0xd8] sm:$0xff]
    %v478 = vld [vmem:[%s2 + $0xe0] sm:$0xff]
    %v479 = vld [vmem:[%s2 + $0xe8] sm:$0xff]
    %v480 = vld [vmem:[%s2 + $0xf0] sm:$0xff]
    %v481 = vld [vmem:[%s2 + $0xf8] sm:$0xff]
    %v482 = vld [vmem:[%s2 + $0x100] sm:$0xff]
    %v483 = vld [vmem:[%s2 + $0x108] sm:$0xff]
    %v484 = vld [vmem:[%s2 + $0x110] sm:$0xff]
    %v485 = vld [vmem:[%s2 + $0x118] sm:$0xff]
    %v486 = vld [vmem:[%s2 + $0x120] sm:$0xff]
    %v487 = vld [vmem:[%s2 + $0x128] sm:$0xff]
    %v488 = vld [vmem:[%s2 + $0x130] sm:$0xff]
    %v489 = vld [vmem:[%s2 + $0x138] sm:$0xff]
    %v490 = vld [vmem:[%s2 + $0x140] sm:$0xff]
    %v491 = vld [vmem:[%s2 + $0x148] sm:$0xff]
    %v492 = vld [vmem:[%s2 + $0x150] sm:$0xff]
    %v493 = vld [vmem:[%s2 + $0x158] sm:$0xff]
    %v494 = vld [vmem:[%s2 + $0x160] sm:$0xff]
    %v495 = vld [vmem:[%s2 + $0x168] sm:$0xff]
    %v496 = vld [vmem:[%s2 + $0x170] sm:$0xff]
    %v497 = vld [vmem:[%s2 + $0x178] sm:$0xff]
    %v498 = vld [vmem:[%s2 + $0x180] sm:$0xff]
    %v499 = vld [vmem:[%s2 + $0x188] sm:$0xff]
    %v500 = vld [vmem:[%s2 + $0x190] sm:$0xff]
    %v501 = vld [vmem:[%s2 + $0x198] sm:$0xff]
    %v502 = vld [vmem:[%s2 + $0x1a0] sm:$0xff]
    %v503 = vld [vmem:[%s2 + $0x1a8] sm:$0xff]
    %v504 = vld [vmem:[%s2 + $0x1b0] sm:$0xff]
    %v505 = vld [vmem:[%s2 + $0x1b8] sm:$0xff]
    %v506 = vld [vmem:[%s2 + $0x1c0] sm:$0xff]
    %v507 = vld [vmem:[%s2 + $0x1c8] sm:$0xff]
    %v508 = vld [vmem:[%s2 + $0x1d0] sm:$0xff]
    %v509 = vld [vmem:[%s2 + $0x1d8] sm:$0xff]
    %v510 = vld [vmem:[%s2 + $0x1e0] sm:$0xff]
    %v511 = vld [vmem:[%s2 + $0x1e8] sm:$0xff]
    %v512 = vld [vmem:[%s2 + $0x1f0] sm:$0xff]
    %v513 = vld [vmem:[%s2 + $0x1f8] sm:$0xff]
    %v514 = vld [vmem:[%s2 + $0x200] sm:$0xff]
    %v515 = vld [vmem:[%s2 + $0x208] sm:$0xff]
    %v516 = vld [vmem:[%s2 + $0x210] sm:$0xff]
    %v517 = vld [vmem:[%s2 + $0x218] sm:$0xff]
    %v518 = vld [vmem:[%s2 + $0x220] sm:$0xff]
    %v519 = vld [vmem:[%s2 + $0x228] sm:$0xff]
    %v520 = vld [vmem:[%s2 + $0x230] sm:$0xff]
    %v521 = vld [vmem:[%s2 + $0x238] sm:$0xff]
    %v522 = vld [vmem:[%s2 + $0x240] sm:$0xff]
    %v523 = vld [vmem:[%s2 + $0x248] sm:$0xff]
    %v524 = vld [vmem:[%s2 + $0x250] sm:$0xff]
    %v525 = vld [vmem:[%s2 + $0x258] sm:$0xff]
    %v526 = vld [vmem:[%s2 + $0x260] sm:$0xff]
    %v527 = vld [vmem:[%s2 + $0x268] sm:$0xff]
    %v528 = vld [vmem:[%s2 + $0x270] sm:$0xff]
    %v529 = vld [vmem:[%s2 + $0x278] sm:$0xff]
    %v530 = vld [vmem:[%s2 + $0x280] sm:$0xff]
    %v531 = vld [vmem:[%s2 + $0x288] sm:$0xff]
    %v532 = vld [vmem:[%s2 + $0x290] sm:$0xff]
    %v533 = vld [vmem:[%s2 + $0x298] sm:$0xff]
    %v534 = vld [vmem:[%s2 + $0x2a0] sm:$0xff]
    %v535 = vld [vmem:[%s2 + $0x2a8] sm:$0xff]
    %v536 = vld [vmem:[%s2 + $0x2b0] sm:$0xff]
    %v537 = vld [vmem:[%s2 + $0x2b8] sm:$0xff]
    %v538 = vld [vmem:[%s2 + $0x2c0] sm:$0xff]
    %v539 = vld [vmem:[%s2 + $0x2c8] sm:$0xff]
    %v540 = vld [vmem:[%s2 + $0x2d0] sm:$0xff]
    %v541 = vld [vmem:[%s2 + $0x2d8] sm:$0xff]
    %v542 = vld [vmem:[%s2 + $0x2e0] sm:$0xff]
    %v543 = vld [vmem:[%s2 + $0x2e8] sm:$0xff]
    %v544 = vld [vmem:[%s2 + $0x2f0] sm:$0xff]
    %v545 = vld [vmem:[%s2 + $0x2f8] sm:$0xff]
    %547 = vset.pattern.permute.xlu0 0
    %548 = vperm.xlu0 %547, %v450
    %v549 = vpop.permute.xlu0 %548
    %552 = vset.pattern.permute.xlu0 0
    %553 = vperm.xlu0 %552, %v451
    %v554 = vpop.permute.xlu0 %553
    %557 = vset.pattern.permute.xlu0 0
    %558 = vperm.xlu0 %557, %v452
    %v559 = vpop.permute.xlu0 %558
    %562 = vset.pattern.permute.xlu0 0
    %563 = vperm.xlu0 %562, %v453
    %v564 = vpop.permute.xlu0 %563
    %567 = vset.pattern.permute.xlu0 0
    %568 = vperm.xlu0 %567, %v454
    %v569 = vpop.permute.xlu0 %568
    %572 = vset.pattern.permute.xlu0 0
    %573 = vperm.xlu0 %572, %v455
    %v574 = vpop.permute.xlu0 %573
    %577 = vset.pattern.permute.xlu0 0
    %578 = vperm.xlu0 %577, %v456
    %v579 = vpop.permute.xlu0 %578
    %582 = vset.pattern.permute.xlu0 0
    %583 = vperm.xlu0 %582, %v457
    %v584 = vpop.permute.xlu0 %583
    %587 = vset.pattern.permute.xlu0 0
    %588 = vperm.xlu0 %587, %v458
    %v589 = vpop.permute.xlu0 %588
    %592 = vset.pattern.permute.xlu0 0
    %593 = vperm.xlu0 %592, %v459
    %v594 = vpop.permute.xlu0 %593
    %597 = vset.pattern.permute.xlu0 0
    %598 = vperm.xlu0 %597, %v460
    %v599 = vpop.permute.xlu0 %598
    %602 = vset.pattern.permute.xlu0 0
    %603 = vperm.xlu0 %602, %v461
    %v604 = vpop.permute.xlu0 %603
    %607 = vset.pattern.permute.xlu0 0
    %608 = vperm.xlu0 %607, %v462
    %v609 = vpop.permute.xlu0 %608
    %612 = vset.pattern.permute.xlu0 0
    %613 = vperm.xlu0 %612, %v463
    %v614 = vpop.permute.xlu0 %613
    %617 = vset.pattern.permute.xlu0 0
    %618 = vperm.xlu0 %617, %v464
    %v619 = vpop.permute.xlu0 %618
    %622 = vset.pattern.permute.xlu0 0
    %623 = vperm.xlu0 %622, %v465
    %v624 = vpop.permute.xlu0 %623
    %627 = vset.pattern.permute.xlu0 0
    %628 = vperm.xlu0 %627, %v466
    %v629 = vpop.permute.xlu0 %628
    %632 = vset.pattern.permute.xlu0 0
    %633 = vperm.xlu0 %632, %v467
    %v634 = vpop.permute.xlu0 %633
    %637 = vset.pattern.permute.xlu0 0
    %638 = vperm.xlu0 %637, %v468
    %v639 = vpop.permute.xlu0 %638
    %642 = vset.pattern.permute.xlu0 0
    %643 = vperm.xlu0 %642, %v469
    %v644 = vpop.permute.xlu0 %643
    %647 = vset.pattern.permute.xlu0 0
    %648 = vperm.xlu0 %647, %v470
    %v649 = vpop.permute.xlu0 %648
    %652 = vset.pattern.permute.xlu0 0
    %653 = vperm.xlu0 %652, %v471
    %v654 = vpop.permute.xlu0 %653
    %657 = vset.pattern.permute.xlu0 0
    %658 = vperm.xlu0 %657, %v472
    %v659 = vpop.permute.xlu0 %658
    %662 = vset.pattern.permute.xlu0 0
    %663 = vperm.xlu0 %662, %v473
    %v664 = vpop.permute.xlu0 %663
    %667 = vset.pattern.permute.xlu0 0
    %668 = vperm.xlu0 %667, %v474
    %v669 = vpop.permute.xlu0 %668
    %672 = vset.pattern.permute.xlu0 0
    %673 = vperm.xlu0 %672, %v475
    %v674 = vpop.permute.xlu0 %673
    %677 = vset.pattern.permute.xlu0 0
    %678 = vperm.xlu0 %677, %v476
    %v679 = vpop.permute.xlu0 %678
    %682 = vset.pattern.permute.xlu0 0
    %683 = vperm.xlu0 %682, %v477
    %v684 = vpop.permute.xlu0 %683
    %687 = vset.pattern.permute.xlu0 0
    %688 = vperm.xlu0 %687, %v478
    %v689 = vpop.permute.xlu0 %688
    %692 = vset.pattern.permute.xlu0 0
    %693 = vperm.xlu0 %692, %v479
    %v694 = vpop.permute.xlu0 %693
    %697 = vset.pattern.permute.xlu0 0
    %698 = vperm.xlu0 %697, %v480
    %v699 = vpop.permute.xlu0 %698
    %702 = vset.pattern.permute.xlu0 0
    %703 = vperm.xlu0 %702, %v481
    %v704 = vpop.permute.xlu0 %703
    %707 = vset.pattern.permute.xlu0 0
    %708 = vperm.xlu0 %707, %v482
    %v709 = vpop.permute.xlu0 %708
    %712 = vset.pattern.permute.xlu0 0
    %713 = vperm.xlu0 %712, %v483
    %v714 = vpop.permute.xlu0 %713
    %717 = vset.pattern.permute.xlu0 0
    %718 = vperm.xlu0 %717, %v484
    %v719 = vpop.permute.xlu0 %718
    %722 = vset.pattern.permute.xlu0 0
    %723 = vperm.xlu0 %722, %v485
    %v724 = vpop.permute.xlu0 %723
    %727 = vset.pattern.permute.xlu0 0
    %728 = vperm.xlu0 %727, %v486
    %v729 = vpop.permute.xlu0 %728
    %732 = vset.pattern.permute.xlu0 0
    %733 = vperm.xlu0 %732, %v487
    %v734 = vpop.permute.xlu0 %733
    %737 = vset.pattern.permute.xlu0 0
    %738 = vperm.xlu0 %737, %v488
    %v739 = vpop.permute.xlu0 %738
    %742 = vset.pattern.permute.xlu0 0
    %743 = vperm.xlu0 %742, %v489
    %v744 = vpop.permute.xlu0 %743
    %747 = vset.pattern.permute.xlu0 0
    %748 = vperm.xlu0 %747, %v490
    %v749 = vpop.permute.xlu0 %748
    %752 = vset.pattern.permute.xlu0 0
    %753 = vperm.xlu0 %752, %v491
    %v754 = vpop.permute.xlu0 %753
    %757 = vset.pattern.permute.xlu0 0
    %758 = vperm.xlu0 %757, %v492
    %v759 = vpop.permute.xlu0 %758
    %762 = vset.pattern.permute.xlu0 0
    %763 = vperm.xlu0 %762, %v493
    %v764 = vpop.permute.xlu0 %763
    %767 = vset.pattern.permute.xlu0 0
    %768 = vperm.xlu0 %767, %v494
    %v769 = vpop.permute.xlu0 %768
    %772 = vset.pattern.permute.xlu0 0
    %773 = vperm.xlu0 %772, %v495
    %v774 = vpop.permute.xlu0 %773
    %777 = vset.pattern.permute.xlu0 0
    %778 = vperm.xlu0 %777, %v496
    %v779 = vpop.permute.xlu0 %778
    %782 = vset.pattern.permute.xlu0 0
    %783 = vperm.xlu0 %782, %v497
    %v784 = vpop.permute.xlu0 %783
    %787 = vset.pattern.permute.xlu0 0
    %788 = vperm.xlu0 %787, %v498
    %v789 = vpop.permute.xlu0 %788
    %792 = vset.pattern.permute.xlu0 0
    %793 = vperm.xlu0 %792, %v499
    %v794 = vpop.permute.xlu0 %793
    %797 = vset.pattern.permute.xlu0 0
    %798 = vperm.xlu0 %797, %v500
    %v799 = vpop.permute.xlu0 %798
    %802 = vset.pattern.permute.xlu0 0
    %803 = vperm.xlu0 %802, %v501
    %v804 = vpop.permute.xlu0 %803
    %807 = vset.pattern.permute.xlu0 0
    %808 = vperm.xlu0 %807, %v502
    %v809 = vpop.permute.xlu0 %808
    %812 = vset.pattern.permute.xlu0 0
    %813 = vperm.xlu0 %812, %v503
    %v814 = vpop.permute.xlu0 %813
    %817 = vset.pattern.permute.xlu0 0
    %818 = vperm.xlu0 %817, %v504
    %v819 = vpop.permute.xlu0 %818
    %822 = vset.pattern.permute.xlu0 0
    %823 = vperm.xlu0 %822, %v505
    %v824 = vpop.permute.xlu0 %823
    %827 = vset.pattern.permute.xlu0 0
    %828 = vperm.xlu0 %827, %v506
    %v829 = vpop.permute.xlu0 %828
    %832 = vset.pattern.permute.xlu0 0
    %833 = vperm.xlu0 %832, %v507
    %v834 = vpop.permute.xlu0 %833
    %837 = vset.pattern.permute.xlu0 0
    %838 = vperm.xlu0 %837, %v508
    %v839 = vpop.permute.xlu0 %838
    %842 = vset.pattern.permute.xlu0 0
    %843 = vperm.xlu0 %842, %v509
    %v844 = vpop.permute.xlu0 %843
    %847 = vset.pattern.permute.xlu0 0
    %848 = vperm.xlu0 %847, %v510
    %v849 = vpop.permute.xlu0 %848
    %852 = vset.pattern.permute.xlu0 0
    %853 = vperm.xlu0 %852, %v511
    %v854 = vpop.permute.xlu0 %853
    %857 = vset.pattern.permute.xlu0 0
    %858 = vperm.xlu0 %857, %v512
    %v859 = vpop.permute.xlu0 %858
    %862 = vset.pattern.permute.xlu0 0
    %863 = vperm.xlu0 %862, %v513
    %v864 = vpop.permute.xlu0 %863
    %867 = vset.pattern.permute.xlu0 0
    %868 = vperm.xlu0 %867, %v514
    %v869 = vpop.permute.xlu0 %868
    %872 = vset.pattern.permute.xlu0 0
    %873 = vperm.xlu0 %872, %v515
    %v874 = vpop.permute.xlu0 %873
    %877 = vset.pattern.permute.xlu0 0
    %878 = vperm.xlu0 %877, %v516
    %v879 = vpop.permute.xlu0 %878
    %882 = vset.pattern.permute.xlu0 0
    %883 = vperm.xlu0 %882, %v517
    %v884 = vpop.permute.xlu0 %883
    %887 = vset.pattern.permute.xlu0 0
    %888 = vperm.xlu0 %887, %v518
    %v889 = vpop.permute.xlu0 %888
    %892 = vset.pattern.permute.xlu0 0
    %893 = vperm.xlu0 %892, %v519
    %v894 = vpop.permute.xlu0 %893
    %897 = vset.pattern.permute.xlu0 0
    %898 = vperm.xlu0 %897, %v520
    %v899 = vpop.permute.xlu0 %898
    %902 = vset.pattern.permute.xlu0 0
    %903 = vperm.xlu0 %902, %v521
    %v904 = vpop.permute.xlu0 %903
    %907 = vset.pattern.permute.xlu0 0
    %908 = vperm.xlu0 %907, %v522
    %v909 = vpop.permute.xlu0 %908
    %912 = vset.pattern.permute.xlu0 0
    %913 = vperm.xlu0 %912, %v523
    %v914 = vpop.permute.xlu0 %913
    %917 = vset.pattern.permute.xlu0 0
    %918 = vperm.xlu0 %917, %v524
    %v919 = vpop.permute.xlu0 %918
    %922 = vset.pattern.permute.xlu0 0
    %923 = vperm.xlu0 %922, %v525
    %v924 = vpop.permute.xlu0 %923
    %927 = vset.pattern.permute.xlu0 0
    %928 = vperm.xlu0 %927, %v526
    %v929 = vpop.permute.xlu0 %928
    %932 = vset.pattern.permute.xlu0 0
    %933 = vperm.xlu0 %932, %v527
    %v934 = vpop.permute.xlu0 %933
    %937 = vset.pattern.permute.xlu0 0
    %938 = vperm.xlu0 %937, %v528
    %v939 = vpop.permute.xlu0 %938
    %942 = vset.pattern.permute.xlu0 0
    %943 = vperm.xlu0 %942, %v529
    %v944 = vpop.permute.xlu0 %943
    %947 = vset.pattern.permute.xlu0 0
    %948 = vperm.xlu0 %947, %v530
    %v949 = vpop.permute.xlu0 %948
    %952 = vset.pattern.permute.xlu0 0
    %953 = vperm.xlu0 %952, %v531
    %v954 = vpop.permute.xlu0 %953
    %957 = vset.pattern.permute.xlu0 0
    %958 = vperm.xlu0 %957, %v532
    %v959 = vpop.permute.xlu0 %958
    %962 = vset.pattern.permute.xlu0 0
    %963 = vperm.xlu0 %962, %v533
    %v964 = vpop.permute.xlu0 %963
    %967 = vset.pattern.permute.xlu0 0
    %968 = vperm.xlu0 %967, %v534
    %v969 = vpop.permute.xlu0 %968
    %972 = vset.pattern.permute.xlu0 0
    %973 = vperm.xlu0 %972, %v535
    %v974 = vpop.permute.xlu0 %973
    %977 = vset.pattern.permute.xlu0 0
    %978 = vperm.xlu0 %977, %v536
    %v979 = vpop.permute.xlu0 %978
    %982 = vset.pattern.permute.xlu0 0
    %983 = vperm.xlu0 %982, %v537
    %v984 = vpop.permute.xlu0 %983
    %987 = vset.pattern.permute.xlu0 0
    %988 = vperm.xlu0 %987, %v538
    %v989 = vpop.permute.xlu0 %988
    %992 = vset.pattern.permute.xlu0 0
    %993 = vperm.xlu0 %992, %v539
    %v994 = vpop.permute.xlu0 %993
    %997 = vset.pattern.permute.xlu0 0
    %998 = vperm.xlu0 %997, %v540
    %v999 = vpop.permute.xlu0 %998
    %1002 = vset.pattern.permute.xlu0 0
    %1003 = vperm.xlu0 %1002, %v541
    %v1004 = vpop.permute.xlu0 %1003
    %1007 = vset.pattern.permute.xlu0 0
    %1008 = vperm.xlu0 %1007, %v542
    %v1009 = vpop.permute.xlu0 %1008
    %1012 = vset.pattern.permute.xlu0 0
    %1013 = vperm.xlu0 %1012, %v543
    %v1014 = vpop.permute.xlu0 %1013
    %1017 = vset.pattern.permute.xlu0 0
    %1018 = vperm.xlu0 %1017, %v544
    %v1019 = vpop.permute.xlu0 %1018
    %1022 = vset.pattern.permute.xlu0 0
    %1023 = vperm.xlu0 %1022, %v545
    %v1024 = vpop.permute.xlu0 %1023
    %v1314 = vunpack.c.l.b16 %v66
    %v1315 = vunpack.c.h.b16 %v66
    %v1316 = vunpack.c.l.b16 %v67
    %v1317 = vunpack.c.h.b16 %v67
    %v1318 = vunpack.c.l.b16 %v68
    %v1319 = vunpack.c.h.b16 %v68
    %v1320 = vunpack.c.l.b16 %v69
    %v1321 = vunpack.c.h.b16 %v69
    %v1322 = vunpack.c.l.b16 %v70
    %v1323 = vunpack.c.h.b16 %v70
    %v1324 = vunpack.c.l.b16 %v71
    %v1325 = vunpack.c.h.b16 %v71
    %v1326 = vunpack.c.l.b16 %v72
    %v1327 = vunpack.c.h.b16 %v72
    %v1328 = vunpack.c.l.b16 %v73
    %v1329 = vunpack.c.h.b16 %v73
    %v1330 = vunpack.c.l.b16 %v74
    %v1331 = vunpack.c.h.b16 %v74
    %v1332 = vunpack.c.l.b16 %v75
    %v1333 = vunpack.c.h.b16 %v75
    %v1334 = vunpack.c.l.b16 %v76
    %v1335 = vunpack.c.h.b16 %v76
    %v1336 = vunpack.c.l.b16 %v77
    %v1337 = vunpack.c.h.b16 %v77
    %v1338 = vunpack.c.l.b16 %v78
    %v1339 = vunpack.c.h.b16 %v78
    %v1340 = vunpack.c.l.b16 %v79
    %v1341 = vunpack.c.h.b16 %v79
    %v1342 = vunpack.c.l.b16 %v80
    %v1343 = vunpack.c.h.b16 %v80
    %v1344 = vunpack.c.l.b16 %v81
    %v1345 = vunpack.c.h.b16 %v81
    %v1346 = vunpack.c.l.b16 %v82
    %v1347 = vunpack.c.h.b16 %v82
    %v1348 = vunpack.c.l.b16 %v83
    %v1349 = vunpack.c.h.b16 %v83
    %v1350 = vunpack.c.l.b16 %v84
    %v1351 = vunpack.c.h.b16 %v84
    %v1352 = vunpack.c.l.b16 %v85
    %v1353 = vunpack.c.h.b16 %v85
    %v1354 = vunpack.c.l.b16 %v86
    %v1355 = vunpack.c.h.b16 %v86
    %v1356 = vunpack.c.l.b16 %v87
    %v1357 = vunpack.c.h.b16 %v87
    %v1358 = vunpack.c.l.b16 %v88
    %v1359 = vunpack.c.h.b16 %v88
    %v1360 = vunpack.c.l.b16 %v89
    %v1361 = vunpack.c.h.b16 %v89
    %v1362 = vunpack.c.l.b16 %v90
    %v1363 = vunpack.c.h.b16 %v90
    %v1364 = vunpack.c.l.b16 %v91
    %v1365 = vunpack.c.h.b16 %v91
    %v1366 = vunpack.c.l.b16 %v92
    %v1367 = vunpack.c.h.b16 %v92
    %v1368 = vunpack.c.l.b16 %v93
    %v1369 = vunpack.c.h.b16 %v93
    %v1370 = vunpack.c.l.b16 %v94
    %v1371 = vunpack.c.h.b16 %v94
    %v1372 = vunpack.c.l.b16 %v95
    %v1373 = vunpack.c.h.b16 %v95
    %v1374 = vunpack.c.l.b16 %v96
    %v1375 = vunpack.c.h.b16 %v96
    %v1376 = vunpack.c.l.b16 %v97
    %v1377 = vunpack.c.h.b16 %v97
    %v1378 = vunpack.c.l.b16 %v98
    %v1379 = vunpack.c.h.b16 %v98
    %v1380 = vunpack.c.l.b16 %v99
    %v1381 = vunpack.c.h.b16 %v99
    %v1382 = vunpack.c.l.b16 %v100
    %v1383 = vunpack.c.h.b16 %v100
    %v1384 = vunpack.c.l.b16 %v101
    %v1385 = vunpack.c.h.b16 %v101
    %v1386 = vunpack.c.l.b16 %v102
    %v1387 = vunpack.c.h.b16 %v102
    %v1388 = vunpack.c.l.b16 %v103
    %v1389 = vunpack.c.h.b16 %v103
    %v1390 = vunpack.c.l.b16 %v104
    %v1391 = vunpack.c.h.b16 %v104
    %v1392 = vunpack.c.l.b16 %v105
    %v1393 = vunpack.c.h.b16 %v105
    %v1394 = vunpack.c.l.b16 %v106
    %v1395 = vunpack.c.h.b16 %v106
    %v1396 = vunpack.c.l.b16 %v107
    %v1397 = vunpack.c.h.b16 %v107
    %v1398 = vunpack.c.l.b16 %v108
    %v1399 = vunpack.c.h.b16 %v108
    %v1400 = vunpack.c.l.b16 %v109
    %v1401 = vunpack.c.h.b16 %v109
    %v1402 = vunpack.c.l.b16 %v110
    %v1403 = vunpack.c.h.b16 %v110
    %v1404 = vunpack.c.l.b16 %v111
    %v1405 = vunpack.c.h.b16 %v111
    %v1406 = vunpack.c.l.b16 %v112
    %v1407 = vunpack.c.h.b16 %v112
    %v1408 = vunpack.c.l.b16 %v113
    %v1409 = vunpack.c.h.b16 %v113
    %v1410 = vunpack.c.l.b16 %v114
    %v1411 = vunpack.c.h.b16 %v114
    %v1412 = vunpack.c.l.b16 %v115
    %v1413 = vunpack.c.h.b16 %v115
    %v1414 = vunpack.c.l.b16 %v116
    %v1415 = vunpack.c.h.b16 %v116
    %v1416 = vunpack.c.l.b16 %v117
    %v1417 = vunpack.c.h.b16 %v117
    %v1418 = vunpack.c.l.b16 %v118
    %v1419 = vunpack.c.h.b16 %v118
    %v1420 = vunpack.c.l.b16 %v119
    %v1421 = vunpack.c.h.b16 %v119
    %v1422 = vunpack.c.l.b16 %v120
    %v1423 = vunpack.c.h.b16 %v120
    %v1424 = vunpack.c.l.b16 %v121
    %v1425 = vunpack.c.h.b16 %v121
    %v1426 = vunpack.c.l.b16 %v122
    %v1427 = vunpack.c.h.b16 %v122
    %v1428 = vunpack.c.l.b16 %v123
    %v1429 = vunpack.c.h.b16 %v123
    %v1430 = vunpack.c.l.b16 %v124
    %v1431 = vunpack.c.h.b16 %v124
    %v1432 = vunpack.c.l.b16 %v125
    %v1433 = vunpack.c.h.b16 %v125
    %v1434 = vunpack.c.l.b16 %v126
    %v1435 = vunpack.c.h.b16 %v126
    %v1436 = vunpack.c.l.b16 %v127
    %v1437 = vunpack.c.h.b16 %v127
    %v1438 = vunpack.c.l.b16 %v128
    %v1439 = vunpack.c.h.b16 %v128
    %v1440 = vunpack.c.l.b16 %v129
    %v1441 = vunpack.c.h.b16 %v129
    %v1442 = vunpack.c.l.b16 %v130
    %v1443 = vunpack.c.h.b16 %v130
    %v1444 = vunpack.c.l.b16 %v131
    %v1445 = vunpack.c.h.b16 %v131
    %v1446 = vunpack.c.l.b16 %v132
    %v1447 = vunpack.c.h.b16 %v132
    %v1448 = vunpack.c.l.b16 %v133
    %v1449 = vunpack.c.h.b16 %v133
    %v1450 = vunpack.c.l.b16 %v134
    %v1451 = vunpack.c.h.b16 %v134
    %v1452 = vunpack.c.l.b16 %v135
    %v1453 = vunpack.c.h.b16 %v135
    %v1454 = vunpack.c.l.b16 %v136
    %v1455 = vunpack.c.h.b16 %v136
    %v1456 = vunpack.c.l.b16 %v137
    %v1457 = vunpack.c.h.b16 %v137
    %v1458 = vunpack.c.l.b16 %v138
    %v1459 = vunpack.c.h.b16 %v138
    %v1460 = vunpack.c.l.b16 %v139
    %v1461 = vunpack.c.h.b16 %v139
    %v1462 = vunpack.c.l.b16 %v140
    %v1463 = vunpack.c.h.b16 %v140
    %v1464 = vunpack.c.l.b16 %v141
    %v1465 = vunpack.c.h.b16 %v141
    %v1466 = vunpack.c.l.b16 %v142
    %v1467 = vunpack.c.h.b16 %v142
    %v1468 = vunpack.c.l.b16 %v143
    %v1469 = vunpack.c.h.b16 %v143
    %v1470 = vunpack.c.l.b16 %v144
    %v1471 = vunpack.c.h.b16 %v144
    %v1472 = vunpack.c.l.b16 %v145
    %v1473 = vunpack.c.h.b16 %v145
    %v1474 = vunpack.c.l.b16 %v146
    %v1475 = vunpack.c.h.b16 %v146
    %v1476 = vunpack.c.l.b16 %v147
    %v1477 = vunpack.c.h.b16 %v147
    %v1478 = vunpack.c.l.b16 %v148
    %v1479 = vunpack.c.h.b16 %v148
    %v1480 = vunpack.c.l.b16 %v149
    %v1481 = vunpack.c.h.b16 %v149
    %v1482 = vunpack.c.l.b16 %v150
    %v1483 = vunpack.c.h.b16 %v150
    %v1484 = vunpack.c.l.b16 %v151
    %v1485 = vunpack.c.h.b16 %v151
    %v1486 = vunpack.c.l.b16 %v152
    %v1487 = vunpack.c.h.b16 %v152
    %v1488 = vunpack.c.l.b16 %v153
    %v1489 = vunpack.c.h.b16 %v153
    %v1490 = vunpack.c.l.b16 %v154
    %v1491 = vunpack.c.h.b16 %v154
    %v1492 = vunpack.c.l.b16 %v155
    %v1493 = vunpack.c.h.b16 %v155
    %v1494 = vunpack.c.l.b16 %v156
    %v1495 = vunpack.c.h.b16 %v156
    %v1496 = vunpack.c.l.b16 %v157
    %v1497 = vunpack.c.h.b16 %v157
    %v1498 = vunpack.c.l.b16 %v158
    %v1499 = vunpack.c.h.b16 %v158
    %v1500 = vunpack.c.l.b16 %v159
    %v1501 = vunpack.c.h.b16 %v159
    %v1502 = vunpack.c.l.b16 %v160
    %v1503 = vunpack.c.h.b16 %v160
    %v1504 = vunpack.c.l.b16 %v161
    %v1505 = vunpack.c.h.b16 %v161
    %v1506 = vunpack.c.l.b16 %v162
    %v1507 = vunpack.c.h.b16 %v162
    %v1508 = vunpack.c.l.b16 %v163
    %v1509 = vunpack.c.h.b16 %v163
    %v1510 = vunpack.c.l.b16 %v164
    %v1511 = vunpack.c.h.b16 %v164
    %v1512 = vunpack.c.l.b16 %v165
    %v1513 = vunpack.c.h.b16 %v165
    %v1514 = vunpack.c.l.b16 %v166
    %v1515 = vunpack.c.h.b16 %v166
    %v1516 = vunpack.c.l.b16 %v167
    %v1517 = vunpack.c.h.b16 %v167
    %v1518 = vunpack.c.l.b16 %v168
    %v1519 = vunpack.c.h.b16 %v168
    %v1520 = vunpack.c.l.b16 %v169
    %v1521 = vunpack.c.h.b16 %v169
    %v1522 = vunpack.c.l.b16 %v170
    %v1523 = vunpack.c.h.b16 %v170
    %v1524 = vunpack.c.l.b16 %v171
    %v1525 = vunpack.c.h.b16 %v171
    %v1526 = vunpack.c.l.b16 %v172
    %v1527 = vunpack.c.h.b16 %v172
    %v1528 = vunpack.c.l.b16 %v173
    %v1529 = vunpack.c.h.b16 %v173
    %v1530 = vunpack.c.l.b16 %v174
    %v1531 = vunpack.c.h.b16 %v174
    %v1532 = vunpack.c.l.b16 %v175
    %v1533 = vunpack.c.h.b16 %v175
    %v1534 = vunpack.c.l.b16 %v176
    %v1535 = vunpack.c.h.b16 %v176
    %v1536 = vunpack.c.l.b16 %v177
    %v1537 = vunpack.c.h.b16 %v177
    %v1538 = vunpack.c.l.b16 %v178
    %v1539 = vunpack.c.h.b16 %v178
    %v1540 = vunpack.c.l.b16 %v179
    %v1541 = vunpack.c.h.b16 %v179
    %v1542 = vunpack.c.l.b16 %v180
    %v1543 = vunpack.c.h.b16 %v180
    %v1544 = vunpack.c.l.b16 %v181
    %v1545 = vunpack.c.h.b16 %v181
    %v1546 = vunpack.c.l.b16 %v182
    %v1547 = vunpack.c.h.b16 %v182
    %v1548 = vunpack.c.l.b16 %v183
    %v1549 = vunpack.c.h.b16 %v183
    %v1550 = vunpack.c.l.b16 %v184
    %v1551 = vunpack.c.h.b16 %v184
    %v1552 = vunpack.c.l.b16 %v185
    %v1553 = vunpack.c.h.b16 %v185
    %v1554 = vunpack.c.l.b16 %v186
    %v1555 = vunpack.c.h.b16 %v186
    %v1556 = vunpack.c.l.b16 %v187
    %v1557 = vunpack.c.h.b16 %v187
    %v1558 = vunpack.c.l.b16 %v188
    %v1559 = vunpack.c.h.b16 %v188
    %v1560 = vunpack.c.l.b16 %v189
    %v1561 = vunpack.c.h.b16 %v189
    %v1562 = vunpack.c.l.b16 %v190
    %v1563 = vunpack.c.h.b16 %v190
    %v1564 = vunpack.c.l.b16 %v191
    %v1565 = vunpack.c.h.b16 %v191
    %v1566 = vunpack.c.l.b16 %v192
    %v1567 = vunpack.c.h.b16 %v192
    %v1568 = vunpack.c.l.b16 %v193
    %v1569 = vunpack.c.h.b16 %v193
    %v1570 = vunpack.c.l.b16 %v194
    %v1571 = vunpack.c.h.b16 %v194
    %v1572 = vunpack.c.l.b16 %v195
    %v1573 = vunpack.c.h.b16 %v195
    %v1574 = vunpack.c.l.b16 %v196
    %v1575 = vunpack.c.h.b16 %v196
    %v1576 = vunpack.c.l.b16 %v197
    %v1577 = vunpack.c.h.b16 %v197
    %v1578 = vunpack.c.l.b16 %v198
    %v1579 = vunpack.c.h.b16 %v198
    %v1580 = vunpack.c.l.b16 %v199
    %v1581 = vunpack.c.h.b16 %v199
    %v1582 = vunpack.c.l.b16 %v200
    %v1583 = vunpack.c.h.b16 %v200
    %v1584 = vunpack.c.l.b16 %v201
    %v1585 = vunpack.c.h.b16 %v201
    %v1586 = vunpack.c.l.b16 %v202
    %v1587 = vunpack.c.h.b16 %v202
    %v1588 = vunpack.c.l.b16 %v203
    %v1589 = vunpack.c.h.b16 %v203
    %v1590 = vunpack.c.l.b16 %v204
    %v1591 = vunpack.c.h.b16 %v204
    %v1592 = vunpack.c.l.b16 %v205
    %v1593 = vunpack.c.h.b16 %v205
    %v1594 = vunpack.c.l.b16 %v206
    %v1595 = vunpack.c.h.b16 %v206
    %v1596 = vunpack.c.l.b16 %v207
    %v1597 = vunpack.c.h.b16 %v207
    %v1598 = vunpack.c.l.b16 %v208
    %v1599 = vunpack.c.h.b16 %v208
    %v1600 = vunpack.c.l.b16 %v209
    %v1601 = vunpack.c.h.b16 %v209
    %v1602 = vunpack.c.l.b16 %v210
    %v1603 = vunpack.c.h.b16 %v210
    %v1604 = vunpack.c.l.b16 %v211
    %v1605 = vunpack.c.h.b16 %v211
    %v1606 = vunpack.c.l.b16 %v212
    %v1607 = vunpack.c.h.b16 %v212
    %v1608 = vunpack.c.l.b16 %v213
    %v1609 = vunpack.c.h.b16 %v213
    %v1610 = vunpack.c.l.b16 %v214
    %v1611 = vunpack.c.h.b16 %v214
    %v1612 = vunpack.c.l.b16 %v215
    %v1613 = vunpack.c.h.b16 %v215
    %v1614 = vunpack.c.l.b16 %v216
    %v1615 = vunpack.c.h.b16 %v216
    %v1616 = vunpack.c.l.b16 %v217
    %v1617 = vunpack.c.h.b16 %v217
    %v1618 = vunpack.c.l.b16 %v218
    %v1619 = vunpack.c.h.b16 %v218
    %v1620 = vunpack.c.l.b16 %v219
    %v1621 = vunpack.c.h.b16 %v219
    %v1622 = vunpack.c.l.b16 %v220
    %v1623 = vunpack.c.h.b16 %v220
    %v1624 = vunpack.c.l.b16 %v221
    %v1625 = vunpack.c.h.b16 %v221
    %v1626 = vunpack.c.l.b16 %v222
    %v1627 = vunpack.c.h.b16 %v222
    %v1628 = vunpack.c.l.b16 %v223
    %v1629 = vunpack.c.h.b16 %v223
    %v1630 = vunpack.c.l.b16 %v224
    %v1631 = vunpack.c.h.b16 %v224
    %v1632 = vunpack.c.l.b16 %v225
    %v1633 = vunpack.c.h.b16 %v225
    %v1634 = vunpack.c.l.b16 %v226
    %v1635 = vunpack.c.h.b16 %v226
    %v1636 = vunpack.c.l.b16 %v227
    %v1637 = vunpack.c.h.b16 %v227
    %v1638 = vunpack.c.l.b16 %v228
    %v1639 = vunpack.c.h.b16 %v228
    %v1640 = vunpack.c.l.b16 %v229
    %v1641 = vunpack.c.h.b16 %v229
    %v1642 = vunpack.c.l.b16 %v230
    %v1643 = vunpack.c.h.b16 %v230
    %v1644 = vunpack.c.l.b16 %v231
    %v1645 = vunpack.c.h.b16 %v231
    %v1646 = vunpack.c.l.b16 %v232
    %v1647 = vunpack.c.h.b16 %v232
    %v1648 = vunpack.c.l.b16 %v233
    %v1649 = vunpack.c.h.b16 %v233
    %v1650 = vunpack.c.l.b16 %v234
    %v1651 = vunpack.c.h.b16 %v234
    %v1652 = vunpack.c.l.b16 %v235
    %v1653 = vunpack.c.h.b16 %v235
    %v1654 = vunpack.c.l.b16 %v236
    %v1655 = vunpack.c.h.b16 %v236
    %v1656 = vunpack.c.l.b16 %v237
    %v1657 = vunpack.c.h.b16 %v237
    %v1658 = vunpack.c.l.b16 %v238
    %v1659 = vunpack.c.h.b16 %v238
    %v1660 = vunpack.c.l.b16 %v239
    %v1661 = vunpack.c.h.b16 %v239
    %v1662 = vunpack.c.l.b16 %v240
    %v1663 = vunpack.c.h.b16 %v240
    %v1664 = vunpack.c.l.b16 %v241
    %v1665 = vunpack.c.h.b16 %v241
    %v1666 = vunpack.c.l.b16 %v242
    %v1667 = vunpack.c.h.b16 %v242
    %v1668 = vunpack.c.l.b16 %v243
    %v1669 = vunpack.c.h.b16 %v243
    %v1670 = vunpack.c.l.b16 %v244
    %v1671 = vunpack.c.h.b16 %v244
    %v1672 = vunpack.c.l.b16 %v245
    %v1673 = vunpack.c.h.b16 %v245
    %v1674 = vunpack.c.l.b16 %v246
    %v1675 = vunpack.c.h.b16 %v246
    %v1676 = vunpack.c.l.b16 %v247
    %v1677 = vunpack.c.h.b16 %v247
    %v1678 = vunpack.c.l.b16 %v248
    %v1679 = vunpack.c.h.b16 %v248
    %v1680 = vunpack.c.l.b16 %v249
    %v1681 = vunpack.c.h.b16 %v249
    %v1682 = vunpack.c.l.b16 %v250
    %v1683 = vunpack.c.h.b16 %v250
    %v1684 = vunpack.c.l.b16 %v251
    %v1685 = vunpack.c.h.b16 %v251
    %v1686 = vunpack.c.l.b16 %v252
    %v1687 = vunpack.c.h.b16 %v252
    %v1688 = vunpack.c.l.b16 %v253
    %v1689 = vunpack.c.h.b16 %v253
    %v1690 = vunpack.c.l.b16 %v254
    %v1691 = vunpack.c.h.b16 %v254
    %v1692 = vunpack.c.l.b16 %v255
    %v1693 = vunpack.c.h.b16 %v255
    %v1694 = vunpack.c.l.b16 %v256
    %v1695 = vunpack.c.h.b16 %v256
    %v1696 = vunpack.c.l.b16 %v257
    %v1697 = vunpack.c.h.b16 %v257
    %v1698 = vunpack.c.l.b16 %v258
    %v1699 = vunpack.c.h.b16 %v258
    %v1700 = vunpack.c.l.b16 %v259
    %v1701 = vunpack.c.h.b16 %v259
    %v1702 = vunpack.c.l.b16 %v260
    %v1703 = vunpack.c.h.b16 %v260
    %v1704 = vunpack.c.l.b16 %v261
    %v1705 = vunpack.c.h.b16 %v261
    %v1706 = vunpack.c.l.b16 %v262
    %v1707 = vunpack.c.h.b16 %v262
    %v1708 = vunpack.c.l.b16 %v263
    %v1709 = vunpack.c.h.b16 %v263
    %v1710 = vunpack.c.l.b16 %v264
    %v1711 = vunpack.c.h.b16 %v264
    %v1712 = vunpack.c.l.b16 %v265
    %v1713 = vunpack.c.h.b16 %v265
    %v1714 = vunpack.c.l.b16 %v266
    %v1715 = vunpack.c.h.b16 %v266
    %v1716 = vunpack.c.l.b16 %v267
    %v1717 = vunpack.c.h.b16 %v267
    %v1718 = vunpack.c.l.b16 %v268
    %v1719 = vunpack.c.h.b16 %v268
    %v1720 = vunpack.c.l.b16 %v269
    %v1721 = vunpack.c.h.b16 %v269
    %v1722 = vunpack.c.l.b16 %v270
    %v1723 = vunpack.c.h.b16 %v270
    %v1724 = vunpack.c.l.b16 %v271
    %v1725 = vunpack.c.h.b16 %v271
    %v1726 = vunpack.c.l.b16 %v272
    %v1727 = vunpack.c.h.b16 %v272
    %v1728 = vunpack.c.l.b16 %v273
    %v1729 = vunpack.c.h.b16 %v273
    %v1730 = vunpack.c.l.b16 %v274
    %v1731 = vunpack.c.h.b16 %v274
    %v1732 = vunpack.c.l.b16 %v275
    %v1733 = vunpack.c.h.b16 %v275
    %v1734 = vunpack.c.l.b16 %v276
    %v1735 = vunpack.c.h.b16 %v276
    %v1736 = vunpack.c.l.b16 %v277
    %v1737 = vunpack.c.h.b16 %v277
    %v1738 = vunpack.c.l.b16 %v278
    %v1739 = vunpack.c.h.b16 %v278
    %v1740 = vunpack.c.l.b16 %v279
    %v1741 = vunpack.c.h.b16 %v279
    %v1742 = vunpack.c.l.b16 %v280
    %v1743 = vunpack.c.h.b16 %v280
    %v1744 = vunpack.c.l.b16 %v281
    %v1745 = vunpack.c.h.b16 %v281
    %v1746 = vunpack.c.l.b16 %v282
    %v1747 = vunpack.c.h.b16 %v282
    %v1748 = vunpack.c.l.b16 %v283
    %v1749 = vunpack.c.h.b16 %v283
    %v1750 = vunpack.c.l.b16 %v284
    %v1751 = vunpack.c.h.b16 %v284
    %v1752 = vunpack.c.l.b16 %v285
    %v1753 = vunpack.c.h.b16 %v285
    %v1754 = vunpack.c.l.b16 %v286
    %v1755 = vunpack.c.h.b16 %v286
    %v1756 = vunpack.c.l.b16 %v287
    %v1757 = vunpack.c.h.b16 %v287
    %v1758 = vunpack.c.l.b16 %v288
    %v1759 = vunpack.c.h.b16 %v288
    %v1760 = vunpack.c.l.b16 %v289
    %v1761 = vunpack.c.h.b16 %v289
    %v1762 = vunpack.c.l.b16 %v290
    %v1763 = vunpack.c.h.b16 %v290
    %v1764 = vunpack.c.l.b16 %v291
    %v1765 = vunpack.c.h.b16 %v291
    %v1766 = vunpack.c.l.b16 %v292
    %v1767 = vunpack.c.h.b16 %v292
    %v1768 = vunpack.c.l.b16 %v293
    %v1769 = vunpack.c.h.b16 %v293
    %v1770 = vunpack.c.l.b16 %v294
    %v1771 = vunpack.c.h.b16 %v294
    %v1772 = vunpack.c.l.b16 %v295
    %v1773 = vunpack.c.h.b16 %v295
    %v1774 = vunpack.c.l.b16 %v296
    %v1775 = vunpack.c.h.b16 %v296
    %v1776 = vunpack.c.l.b16 %v297
    %v1777 = vunpack.c.h.b16 %v297
    %v1778 = vunpack.c.l.b16 %v298
    %v1779 = vunpack.c.h.b16 %v298
    %v1780 = vunpack.c.l.b16 %v299
    %v1781 = vunpack.c.h.b16 %v299
    %v1782 = vunpack.c.l.b16 %v300
    %v1783 = vunpack.c.h.b16 %v300
    %v1784 = vunpack.c.l.b16 %v301
    %v1785 = vunpack.c.h.b16 %v301
    %v1786 = vunpack.c.l.b16 %v302
    %v1787 = vunpack.c.h.b16 %v302
    %v1788 = vunpack.c.l.b16 %v303
    %v1789 = vunpack.c.h.b16 %v303
    %v1790 = vunpack.c.l.b16 %v304
    %v1791 = vunpack.c.h.b16 %v304
    %v1792 = vunpack.c.l.b16 %v305
    %v1793 = vunpack.c.h.b16 %v305
    %v1794 = vunpack.c.l.b16 %v306
    %v1795 = vunpack.c.h.b16 %v306
    %v1796 = vunpack.c.l.b16 %v307
    %v1797 = vunpack.c.h.b16 %v307
    %v1798 = vunpack.c.l.b16 %v308
    %v1799 = vunpack.c.h.b16 %v308
    %v1800 = vunpack.c.l.b16 %v309
    %v1801 = vunpack.c.h.b16 %v309
    %v1802 = vunpack.c.l.b16 %v310
    %v1803 = vunpack.c.h.b16 %v310
    %v1804 = vunpack.c.l.b16 %v311
    %v1805 = vunpack.c.h.b16 %v311
    %v1806 = vunpack.c.l.b16 %v312
    %v1807 = vunpack.c.h.b16 %v312
    %v1808 = vunpack.c.l.b16 %v313
    %v1809 = vunpack.c.h.b16 %v313
    %v1810 = vunpack.c.l.b16 %v314
    %v1811 = vunpack.c.h.b16 %v314
    %v1812 = vunpack.c.l.b16 %v315
    %v1813 = vunpack.c.h.b16 %v315
    %v1814 = vunpack.c.l.b16 %v316
    %v1815 = vunpack.c.h.b16 %v316
    %v1816 = vunpack.c.l.b16 %v317
    %v1817 = vunpack.c.h.b16 %v317
    %v1818 = vunpack.c.l.b16 %v318
    %v1819 = vunpack.c.h.b16 %v318
    %v1820 = vunpack.c.l.b16 %v319
    %v1821 = vunpack.c.h.b16 %v319
    %v1822 = vunpack.c.l.b16 %v320
    %v1823 = vunpack.c.h.b16 %v320
    %v1824 = vunpack.c.l.b16 %v321
    %v1825 = vunpack.c.h.b16 %v321
    %v1826 = vunpack.c.l.b16 %v322
    %v1827 = vunpack.c.h.b16 %v322
    %v1828 = vunpack.c.l.b16 %v323
    %v1829 = vunpack.c.h.b16 %v323
    %v1830 = vunpack.c.l.b16 %v324
    %v1831 = vunpack.c.h.b16 %v324
    %v1832 = vunpack.c.l.b16 %v325
    %v1833 = vunpack.c.h.b16 %v325
    %v1834 = vunpack.c.l.b16 %v326
    %v1835 = vunpack.c.h.b16 %v326
    %v1836 = vunpack.c.l.b16 %v327
    %v1837 = vunpack.c.h.b16 %v327
    %v1838 = vunpack.c.l.b16 %v328
    %v1839 = vunpack.c.h.b16 %v328
    %v1840 = vunpack.c.l.b16 %v329
    %v1841 = vunpack.c.h.b16 %v329
    %v1842 = vunpack.c.l.b16 %v330
    %v1843 = vunpack.c.h.b16 %v330
    %v1844 = vunpack.c.l.b16 %v331
    %v1845 = vunpack.c.h.b16 %v331
    %v1846 = vunpack.c.l.b16 %v332
    %v1847 = vunpack.c.h.b16 %v332
    %v1848 = vunpack.c.l.b16 %v333
    %v1849 = vunpack.c.h.b16 %v333
    %v1850 = vunpack.c.l.b16 %v334
    %v1851 = vunpack.c.h.b16 %v334
    %v1852 = vunpack.c.l.b16 %v335
    %v1853 = vunpack.c.h.b16 %v335
    %v1854 = vunpack.c.l.b16 %v336
    %v1855 = vunpack.c.h.b16 %v336
    %v1856 = vunpack.c.l.b16 %v337
    %v1857 = vunpack.c.h.b16 %v337
    %v1858 = vunpack.c.l.b16 %v338
    %v1859 = vunpack.c.h.b16 %v338
    %v1860 = vunpack.c.l.b16 %v339
    %v1861 = vunpack.c.h.b16 %v339
    %v1862 = vunpack.c.l.b16 %v340
    %v1863 = vunpack.c.h.b16 %v340
    %v1864 = vunpack.c.l.b16 %v341
    %v1865 = vunpack.c.h.b16 %v341
    %v1866 = vunpack.c.l.b16 %v342
    %v1867 = vunpack.c.h.b16 %v342
    %v1868 = vunpack.c.l.b16 %v343
    %v1869 = vunpack.c.h.b16 %v343
    %v1870 = vunpack.c.l.b16 %v344
    %v1871 = vunpack.c.h.b16 %v344
    %v1872 = vunpack.c.l.b16 %v345
    %v1873 = vunpack.c.h.b16 %v345
    %v1874 = vunpack.c.l.b16 %v346
    %v1875 = vunpack.c.h.b16 %v346
    %v1876 = vunpack.c.l.b16 %v347
    %v1877 = vunpack.c.h.b16 %v347
    %v1878 = vunpack.c.l.b16 %v348
    %v1879 = vunpack.c.h.b16 %v348
    %v1880 = vunpack.c.l.b16 %v349
    %v1881 = vunpack.c.h.b16 %v349
    %v1882 = vunpack.c.l.b16 %v350
    %v1883 = vunpack.c.h.b16 %v350
    %v1884 = vunpack.c.l.b16 %v351
    %v1885 = vunpack.c.h.b16 %v351
    %v1886 = vunpack.c.l.b16 %v352
    %v1887 = vunpack.c.h.b16 %v352
    %v1888 = vunpack.c.l.b16 %v353
    %v1889 = vunpack.c.h.b16 %v353
    %v1890 = vpack.c.b16 %v1320, %v1314
    %v1891 = vpack.c.b16 %v1321, %v1315
    %v1892 = vpack.c.b16 %v1322, %v1316
    %v1893 = vpack.c.b16 %v1323, %v1317
    %v1894 = vpack.c.b16 %v1324, %v1318
    %v1895 = vpack.c.b16 %v1325, %v1319
    %v1896 = vpack.c.b16 %v1332, %v1326
    %v1897 = vpack.c.b16 %v1333, %v1327
    %v1898 = vpack.c.b16 %v1334, %v1328
    %v1899 = vpack.c.b16 %v1335, %v1329
    %v1900 = vpack.c.b16 %v1336, %v1330
    %v1901 = vpack.c.b16 %v1337, %v1331
    %v1902 = vpack.c.b16 %v1344, %v1338
    %v1903 = vpack.c.b16 %v1345, %v1339
    %v1904 = vpack.c.b16 %v1346, %v1340
    %v1905 = vpack.c.b16 %v1347, %v1341
    %v1906 = vpack.c.b16 %v1348, %v1342
    %v1907 = vpack.c.b16 %v1349, %v1343
    %v1908 = vpack.c.b16 %v1356, %v1350
    %v1909 = vpack.c.b16 %v1357, %v1351
    %v1910 = vpack.c.b16 %v1358, %v1352
    %v1911 = vpack.c.b16 %v1359, %v1353
    %v1912 = vpack.c.b16 %v1360, %v1354
    %v1913 = vpack.c.b16 %v1361, %v1355
    %v1914 = vpack.c.b16 %v1368, %v1362
    %v1915 = vpack.c.b16 %v1369, %v1363
    %v1916 = vpack.c.b16 %v1370, %v1364
    %v1917 = vpack.c.b16 %v1371, %v1365
    %v1918 = vpack.c.b16 %v1372, %v1366
    %v1919 = vpack.c.b16 %v1373, %v1367
    %v1920 = vpack.c.b16 %v1380, %v1374
    %v1921 = vpack.c.b16 %v1381, %v1375
    %v1922 = vpack.c.b16 %v1382, %v1376
    %v1923 = vpack.c.b16 %v1383, %v1377
    %v1924 = vpack.c.b16 %v1384, %v1378
    %v1925 = vpack.c.b16 %v1385, %v1379
    %v1926 = vpack.c.b16 %v1392, %v1386
    %v1927 = vpack.c.b16 %v1393, %v1387
    %v1928 = vpack.c.b16 %v1394, %v1388
    %v1929 = vpack.c.b16 %v1395, %v1389
    %v1930 = vpack.c.b16 %v1396, %v1390
    %v1931 = vpack.c.b16 %v1397, %v1391
    %v1932 = vpack.c.b16 %v1404, %v1398
    %v1933 = vpack.c.b16 %v1405, %v1399
    %v1934 = vpack.c.b16 %v1406, %v1400
    %v1935 = vpack.c.b16 %v1407, %v1401
    %v1936 = vpack.c.b16 %v1408, %v1402
    %v1937 = vpack.c.b16 %v1409, %v1403
    %v1938 = vpack.c.b16 %v1416, %v1410
    %v1939 = vpack.c.b16 %v1417, %v1411
    %v1940 = vpack.c.b16 %v1418, %v1412
    %v1941 = vpack.c.b16 %v1419, %v1413
    %v1942 = vpack.c.b16 %v1420, %v1414
    %v1943 = vpack.c.b16 %v1421, %v1415
    %v1944 = vpack.c.b16 %v1428, %v1422
    %v1945 = vpack.c.b16 %v1429, %v1423
    %v1946 = vpack.c.b16 %v1430, %v1424
    %v1947 = vpack.c.b16 %v1431, %v1425
    %v1948 = vpack.c.b16 %v1432, %v1426
    %v1949 = vpack.c.b16 %v1433, %v1427
    %v1950 = vpack.c.b16 %v1440, %v1434
    %v1951 = vpack.c.b16 %v1441, %v1435
    %v1952 = vpack.c.b16 %v1442, %v1436
    %v1953 = vpack.c.b16 %v1443, %v1437
    %v1954 = vpack.c.b16 %v1444, %v1438
    %v1955 = vpack.c.b16 %v1445, %v1439
    %v1956 = vpack.c.b16 %v1452, %v1446
    %v1957 = vpack.c.b16 %v1453, %v1447
    %v1958 = vpack.c.b16 %v1454, %v1448
    %v1959 = vpack.c.b16 %v1455, %v1449
    %v1960 = vpack.c.b16 %v1456, %v1450
    %v1961 = vpack.c.b16 %v1457, %v1451
    %v1962 = vpack.c.b16 %v1464, %v1458
    %v1963 = vpack.c.b16 %v1465, %v1459
    %v1964 = vpack.c.b16 %v1466, %v1460
    %v1965 = vpack.c.b16 %v1467, %v1461
    %v1966 = vpack.c.b16 %v1468, %v1462
    %v1967 = vpack.c.b16 %v1469, %v1463
    %v1968 = vpack.c.b16 %v1476, %v1470
    %v1969 = vpack.c.b16 %v1477, %v1471
    %v1970 = vpack.c.b16 %v1478, %v1472
    %v1971 = vpack.c.b16 %v1479, %v1473
    %v1972 = vpack.c.b16 %v1480, %v1474
    %v1973 = vpack.c.b16 %v1481, %v1475
    %v1974 = vpack.c.b16 %v1488, %v1482
    %v1975 = vpack.c.b16 %v1489, %v1483
    %v1976 = vpack.c.b16 %v1490, %v1484
    %v1977 = vpack.c.b16 %v1491, %v1485
    %v1978 = vpack.c.b16 %v1492, %v1486
    %v1979 = vpack.c.b16 %v1493, %v1487
    %v1980 = vpack.c.b16 %v1500, %v1494
    %v1981 = vpack.c.b16 %v1501, %v1495
    %v1982 = vpack.c.b16 %v1502, %v1496
    %v1983 = vpack.c.b16 %v1503, %v1497
    %v1984 = vpack.c.b16 %v1504, %v1498
    %v1985 = vpack.c.b16 %v1505, %v1499
    %v1986 = vpack.c.b16 %v1512, %v1506
    %v1987 = vpack.c.b16 %v1513, %v1507
    %v1988 = vpack.c.b16 %v1514, %v1508
    %v1989 = vpack.c.b16 %v1515, %v1509
    %v1990 = vpack.c.b16 %v1516, %v1510
    %v1991 = vpack.c.b16 %v1517, %v1511
    %v1992 = vpack.c.b16 %v1524, %v1518
    %v1993 = vpack.c.b16 %v1525, %v1519
    %v1994 = vpack.c.b16 %v1526, %v1520
    %v1995 = vpack.c.b16 %v1527, %v1521
    %v1996 = vpack.c.b16 %v1528, %v1522
    %v1997 = vpack.c.b16 %v1529, %v1523
    %v1998 = vpack.c.b16 %v1536, %v1530
    %v1999 = vpack.c.b16 %v1537, %v1531
    %v2000 = vpack.c.b16 %v1538, %v1532
    %v2001 = vpack.c.b16 %v1539, %v1533
    %v2002 = vpack.c.b16 %v1540, %v1534
    %v2003 = vpack.c.b16 %v1541, %v1535
    %v2004 = vpack.c.b16 %v1548, %v1542
    %v2005 = vpack.c.b16 %v1549, %v1543
    %v2006 = vpack.c.b16 %v1550, %v1544
    %v2007 = vpack.c.b16 %v1551, %v1545
    %v2008 = vpack.c.b16 %v1552, %v1546
    %v2009 = vpack.c.b16 %v1553, %v1547
    %v2010 = vpack.c.b16 %v1560, %v1554
    %v2011 = vpack.c.b16 %v1561, %v1555
    %v2012 = vpack.c.b16 %v1562, %v1556
    %v2013 = vpack.c.b16 %v1563, %v1557
    %v2014 = vpack.c.b16 %v1564, %v1558
    %v2015 = vpack.c.b16 %v1565, %v1559
    %v2016 = vpack.c.b16 %v1572, %v1566
    %v2017 = vpack.c.b16 %v1573, %v1567
    %v2018 = vpack.c.b16 %v1574, %v1568
    %v2019 = vpack.c.b16 %v1575, %v1569
    %v2020 = vpack.c.b16 %v1576, %v1570
    %v2021 = vpack.c.b16 %v1577, %v1571
    %v2022 = vpack.c.b16 %v1584, %v1578
    %v2023 = vpack.c.b16 %v1585, %v1579
    %v2024 = vpack.c.b16 %v1586, %v1580
    %v2025 = vpack.c.b16 %v1587, %v1581
    %v2026 = vpack.c.b16 %v1588, %v1582
    %v2027 = vpack.c.b16 %v1589, %v1583
    %v2028 = vpack.c.b16 %v1596, %v1590
    %v2029 = vpack.c.b16 %v1597, %v1591
    %v2030 = vpack.c.b16 %v1598, %v1592
    %v2031 = vpack.c.b16 %v1599, %v1593
    %v2032 = vpack.c.b16 %v1600, %v1594
    %v2033 = vpack.c.b16 %v1601, %v1595
    %v2034 = vpack.c.b16 %v1608, %v1602
    %v2035 = vpack.c.b16 %v1609, %v1603
    %v2036 = vpack.c.b16 %v1610, %v1604
    %v2037 = vpack.c.b16 %v1611, %v1605
    %v2038 = vpack.c.b16 %v1612, %v1606
    %v2039 = vpack.c.b16 %v1613, %v1607
    %v2040 = vpack.c.b16 %v1620, %v1614
    %v2041 = vpack.c.b16 %v1621, %v1615
    %v2042 = vpack.c.b16 %v1622, %v1616
    %v2043 = vpack.c.b16 %v1623, %v1617
    %v2044 = vpack.c.b16 %v1624, %v1618
    %v2045 = vpack.c.b16 %v1625, %v1619
    %v2046 = vpack.c.b16 %v1632, %v1626
    %v2047 = vpack.c.b16 %v1633, %v1627
    %v2048 = vpack.c.b16 %v1634, %v1628
    %v2049 = vpack.c.b16 %v1635, %v1629
    %v2050 = vpack.c.b16 %v1636, %v1630
    %v2051 = vpack.c.b16 %v1637, %v1631
    %v2052 = vpack.c.b16 %v1644, %v1638
    %v2053 = vpack.c.b16 %v1645, %v1639
    %v2054 = vpack.c.b16 %v1646, %v1640
    %v2055 = vpack.c.b16 %v1647, %v1641
    %v2056 = vpack.c.b16 %v1648, %v1642
    %v2057 = vpack.c.b16 %v1649, %v1643
    %v2058 = vpack.c.b16 %v1656, %v1650
    %v2059 = vpack.c.b16 %v1657, %v1651
    %v2060 = vpack.c.b16 %v1658, %v1652
    %v2061 = vpack.c.b16 %v1659, %v1653
    %v2062 = vpack.c.b16 %v1660, %v1654
    %v2063 = vpack.c.b16 %v1661, %v1655
    %v2064 = vpack.c.b16 %v1668, %v1662
    %v2065 = vpack.c.b16 %v1669, %v1663
    %v2066 = vpack.c.b16 %v1670, %v1664
    %v2067 = vpack.c.b16 %v1671, %v1665
    %v2068 = vpack.c.b16 %v1672, %v1666
    %v2069 = vpack.c.b16 %v1673, %v1667
    %v2070 = vpack.c.b16 %v1680, %v1674
    %v2071 = vpack.c.b16 %v1681, %v1675
    %v2072 = vpack.c.b16 %v1682, %v1676
    %v2073 = vpack.c.b16 %v1683, %v1677
    %v2074 = vpack.c.b16 %v1684, %v1678
    %v2075 = vpack.c.b16 %v1685, %v1679
    %v2076 = vpack.c.b16 %v1692, %v1686
    %v2077 = vpack.c.b16 %v1693, %v1687
    %v2078 = vpack.c.b16 %v1694, %v1688
    %v2079 = vpack.c.b16 %v1695, %v1689
    %v2080 = vpack.c.b16 %v1696, %v1690
    %v2081 = vpack.c.b16 %v1697, %v1691
    %v2082 = vpack.c.b16 %v1704, %v1698
    %v2083 = vpack.c.b16 %v1705, %v1699
    %v2084 = vpack.c.b16 %v1706, %v1700
    %v2085 = vpack.c.b16 %v1707, %v1701
    %v2086 = vpack.c.b16 %v1708, %v1702
    %v2087 = vpack.c.b16 %v1709, %v1703
    %v2088 = vpack.c.b16 %v1716, %v1710
    %v2089 = vpack.c.b16 %v1717, %v1711
    %v2090 = vpack.c.b16 %v1718, %v1712
    %v2091 = vpack.c.b16 %v1719, %v1713
    %v2092 = vpack.c.b16 %v1720, %v1714
    %v2093 = vpack.c.b16 %v1721, %v1715
    %v2094 = vpack.c.b16 %v1728, %v1722
    %v2095 = vpack.c.b16 %v1729, %v1723
    %v2096 = vpack.c.b16 %v1730, %v1724
    %v2097 = vpack.c.b16 %v1731, %v1725
    %v2098 = vpack.c.b16 %v1732, %v1726
    %v2099 = vpack.c.b16 %v1733, %v1727
    %v2100 = vpack.c.b16 %v1740, %v1734
    %v2101 = vpack.c.b16 %v1741, %v1735
    %v2102 = vpack.c.b16 %v1742, %v1736
    %v2103 = vpack.c.b16 %v1743, %v1737
    %v2104 = vpack.c.b16 %v1744, %v1738
    %v2105 = vpack.c.b16 %v1745, %v1739
    %v2106 = vpack.c.b16 %v1752, %v1746
    %v2107 = vpack.c.b16 %v1753, %v1747
    %v2108 = vpack.c.b16 %v1754, %v1748
    %v2109 = vpack.c.b16 %v1755, %v1749
    %v2110 = vpack.c.b16 %v1756, %v1750
    %v2111 = vpack.c.b16 %v1757, %v1751
    %v2112 = vpack.c.b16 %v1764, %v1758
    %v2113 = vpack.c.b16 %v1765, %v1759
    %v2114 = vpack.c.b16 %v1766, %v1760
    %v2115 = vpack.c.b16 %v1767, %v1761
    %v2116 = vpack.c.b16 %v1768, %v1762
    %v2117 = vpack.c.b16 %v1769, %v1763
    %v2118 = vpack.c.b16 %v1776, %v1770
    %v2119 = vpack.c.b16 %v1777, %v1771
    %v2120 = vpack.c.b16 %v1778, %v1772
    %v2121 = vpack.c.b16 %v1779, %v1773
    %v2122 = vpack.c.b16 %v1780, %v1774
    %v2123 = vpack.c.b16 %v1781, %v1775
    %v2124 = vpack.c.b16 %v1788, %v1782
    %v2125 = vpack.c.b16 %v1789, %v1783
    %v2126 = vpack.c.b16 %v1790, %v1784
    %v2127 = vpack.c.b16 %v1791, %v1785
    %v2128 = vpack.c.b16 %v1792, %v1786
    %v2129 = vpack.c.b16 %v1793, %v1787
    %v2130 = vpack.c.b16 %v1800, %v1794
    %v2131 = vpack.c.b16 %v1801, %v1795
    %v2132 = vpack.c.b16 %v1802, %v1796
    %v2133 = vpack.c.b16 %v1803, %v1797
    %v2134 = vpack.c.b16 %v1804, %v1798
    %v2135 = vpack.c.b16 %v1805, %v1799
    %v2136 = vpack.c.b16 %v1812, %v1806
    %v2137 = vpack.c.b16 %v1813, %v1807
    %v2138 = vpack.c.b16 %v1814, %v1808
    %v2139 = vpack.c.b16 %v1815, %v1809
    %v2140 = vpack.c.b16 %v1816, %v1810
    %v2141 = vpack.c.b16 %v1817, %v1811
    %v2142 = vpack.c.b16 %v1824, %v1818
    %v2143 = vpack.c.b16 %v1825, %v1819
    %v2144 = vpack.c.b16 %v1826, %v1820
    %v2145 = vpack.c.b16 %v1827, %v1821
    %v2146 = vpack.c.b16 %v1828, %v1822
    %v2147 = vpack.c.b16 %v1829, %v1823
    %v2148 = vpack.c.b16 %v1836, %v1830
    %v2149 = vpack.c.b16 %v1837, %v1831
    %v2150 = vpack.c.b16 %v1838, %v1832
    %v2151 = vpack.c.b16 %v1839, %v1833
    %v2152 = vpack.c.b16 %v1840, %v1834
    %v2153 = vpack.c.b16 %v1841, %v1835
    %v2154 = vpack.c.b16 %v1848, %v1842
    %v2155 = vpack.c.b16 %v1849, %v1843
    %v2156 = vpack.c.b16 %v1850, %v1844
    %v2157 = vpack.c.b16 %v1851, %v1845
    %v2158 = vpack.c.b16 %v1852, %v1846
    %v2159 = vpack.c.b16 %v1853, %v1847
    %v2160 = vpack.c.b16 %v1860, %v1854
    %v2161 = vpack.c.b16 %v1861, %v1855
    %v2162 = vpack.c.b16 %v1862, %v1856
    %v2163 = vpack.c.b16 %v1863, %v1857
    %v2164 = vpack.c.b16 %v1864, %v1858
    %v2165 = vpack.c.b16 %v1865, %v1859
    %v2166 = vpack.c.b16 %v1872, %v1866
    %v2167 = vpack.c.b16 %v1873, %v1867
    %v2168 = vpack.c.b16 %v1874, %v1868
    %v2169 = vpack.c.b16 %v1875, %v1869
    %v2170 = vpack.c.b16 %v1876, %v1870
    %v2171 = vpack.c.b16 %v1877, %v1871
    %v2172 = vpack.c.b16 %v1884, %v1878
    %v2173 = vpack.c.b16 %v1885, %v1879
    %v2174 = vpack.c.b16 %v1886, %v1880
    %v2175 = vpack.c.b16 %v1887, %v1881
    %v2176 = vpack.c.b16 %v1888, %v1882
    %v2177 = vpack.c.b16 %v1889, %v1883
    %v2562 = vunpack.c.l.b16 %v354
    %v2563 = vunpack.c.l.b16 %v355
    %v2564 = vunpack.c.l.b16 %v356
    %v2565 = vunpack.c.l.b16 %v357
    %v2566 = vunpack.c.l.b16 %v358
    %v2567 = vunpack.c.l.b16 %v359
    %v2568 = vunpack.c.l.b16 %v360
    %v2569 = vunpack.c.l.b16 %v361
    %v2570 = vunpack.c.l.b16 %v362
    %v2571 = vunpack.c.l.b16 %v363
    %v2572 = vunpack.c.l.b16 %v364
    %v2573 = vunpack.c.l.b16 %v365
    %v2574 = vunpack.c.l.b16 %v366
    %v2575 = vunpack.c.l.b16 %v367
    %v2576 = vunpack.c.l.b16 %v368
    %v2577 = vunpack.c.l.b16 %v369
    %v2578 = vunpack.c.l.b16 %v370
    %v2579 = vunpack.c.l.b16 %v371
    %v2580 = vunpack.c.l.b16 %v372
    %v2581 = vunpack.c.l.b16 %v373
    %v2582 = vunpack.c.l.b16 %v374
    %v2583 = vunpack.c.l.b16 %v375
    %v2584 = vunpack.c.l.b16 %v376
    %v2585 = vunpack.c.l.b16 %v377
    %v2586 = vunpack.c.l.b16 %v378
    %v2587 = vunpack.c.l.b16 %v379
    %v2588 = vunpack.c.l.b16 %v380
    %v2589 = vunpack.c.l.b16 %v381
    %v2590 = vunpack.c.l.b16 %v382
    %v2591 = vunpack.c.l.b16 %v383
    %v2592 = vunpack.c.l.b16 %v384
    %v2593 = vunpack.c.l.b16 %v385
    %v2594 = vunpack.c.l.b16 %v386
    %v2595 = vunpack.c.l.b16 %v387
    %v2596 = vunpack.c.l.b16 %v388
    %v2597 = vunpack.c.l.b16 %v389
    %v2598 = vunpack.c.l.b16 %v390
    %v2599 = vunpack.c.l.b16 %v391
    %v2600 = vunpack.c.l.b16 %v392
    %v2601 = vunpack.c.l.b16 %v393
    %v2602 = vunpack.c.l.b16 %v394
    %v2603 = vunpack.c.l.b16 %v395
    %v2604 = vunpack.c.l.b16 %v396
    %v2605 = vunpack.c.l.b16 %v397
    %v2606 = vunpack.c.l.b16 %v398
    %v2607 = vunpack.c.l.b16 %v399
    %v2608 = vunpack.c.l.b16 %v400
    %v2609 = vunpack.c.l.b16 %v401
    %v2610 = vunpack.c.l.b16 %v402
    %v2611 = vunpack.c.l.b16 %v403
    %v2612 = vunpack.c.l.b16 %v404
    %v2613 = vunpack.c.l.b16 %v405
    %v2614 = vunpack.c.l.b16 %v406
    %v2615 = vunpack.c.l.b16 %v407
    %v2616 = vunpack.c.l.b16 %v408
    %v2617 = vunpack.c.l.b16 %v409
    %v2618 = vunpack.c.l.b16 %v410
    %v2619 = vunpack.c.l.b16 %v411
    %v2620 = vunpack.c.l.b16 %v412
    %v2621 = vunpack.c.l.b16 %v413
    %v2622 = vunpack.c.l.b16 %v414
    %v2623 = vunpack.c.l.b16 %v415
    %v2624 = vunpack.c.l.b16 %v416
    %v2625 = vunpack.c.l.b16 %v417
    %v2626 = vunpack.c.l.b16 %v418
    %v2627 = vunpack.c.l.b16 %v419
    %v2628 = vunpack.c.l.b16 %v420
    %v2629 = vunpack.c.l.b16 %v421
    %v2630 = vunpack.c.l.b16 %v422
    %v2631 = vunpack.c.l.b16 %v423
    %v2632 = vunpack.c.l.b16 %v424
    %v2633 = vunpack.c.l.b16 %v425
    %v2634 = vunpack.c.l.b16 %v426
    %v2635 = vunpack.c.l.b16 %v427
    %v2636 = vunpack.c.l.b16 %v428
    %v2637 = vunpack.c.l.b16 %v429
    %v2638 = vunpack.c.l.b16 %v430
    %v2639 = vunpack.c.l.b16 %v431
    %v2640 = vunpack.c.l.b16 %v432
    %v2641 = vunpack.c.l.b16 %v433
    %v2642 = vunpack.c.l.b16 %v434
    %v2643 = vunpack.c.l.b16 %v435
    %v2644 = vunpack.c.l.b16 %v436
    %v2645 = vunpack.c.l.b16 %v437
    %v2646 = vunpack.c.l.b16 %v438
    %v2647 = vunpack.c.l.b16 %v439
    %v2648 = vunpack.c.l.b16 %v440
    %v2649 = vunpack.c.l.b16 %v441
    %v2650 = vunpack.c.l.b16 %v442
    %v2651 = vunpack.c.l.b16 %v443
    %v2652 = vunpack.c.l.b16 %v444
    %v2653 = vunpack.c.l.b16 %v445
    %v2654 = vunpack.c.l.b16 %v446
    %v2655 = vunpack.c.l.b16 %v447
    %v2656 = vunpack.c.l.b16 %v448
    %v2657 = vunpack.c.l.b16 %v449
    %v2658 = vpack.c.b16 %v2563, %v2562
    %v2659 = vpack.c.b16 %v2565, %v2564
    %v2660 = vpack.c.b16 %v2567, %v2566
    %v2661 = vpack.c.b16 %v2569, %v2568
    %v2662 = vpack.c.b16 %v2571, %v2570
    %v2663 = vpack.c.b16 %v2573, %v2572
    %v2664 = vpack.c.b16 %v2575, %v2574
    %v2665 = vpack.c.b16 %v2577, %v2576
    %v2666 = vpack.c.b16 %v2579, %v2578
    %v2667 = vpack.c.b16 %v2581, %v2580
    %v2668 = vpack.c.b16 %v2583, %v2582
    %v2669 = vpack.c.b16 %v2585, %v2584
    %v2670 = vpack.c.b16 %v2587, %v2586
    %v2671 = vpack.c.b16 %v2589, %v2588
    %v2672 = vpack.c.b16 %v2591, %v2590
    %v2673 = vpack.c.b16 %v2593, %v2592
    %v2674 = vpack.c.b16 %v2595, %v2594
    %v2675 = vpack.c.b16 %v2597, %v2596
    %v2676 = vpack.c.b16 %v2599, %v2598
    %v2677 = vpack.c.b16 %v2601, %v2600
    %v2678 = vpack.c.b16 %v2603, %v2602
    %v2679 = vpack.c.b16 %v2605, %v2604
    %v2680 = vpack.c.b16 %v2607, %v2606
    %v2681 = vpack.c.b16 %v2609, %v2608
    %v2682 = vpack.c.b16 %v2611, %v2610
    %v2683 = vpack.c.b16 %v2613, %v2612
    %v2684 = vpack.c.b16 %v2615, %v2614
    %v2685 = vpack.c.b16 %v2617, %v2616
    %v2686 = vpack.c.b16 %v2619, %v2618
    %v2687 = vpack.c.b16 %v2621, %v2620
    %v2688 = vpack.c.b16 %v2623, %v2622
    %v2689 = vpack.c.b16 %v2625, %v2624
    %v2690 = vpack.c.b16 %v2627, %v2626
    %v2691 = vpack.c.b16 %v2629, %v2628
    %v2692 = vpack.c.b16 %v2631, %v2630
    %v2693 = vpack.c.b16 %v2633, %v2632
    %v2694 = vpack.c.b16 %v2635, %v2634
    %v2695 = vpack.c.b16 %v2637, %v2636
    %v2696 = vpack.c.b16 %v2639, %v2638
    %v2697 = vpack.c.b16 %v2641, %v2640
    %v2698 = vpack.c.b16 %v2643, %v2642
    %v2699 = vpack.c.b16 %v2645, %v2644
    %v2700 = vpack.c.b16 %v2647, %v2646
    %v2701 = vpack.c.b16 %v2649, %v2648
    %v2702 = vpack.c.b16 %v2651, %v2650
    %v2703 = vpack.c.b16 %v2653, %v2652
    %v2704 = vpack.c.b16 %v2655, %v2654
    %v2705 = vpack.c.b16 %v2657, %v2656
    %2754 = vmatpush.bf16.msra.mxu0 %v2665
    %2755 = vmatpush.bf16.msra.mxu0 %v2664
    %2756 = vmatpush.bf16.msra.mxu0 %v2663
    %2757 = vmatpush.bf16.msra.mxu0 %v2662
    %2758 = vmatpush.bf16.msra.mxu0 %v2661
    %2759 = vmatpush.bf16.msra.mxu0 %v2660
    %2760 = vmatpush.bf16.msra.mxu0 %v2659
    %2761 = vmatpush.bf16.msra.mxu0 %v2658
    %2762 = vmatmul.bf16.gmra.mxu0 %v1890
    %v2763 = vpop.f32.mrf.mxu0
    %v2764 = vadd.f32 %v549, %v2763
    %v2765 = vpop.f32.mrf.mxu0
    %v2766 = vadd.f32 %v554, %v2765
    %2767 = vmatmul.bf16.gmra.mxu0 %v1896
    %v2768 = vpop.f32.mrf.mxu0
    %v2769 = vadd.f32 %v559, %v2768
    %v2770 = vpop.f32.mrf.mxu0
    %v2771 = vadd.f32 %v564, %v2770
    %2772 = vmatmul.bf16.gmra.mxu0 %v1902
    %v2773 = vpop.f32.mrf.mxu0
    %v2774 = vadd.f32 %v569, %v2773
    %v2775 = vpop.f32.mrf.mxu0
    %v2776 = vadd.f32 %v574, %v2775
    %2777 = vmatmul.bf16.gmra.mxu0 %v1908
    %v2778 = vpop.f32.mrf.mxu0
    %v2779 = vadd.f32 %v579, %v2778
    %v2780 = vpop.f32.mrf.mxu0
    %v2781 = vadd.f32 %v584, %v2780
    %2782 = vmatmul.bf16.gmra.mxu0 %v1914
    %v2783 = vpop.f32.mrf.mxu0
    %v2784 = vadd.f32 %v589, %v2783
    %v2785 = vpop.f32.mrf.mxu0
    %v2786 = vadd.f32 %v594, %v2785
    %2787 = vmatmul.bf16.gmra.mxu0 %v1920
    %v2788 = vpop.f32.mrf.mxu0
    %v2789 = vadd.f32 %v599, %v2788
    %v2790 = vpop.f32.mrf.mxu0
    %v2791 = vadd.f32 %v604, %v2790
    %2792 = vmatmul.bf16.gmra.mxu0 %v1926
    %v2793 = vpop.f32.mrf.mxu0
    %v2794 = vadd.f32 %v609, %v2793
    %v2795 = vpop.f32.mrf.mxu0
    %v2796 = vadd.f32 %v614, %v2795
    %2797 = vmatmul.bf16.gmra.mxu0 %v1932
    %v2798 = vpop.f32.mrf.mxu0
    %v2799 = vadd.f32 %v619, %v2798
    %v2800 = vpop.f32.mrf.mxu0
    %v2801 = vadd.f32 %v624, %v2800
    %2802 = vmatmul.bf16.gmra.mxu0 %v1938
    %v2803 = vpop.f32.mrf.mxu0
    %v2804 = vadd.f32 %v629, %v2803
    %v2805 = vpop.f32.mrf.mxu0
    %v2806 = vadd.f32 %v634, %v2805
    %2807 = vmatmul.bf16.gmra.mxu0 %v1944
    %v2808 = vpop.f32.mrf.mxu0
    %v2809 = vadd.f32 %v639, %v2808
    %v2810 = vpop.f32.mrf.mxu0
    %v2811 = vadd.f32 %v644, %v2810
    %2812 = vmatmul.bf16.gmra.mxu0 %v1950
    %v2813 = vpop.f32.mrf.mxu0
    %v2814 = vadd.f32 %v649, %v2813
    %v2815 = vpop.f32.mrf.mxu0
    %v2816 = vadd.f32 %v654, %v2815
    %2817 = vmatmul.bf16.gmra.mxu0 %v1956
    %v2818 = vpop.f32.mrf.mxu0
    %v2819 = vadd.f32 %v659, %v2818
    %v2820 = vpop.f32.mrf.mxu0
    %v2821 = vadd.f32 %v664, %v2820
    %2822 = vmatmul.bf16.gmra.mxu0 %v1962
    %v2823 = vpop.f32.mrf.mxu0
    %v2824 = vadd.f32 %v669, %v2823
    %v2825 = vpop.f32.mrf.mxu0
    %v2826 = vadd.f32 %v674, %v2825
    %2827 = vmatmul.bf16.gmra.mxu0 %v1968
    %v2828 = vpop.f32.mrf.mxu0
    %v2829 = vadd.f32 %v679, %v2828
    %v2830 = vpop.f32.mrf.mxu0
    %v2831 = vadd.f32 %v684, %v2830
    %2832 = vmatmul.bf16.gmra.mxu0 %v1974
    %v2833 = vpop.f32.mrf.mxu0
    %v2834 = vadd.f32 %v689, %v2833
    %v2835 = vpop.f32.mrf.mxu0
    %v2836 = vadd.f32 %v694, %v2835
    %2837 = vmatmul.bf16.gmra.mxu0 %v1980
    %v2838 = vpop.f32.mrf.mxu0
    %v2839 = vadd.f32 %v699, %v2838
    %v2840 = vpop.f32.mrf.mxu0
    %v2841 = vadd.f32 %v704, %v2840
    %2842 = vmatmul.bf16.gmra.mxu0 %v1986
    %v2843 = vpop.f32.mrf.mxu0
    %v2844 = vadd.f32 %v709, %v2843
    %v2845 = vpop.f32.mrf.mxu0
    %v2846 = vadd.f32 %v714, %v2845
    %2847 = vmatmul.bf16.gmra.mxu0 %v1992
    %v2848 = vpop.f32.mrf.mxu0
    %v2849 = vadd.f32 %v719, %v2848
    %v2850 = vpop.f32.mrf.mxu0
    %v2851 = vadd.f32 %v724, %v2850
    %2852 = vmatmul.bf16.gmra.mxu0 %v1998
    %v2853 = vpop.f32.mrf.mxu0
    %v2854 = vadd.f32 %v729, %v2853
    %v2855 = vpop.f32.mrf.mxu0
    %v2856 = vadd.f32 %v734, %v2855
    %2857 = vmatmul.bf16.gmra.mxu0 %v2004
    %v2858 = vpop.f32.mrf.mxu0
    %v2859 = vadd.f32 %v739, %v2858
    %v2860 = vpop.f32.mrf.mxu0
    %v2861 = vadd.f32 %v744, %v2860
    %2862 = vmatmul.bf16.gmra.mxu0 %v2010
    %v2863 = vpop.f32.mrf.mxu0
    %v2864 = vadd.f32 %v749, %v2863
    %v2865 = vpop.f32.mrf.mxu0
    %v2866 = vadd.f32 %v754, %v2865
    %2867 = vmatmul.bf16.gmra.mxu0 %v2016
    %v2868 = vpop.f32.mrf.mxu0
    %v2869 = vadd.f32 %v759, %v2868
    %v2870 = vpop.f32.mrf.mxu0
    %v2871 = vadd.f32 %v764, %v2870
    %2872 = vmatmul.bf16.gmra.mxu0 %v2022
    %v2873 = vpop.f32.mrf.mxu0
    %v2874 = vadd.f32 %v769, %v2873
    %v2875 = vpop.f32.mrf.mxu0
    %v2876 = vadd.f32 %v774, %v2875
    %2877 = vmatmul.bf16.gmra.mxu0 %v2028
    %v2878 = vpop.f32.mrf.mxu0
    %v2879 = vadd.f32 %v779, %v2878
    %v2880 = vpop.f32.mrf.mxu0
    %v2881 = vadd.f32 %v784, %v2880
    %2882 = vmatmul.bf16.gmra.mxu0 %v2034
    %v2883 = vpop.f32.mrf.mxu0
    %v2884 = vadd.f32 %v789, %v2883
    %v2885 = vpop.f32.mrf.mxu0
    %v2886 = vadd.f32 %v794, %v2885
    %2887 = vmatmul.bf16.gmra.mxu0 %v2040
    %v2888 = vpop.f32.mrf.mxu0
    %v2889 = vadd.f32 %v799, %v2888
    %v2890 = vpop.f32.mrf.mxu0
    %v2891 = vadd.f32 %v804, %v2890
    %2892 = vmatmul.bf16.gmra.mxu0 %v2046
    %v2893 = vpop.f32.mrf.mxu0
    %v2894 = vadd.f32 %v809, %v2893
    %v2895 = vpop.f32.mrf.mxu0
    %v2896 = vadd.f32 %v814, %v2895
    %2897 = vmatmul.bf16.gmra.mxu0 %v2052
    %v2898 = vpop.f32.mrf.mxu0
    %v2899 = vadd.f32 %v819, %v2898
    %v2900 = vpop.f32.mrf.mxu0
    %v2901 = vadd.f32 %v824, %v2900
    %2902 = vmatmul.bf16.gmra.mxu0 %v2058
    %v2903 = vpop.f32.mrf.mxu0
    %v2904 = vadd.f32 %v829, %v2903
    %v2905 = vpop.f32.mrf.mxu0
    %v2906 = vadd.f32 %v834, %v2905
    %2907 = vmatmul.bf16.gmra.mxu0 %v2064
    %v2908 = vpop.f32.mrf.mxu0
    %v2909 = vadd.f32 %v839, %v2908
    %v2910 = vpop.f32.mrf.mxu0
    %v2911 = vadd.f32 %v844, %v2910
    %2912 = vmatmul.bf16.gmra.mxu0 %v2070
    %v2913 = vpop.f32.mrf.mxu0
    %v2914 = vadd.f32 %v849, %v2913
    %v2915 = vpop.f32.mrf.mxu0
    %v2916 = vadd.f32 %v854, %v2915
    %2917 = vmatmul.bf16.gmra.mxu0 %v2076
    %v2918 = vpop.f32.mrf.mxu0
    %v2919 = vadd.f32 %v859, %v2918
    %v2920 = vpop.f32.mrf.mxu0
    %v2921 = vadd.f32 %v864, %v2920
    %2922 = vmatmul.bf16.gmra.mxu0 %v2082
    %v2923 = vpop.f32.mrf.mxu0
    %v2924 = vadd.f32 %v869, %v2923
    %v2925 = vpop.f32.mrf.mxu0
    %v2926 = vadd.f32 %v874, %v2925
    %2927 = vmatmul.bf16.gmra.mxu0 %v2088
    %v2928 = vpop.f32.mrf.mxu0
    %v2929 = vadd.f32 %v879, %v2928
    %v2930 = vpop.f32.mrf.mxu0
    %v2931 = vadd.f32 %v884, %v2930
    %2932 = vmatmul.bf16.gmra.mxu0 %v2094
    %v2933 = vpop.f32.mrf.mxu0
    %v2934 = vadd.f32 %v889, %v2933
    %v2935 = vpop.f32.mrf.mxu0
    %v2936 = vadd.f32 %v894, %v2935
    %2937 = vmatmul.bf16.gmra.mxu0 %v2100
    %v2938 = vpop.f32.mrf.mxu0
    %v2939 = vadd.f32 %v899, %v2938
    %v2940 = vpop.f32.mrf.mxu0
    %v2941 = vadd.f32 %v904, %v2940
    %2942 = vmatmul.bf16.gmra.mxu0 %v2106
    %v2943 = vpop.f32.mrf.mxu0
    %v2944 = vadd.f32 %v909, %v2943
    %v2945 = vpop.f32.mrf.mxu0
    %v2946 = vadd.f32 %v914, %v2945
    %2947 = vmatmul.bf16.gmra.mxu0 %v2112
    %v2948 = vpop.f32.mrf.mxu0
    %v2949 = vadd.f32 %v919, %v2948
    %v2950 = vpop.f32.mrf.mxu0
    %v2951 = vadd.f32 %v924, %v2950
    %2952 = vmatmul.bf16.gmra.mxu0 %v2118
    %v2953 = vpop.f32.mrf.mxu0
    %v2954 = vadd.f32 %v929, %v2953
    %v2955 = vpop.f32.mrf.mxu0
    %v2956 = vadd.f32 %v934, %v2955
    %2957 = vmatmul.bf16.gmra.mxu0 %v2124
    %v2958 = vpop.f32.mrf.mxu0
    %v2959 = vadd.f32 %v939, %v2958
    %v2960 = vpop.f32.mrf.mxu0
    %v2961 = vadd.f32 %v944, %v2960
    %2962 = vmatmul.bf16.gmra.mxu0 %v2130
    %v2963 = vpop.f32.mrf.mxu0
    %v2964 = vadd.f32 %v949, %v2963
    %v2965 = vpop.f32.mrf.mxu0
    %v2966 = vadd.f32 %v954, %v2965
    %2967 = vmatmul.bf16.gmra.mxu0 %v2136
    %v2968 = vpop.f32.mrf.mxu0
    %v2969 = vadd.f32 %v959, %v2968
    %v2970 = vpop.f32.mrf.mxu0
    %v2971 = vadd.f32 %v964, %v2970
    %2972 = vmatmul.bf16.gmra.mxu0 %v2142
    %v2973 = vpop.f32.mrf.mxu0
    %v2974 = vadd.f32 %v969, %v2973
    %v2975 = vpop.f32.mrf.mxu0
    %v2976 = vadd.f32 %v974, %v2975
    %2977 = vmatmul.bf16.gmra.mxu0 %v2148
    %v2978 = vpop.f32.mrf.mxu0
    %v2979 = vadd.f32 %v979, %v2978
    %v2980 = vpop.f32.mrf.mxu0
    %v2981 = vadd.f32 %v984, %v2980
    %2982 = vmatmul.bf16.gmra.mxu0 %v2154
    %v2983 = vpop.f32.mrf.mxu0
    %v2984 = vadd.f32 %v989, %v2983
    %v2985 = vpop.f32.mrf.mxu0
    %v2986 = vadd.f32 %v994, %v2985
    %2987 = vmatmul.bf16.gmra.mxu0 %v2160
    %v2988 = vpop.f32.mrf.mxu0
    %v2989 = vadd.f32 %v999, %v2988
    %v2990 = vpop.f32.mrf.mxu0
    %v2991 = vadd.f32 %v1004, %v2990
    %2992 = vmatmul.bf16.gmra.mxu0 %v2166
    %v2993 = vpop.f32.mrf.mxu0
    %v2994 = vadd.f32 %v1009, %v2993
    %v2995 = vpop.f32.mrf.mxu0
    %v2996 = vadd.f32 %v1014, %v2995
    %2997 = vmatmul.bf16.gmra.mxu0 %v2172
    %v2998 = vpop.f32.mrf.mxu0
    %v2999 = vadd.f32 %v1019, %v2998
    %v3000 = vpop.f32.mrf.mxu0
    %v3001 = vadd.f32 %v1024, %v3000
    %3002 = vdwg.mxu0
    %3003 = vmatpush.bf16.msra.mxu0 %v2673
    %3004 = vmatpush.bf16.msra.mxu0 %v2672
    %3005 = vmatpush.bf16.msra.mxu0 %v2671
    %3006 = vmatpush.bf16.msra.mxu0 %v2670
    %3007 = vmatpush.bf16.msra.mxu0 %v2669
    %3008 = vmatpush.bf16.msra.mxu0 %v2668
    %3009 = vmatpush.bf16.msra.mxu0 %v2667
    %3010 = vmatpush.bf16.msra.mxu0 %v2666
    %3011 = vmatmul.bf16.gmra.mxu0 %v1891
    %v3012 = vpop.f32.mrf.mxu0
    %v3013 = vadd.f32 %v2764, %v3012
    %v3014 = vpop.f32.mrf.mxu0
    %v3015 = vadd.f32 %v2766, %v3014
    %3016 = vmatmul.bf16.gmra.mxu0 %v1897
    %v3017 = vpop.f32.mrf.mxu0
    %v3018 = vadd.f32 %v2769, %v3017
    %v3019 = vpop.f32.mrf.mxu0
    %v3020 = vadd.f32 %v2771, %v3019
    %3021 = vmatmul.bf16.gmra.mxu0 %v1903
    %v3022 = vpop.f32.mrf.mxu0
    %v3023 = vadd.f32 %v2774, %v3022
    %v3024 = vpop.f32.mrf.mxu0
    %v3025 = vadd.f32 %v2776, %v3024
    %3026 = vmatmul.bf16.gmra.mxu0 %v1909
    %v3027 = vpop.f32.mrf.mxu0
    %v3028 = vadd.f32 %v2779, %v3027
    %v3029 = vpop.f32.mrf.mxu0
    %v3030 = vadd.f32 %v2781, %v3029
    %3031 = vmatmul.bf16.gmra.mxu0 %v1915
    %v3032 = vpop.f32.mrf.mxu0
    %v3033 = vadd.f32 %v2784, %v3032
    %v3034 = vpop.f32.mrf.mxu0
    %v3035 = vadd.f32 %v2786, %v3034
    %3036 = vmatmul.bf16.gmra.mxu0 %v1921
    %v3037 = vpop.f32.mrf.mxu0
    %v3038 = vadd.f32 %v2789, %v3037
    %v3039 = vpop.f32.mrf.mxu0
    %v3040 = vadd.f32 %v2791, %v3039
    %3041 = vmatmul.bf16.gmra.mxu0 %v1927
    %v3042 = vpop.f32.mrf.mxu0
    %v3043 = vadd.f32 %v2794, %v3042
    %v3044 = vpop.f32.mrf.mxu0
    %v3045 = vadd.f32 %v2796, %v3044
    %3046 = vmatmul.bf16.gmra.mxu0 %v1933
    %v3047 = vpop.f32.mrf.mxu0
    %v3048 = vadd.f32 %v2799, %v3047
    %v3049 = vpop.f32.mrf.mxu0
    %v3050 = vadd.f32 %v2801, %v3049
    %3051 = vmatmul.bf16.gmra.mxu0 %v1939
    %v3052 = vpop.f32.mrf.mxu0
    %v3053 = vadd.f32 %v2804, %v3052
    %v3054 = vpop.f32.mrf.mxu0
    %v3055 = vadd.f32 %v2806, %v3054
    %3056 = vmatmul.bf16.gmra.mxu0 %v1945
    %v3057 = vpop.f32.mrf.mxu0
    %v3058 = vadd.f32 %v2809, %v3057
    %v3059 = vpop.f32.mrf.mxu0
    %v3060 = vadd.f32 %v2811, %v3059
    %3061 = vmatmul.bf16.gmra.mxu0 %v1951
    %v3062 = vpop.f32.mrf.mxu0
    %v3063 = vadd.f32 %v2814, %v3062
    %v3064 = vpop.f32.mrf.mxu0
    %v3065 = vadd.f32 %v2816, %v3064
    %3066 = vmatmul.bf16.gmra.mxu0 %v1957
    %v3067 = vpop.f32.mrf.mxu0
    %v3068 = vadd.f32 %v2819, %v3067
    %v3069 = vpop.f32.mrf.mxu0
    %v3070 = vadd.f32 %v2821, %v3069
    %3071 = vmatmul.bf16.gmra.mxu0 %v1963
    %v3072 = vpop.f32.mrf.mxu0
    %v3073 = vadd.f32 %v2824, %v3072
    %v3074 = vpop.f32.mrf.mxu0
    %v3075 = vadd.f32 %v2826, %v3074
    %3076 = vmatmul.bf16.gmra.mxu0 %v1969
    %v3077 = vpop.f32.mrf.mxu0
    %v3078 = vadd.f32 %v2829, %v3077
    %v3079 = vpop.f32.mrf.mxu0
    %v3080 = vadd.f32 %v2831, %v3079
    %3081 = vmatmul.bf16.gmra.mxu0 %v1975
    %v3082 = vpop.f32.mrf.mxu0
    %v3083 = vadd.f32 %v2834, %v3082
    %v3084 = vpop.f32.mrf.mxu0
    %v3085 = vadd.f32 %v2836, %v3084
    %3086 = vmatmul.bf16.gmra.mxu0 %v1981
    %v3087 = vpop.f32.mrf.mxu0
    %v3088 = vadd.f32 %v2839, %v3087
    %v3089 = vpop.f32.mrf.mxu0
    %v3090 = vadd.f32 %v2841, %v3089
    %3091 = vmatmul.bf16.gmra.mxu0 %v1987
    %v3092 = vpop.f32.mrf.mxu0
    %v3093 = vadd.f32 %v2844, %v3092
    %v3094 = vpop.f32.mrf.mxu0
    %v3095 = vadd.f32 %v2846, %v3094
    %3096 = vmatmul.bf16.gmra.mxu0 %v1993
    %v3097 = vpop.f32.mrf.mxu0
    %v3098 = vadd.f32 %v2849, %v3097
    %v3099 = vpop.f32.mrf.mxu0
    %v3100 = vadd.f32 %v2851, %v3099
    %3101 = vmatmul.bf16.gmra.mxu0 %v1999
    %v3102 = vpop.f32.mrf.mxu0
    %v3103 = vadd.f32 %v2854, %v3102
    %v3104 = vpop.f32.mrf.mxu0
    %v3105 = vadd.f32 %v2856, %v3104
    %3106 = vmatmul.bf16.gmra.mxu0 %v2005
    %v3107 = vpop.f32.mrf.mxu0
    %v3108 = vadd.f32 %v2859, %v3107
    %v3109 = vpop.f32.mrf.mxu0
    %v3110 = vadd.f32 %v2861, %v3109
    %3111 = vmatmul.bf16.gmra.mxu0 %v2011
    %v3112 = vpop.f32.mrf.mxu0
    %v3113 = vadd.f32 %v2864, %v3112
    %v3114 = vpop.f32.mrf.mxu0
    %v3115 = vadd.f32 %v2866, %v3114
    %3116 = vmatmul.bf16.gmra.mxu0 %v2017
    %v3117 = vpop.f32.mrf.mxu0
    %v3118 = vadd.f32 %v2869, %v3117
    %v3119 = vpop.f32.mrf.mxu0
    %v3120 = vadd.f32 %v2871, %v3119
    %3121 = vmatmul.bf16.gmra.mxu0 %v2023
    %v3122 = vpop.f32.mrf.mxu0
    %v3123 = vadd.f32 %v2874, %v3122
    %v3124 = vpop.f32.mrf.mxu0
    %v3125 = vadd.f32 %v2876, %v3124
    %3126 = vmatmul.bf16.gmra.mxu0 %v2029
    %v3127 = vpop.f32.mrf.mxu0
    %v3128 = vadd.f32 %v2879, %v3127
    %v3129 = vpop.f32.mrf.mxu0
    %v3130 = vadd.f32 %v2881, %v3129
    %3131 = vmatmul.bf16.gmra.mxu0 %v2035
    %v3132 = vpop.f32.mrf.mxu0
    %v3133 = vadd.f32 %v2884, %v3132
    %v3134 = vpop.f32.mrf.mxu0
    %v3135 = vadd.f32 %v2886, %v3134
    %3136 = vmatmul.bf16.gmra.mxu0 %v2041
    %v3137 = vpop.f32.mrf.mxu0
    %v3138 = vadd.f32 %v2889, %v3137
    %v3139 = vpop.f32.mrf.mxu0
    %v3140 = vadd.f32 %v2891, %v3139
    %3141 = vmatmul.bf16.gmra.mxu0 %v2047
    %v3142 = vpop.f32.mrf.mxu0
    %v3143 = vadd.f32 %v2894, %v3142
    %v3144 = vpop.f32.mrf.mxu0
    %v3145 = vadd.f32 %v2896, %v3144
    %3146 = vmatmul.bf16.gmra.mxu0 %v2053
    %v3147 = vpop.f32.mrf.mxu0
    %v3148 = vadd.f32 %v2899, %v3147
    %v3149 = vpop.f32.mrf.mxu0
    %v3150 = vadd.f32 %v2901, %v3149
    %3151 = vmatmul.bf16.gmra.mxu0 %v2059
    %v3152 = vpop.f32.mrf.mxu0
    %v3153 = vadd.f32 %v2904, %v3152
    %v3154 = vpop.f32.mrf.mxu0
    %v3155 = vadd.f32 %v2906, %v3154
    %3156 = vmatmul.bf16.gmra.mxu0 %v2065
    %v3157 = vpop.f32.mrf.mxu0
    %v3158 = vadd.f32 %v2909, %v3157
    %v3159 = vpop.f32.mrf.mxu0
    %v3160 = vadd.f32 %v2911, %v3159
    %3161 = vmatmul.bf16.gmra.mxu0 %v2071
    %v3162 = vpop.f32.mrf.mxu0
    %v3163 = vadd.f32 %v2914, %v3162
    %v3164 = vpop.f32.mrf.mxu0
    %v3165 = vadd.f32 %v2916, %v3164
    %3166 = vmatmul.bf16.gmra.mxu0 %v2077
    %v3167 = vpop.f32.mrf.mxu0
    %v3168 = vadd.f32 %v2919, %v3167
    %v3169 = vpop.f32.mrf.mxu0
    %v3170 = vadd.f32 %v2921, %v3169
    %3171 = vmatmul.bf16.gmra.mxu0 %v2083
    %v3172 = vpop.f32.mrf.mxu0
    %v3173 = vadd.f32 %v2924, %v3172
    %v3174 = vpop.f32.mrf.mxu0
    %v3175 = vadd.f32 %v2926, %v3174
    %3176 = vmatmul.bf16.gmra.mxu0 %v2089
    %v3177 = vpop.f32.mrf.mxu0
    %v3178 = vadd.f32 %v2929, %v3177
    %v3179 = vpop.f32.mrf.mxu0
    %v3180 = vadd.f32 %v2931, %v3179
    %3181 = vmatmul.bf16.gmra.mxu0 %v2095
    %v3182 = vpop.f32.mrf.mxu0
    %v3183 = vadd.f32 %v2934, %v3182
    %v3184 = vpop.f32.mrf.mxu0
    %v3185 = vadd.f32 %v2936, %v3184
    %3186 = vmatmul.bf16.gmra.mxu0 %v2101
    %v3187 = vpop.f32.mrf.mxu0
    %v3188 = vadd.f32 %v2939, %v3187
    %v3189 = vpop.f32.mrf.mxu0
    %v3190 = vadd.f32 %v2941, %v3189
    %3191 = vmatmul.bf16.gmra.mxu0 %v2107
    %v3192 = vpop.f32.mrf.mxu0
    %v3193 = vadd.f32 %v2944, %v3192
    %v3194 = vpop.f32.mrf.mxu0
    %v3195 = vadd.f32 %v2946, %v3194
    %3196 = vmatmul.bf16.gmra.mxu0 %v2113
    %v3197 = vpop.f32.mrf.mxu0
    %v3198 = vadd.f32 %v2949, %v3197
    %v3199 = vpop.f32.mrf.mxu0
    %v3200 = vadd.f32 %v2951, %v3199
    %3201 = vmatmul.bf16.gmra.mxu0 %v2119
    %v3202 = vpop.f32.mrf.mxu0
    %v3203 = vadd.f32 %v2954, %v3202
    %v3204 = vpop.f32.mrf.mxu0
    %v3205 = vadd.f32 %v2956, %v3204
    %3206 = vmatmul.bf16.gmra.mxu0 %v2125
    %v3207 = vpop.f32.mrf.mxu0
    %v3208 = vadd.f32 %v2959, %v3207
    %v3209 = vpop.f32.mrf.mxu0
    %v3210 = vadd.f32 %v2961, %v3209
    %3211 = vmatmul.bf16.gmra.mxu0 %v2131
    %v3212 = vpop.f32.mrf.mxu0
    %v3213 = vadd.f32 %v2964, %v3212
    %v3214 = vpop.f32.mrf.mxu0
    %v3215 = vadd.f32 %v2966, %v3214
    %3216 = vmatmul.bf16.gmra.mxu0 %v2137
    %v3217 = vpop.f32.mrf.mxu0
    %v3218 = vadd.f32 %v2969, %v3217
    %v3219 = vpop.f32.mrf.mxu0
    %v3220 = vadd.f32 %v2971, %v3219
    %3221 = vmatmul.bf16.gmra.mxu0 %v2143
    %v3222 = vpop.f32.mrf.mxu0
    %v3223 = vadd.f32 %v2974, %v3222
    %v3224 = vpop.f32.mrf.mxu0
    %v3225 = vadd.f32 %v2976, %v3224
    %3226 = vmatmul.bf16.gmra.mxu0 %v2149
    %v3227 = vpop.f32.mrf.mxu0
    %v3228 = vadd.f32 %v2979, %v3227
    %v3229 = vpop.f32.mrf.mxu0
    %v3230 = vadd.f32 %v2981, %v3229
    %3231 = vmatmul.bf16.gmra.mxu0 %v2155
    %v3232 = vpop.f32.mrf.mxu0
    %v3233 = vadd.f32 %v2984, %v3232
    %v3234 = vpop.f32.mrf.mxu0
    %v3235 = vadd.f32 %v2986, %v3234
    %3236 = vmatmul.bf16.gmra.mxu0 %v2161
    %v3237 = vpop.f32.mrf.mxu0
    %v3238 = vadd.f32 %v2989, %v3237
    %v3239 = vpop.f32.mrf.mxu0
    %v3240 = vadd.f32 %v2991, %v3239
    %3241 = vmatmul.bf16.gmra.mxu0 %v2167
    %v3242 = vpop.f32.mrf.mxu0
    %v3243 = vadd.f32 %v2994, %v3242
    %v3244 = vpop.f32.mrf.mxu0
    %v3245 = vadd.f32 %v2996, %v3244
    %3246 = vmatmul.bf16.gmra.mxu0 %v2173
    %v3247 = vpop.f32.mrf.mxu0
    %v3248 = vadd.f32 %v2999, %v3247
    %v3249 = vpop.f32.mrf.mxu0
    %v3250 = vadd.f32 %v3001, %v3249
    %3251 = vdwg.mxu0
    %3252 = vmatpush.bf16.msra.mxu0 %v2681
    %3253 = vmatpush.bf16.msra.mxu0 %v2680
    %3254 = vmatpush.bf16.msra.mxu0 %v2679
    %3255 = vmatpush.bf16.msra.mxu0 %v2678
    %3256 = vmatpush.bf16.msra.mxu0 %v2677
    %3257 = vmatpush.bf16.msra.mxu0 %v2676
    %3258 = vmatpush.bf16.msra.mxu0 %v2675
    %3259 = vmatpush.bf16.msra.mxu0 %v2674
    %3260 = vmatmul.bf16.gmra.mxu0 %v1892
    %v3261 = vpop.f32.mrf.mxu0
    %v3262 = vadd.f32 %v3013, %v3261
    %v3263 = vpop.f32.mrf.mxu0
    %v3264 = vadd.f32 %v3015, %v3263
    %3265 = vmatmul.bf16.gmra.mxu0 %v1898
    %v3266 = vpop.f32.mrf.mxu0
    %v3267 = vadd.f32 %v3018, %v3266
    %v3268 = vpop.f32.mrf.mxu0
    %v3269 = vadd.f32 %v3020, %v3268
    %3270 = vmatmul.bf16.gmra.mxu0 %v1904
    %v3271 = vpop.f32.mrf.mxu0
    %v3272 = vadd.f32 %v3023, %v3271
    %v3273 = vpop.f32.mrf.mxu0
    %v3274 = vadd.f32 %v3025, %v3273
    %3275 = vmatmul.bf16.gmra.mxu0 %v1910
    %v3276 = vpop.f32.mrf.mxu0
    %v3277 = vadd.f32 %v3028, %v3276
    %v3278 = vpop.f32.mrf.mxu0
    %v3279 = vadd.f32 %v3030, %v3278
    %3280 = vmatmul.bf16.gmra.mxu0 %v1916
    %v3281 = vpop.f32.mrf.mxu0
    %v3282 = vadd.f32 %v3033, %v3281
    %v3283 = vpop.f32.mrf.mxu0
    %v3284 = vadd.f32 %v3035, %v3283
    %3285 = vmatmul.bf16.gmra.mxu0 %v1922
    %v3286 = vpop.f32.mrf.mxu0
    %v3287 = vadd.f32 %v3038, %v3286
    %v3288 = vpop.f32.mrf.mxu0
    %v3289 = vadd.f32 %v3040, %v3288
    %3290 = vmatmul.bf16.gmra.mxu0 %v1928
    %v3291 = vpop.f32.mrf.mxu0
    %v3292 = vadd.f32 %v3043, %v3291
    %v3293 = vpop.f32.mrf.mxu0
    %v3294 = vadd.f32 %v3045, %v3293
    %3295 = vmatmul.bf16.gmra.mxu0 %v1934
    %v3296 = vpop.f32.mrf.mxu0
    %v3297 = vadd.f32 %v3048, %v3296
    %v3298 = vpop.f32.mrf.mxu0
    %v3299 = vadd.f32 %v3050, %v3298
    %3300 = vmatmul.bf16.gmra.mxu0 %v1940
    %v3301 = vpop.f32.mrf.mxu0
    %v3302 = vadd.f32 %v3053, %v3301
    %v3303 = vpop.f32.mrf.mxu0
    %v3304 = vadd.f32 %v3055, %v3303
    %3305 = vmatmul.bf16.gmra.mxu0 %v1946
    %v3306 = vpop.f32.mrf.mxu0
    %v3307 = vadd.f32 %v3058, %v3306
    %v3308 = vpop.f32.mrf.mxu0
    %v3309 = vadd.f32 %v3060, %v3308
    %3310 = vmatmul.bf16.gmra.mxu0 %v1952
    %v3311 = vpop.f32.mrf.mxu0
    %v3312 = vadd.f32 %v3063, %v3311
    %v3313 = vpop.f32.mrf.mxu0
    %v3314 = vadd.f32 %v3065, %v3313
    %3315 = vmatmul.bf16.gmra.mxu0 %v1958
    %v3316 = vpop.f32.mrf.mxu0
    %v3317 = vadd.f32 %v3068, %v3316
    %v3318 = vpop.f32.mrf.mxu0
    %v3319 = vadd.f32 %v3070, %v3318
    %3320 = vmatmul.bf16.gmra.mxu0 %v1964
    %v3321 = vpop.f32.mrf.mxu0
    %v3322 = vadd.f32 %v3073, %v3321
    %v3323 = vpop.f32.mrf.mxu0
    %v3324 = vadd.f32 %v3075, %v3323
    %3325 = vmatmul.bf16.gmra.mxu0 %v1970
    %v3326 = vpop.f32.mrf.mxu0
    %v3327 = vadd.f32 %v3078, %v3326
    %v3328 = vpop.f32.mrf.mxu0
    %v3329 = vadd.f32 %v3080, %v3328
    %3330 = vmatmul.bf16.gmra.mxu0 %v1976
    %v3331 = vpop.f32.mrf.mxu0
    %v3332 = vadd.f32 %v3083, %v3331
    %v3333 = vpop.f32.mrf.mxu0
    %v3334 = vadd.f32 %v3085, %v3333
    %3335 = vmatmul.bf16.gmra.mxu0 %v1982
    %v3336 = vpop.f32.mrf.mxu0
    %v3337 = vadd.f32 %v3088, %v3336
    %v3338 = vpop.f32.mrf.mxu0
    %v3339 = vadd.f32 %v3090, %v3338
    %3340 = vmatmul.bf16.gmra.mxu0 %v1988
    %v3341 = vpop.f32.mrf.mxu0
    %v3342 = vadd.f32 %v3093, %v3341
    %v3343 = vpop.f32.mrf.mxu0
    %v3344 = vadd.f32 %v3095, %v3343
    %3345 = vmatmul.bf16.gmra.mxu0 %v1994
    %v3346 = vpop.f32.mrf.mxu0
    %v3347 = vadd.f32 %v3098, %v3346
    %v3348 = vpop.f32.mrf.mxu0
    %v3349 = vadd.f32 %v3100, %v3348
    %3350 = vmatmul.bf16.gmra.mxu0 %v2000
    %v3351 = vpop.f32.mrf.mxu0
    %v3352 = vadd.f32 %v3103, %v3351
    %v3353 = vpop.f32.mrf.mxu0
    %v3354 = vadd.f32 %v3105, %v3353
    %3355 = vmatmul.bf16.gmra.mxu0 %v2006
    %v3356 = vpop.f32.mrf.mxu0
    %v3357 = vadd.f32 %v3108, %v3356
    %v3358 = vpop.f32.mrf.mxu0
    %v3359 = vadd.f32 %v3110, %v3358
    %3360 = vmatmul.bf16.gmra.mxu0 %v2012
    %v3361 = vpop.f32.mrf.mxu0
    %v3362 = vadd.f32 %v3113, %v3361
    %v3363 = vpop.f32.mrf.mxu0
    %v3364 = vadd.f32 %v3115, %v3363
    %3365 = vmatmul.bf16.gmra.mxu0 %v2018
    %v3366 = vpop.f32.mrf.mxu0
    %v3367 = vadd.f32 %v3118, %v3366
    %v3368 = vpop.f32.mrf.mxu0
    %v3369 = vadd.f32 %v3120, %v3368
    %3370 = vmatmul.bf16.gmra.mxu0 %v2024
    %v3371 = vpop.f32.mrf.mxu0
    %v3372 = vadd.f32 %v3123, %v3371
    %v3373 = vpop.f32.mrf.mxu0
    %v3374 = vadd.f32 %v3125, %v3373
    %3375 = vmatmul.bf16.gmra.mxu0 %v2030
    %v3376 = vpop.f32.mrf.mxu0
    %v3377 = vadd.f32 %v3128, %v3376
    %v3378 = vpop.f32.mrf.mxu0
    %v3379 = vadd.f32 %v3130, %v3378
    %3380 = vmatmul.bf16.gmra.mxu0 %v2036
    %v3381 = vpop.f32.mrf.mxu0
    %v3382 = vadd.f32 %v3133, %v3381
    %v3383 = vpop.f32.mrf.mxu0
    %v3384 = vadd.f32 %v3135, %v3383
    %3385 = vmatmul.bf16.gmra.mxu0 %v2042
    %v3386 = vpop.f32.mrf.mxu0
    %v3387 = vadd.f32 %v3138, %v3386
    %v3388 = vpop.f32.mrf.mxu0
    %v3389 = vadd.f32 %v3140, %v3388
    %3390 = vmatmul.bf16.gmra.mxu0 %v2048
    %v3391 = vpop.f32.mrf.mxu0
    %v3392 = vadd.f32 %v3143, %v3391
    %v3393 = vpop.f32.mrf.mxu0
    %v3394 = vadd.f32 %v3145, %v3393
    %3395 = vmatmul.bf16.gmra.mxu0 %v2054
    %v3396 = vpop.f32.mrf.mxu0
    %v3397 = vadd.f32 %v3148, %v3396
    %v3398 = vpop.f32.mrf.mxu0
    %v3399 = vadd.f32 %v3150, %v3398
    %3400 = vmatmul.bf16.gmra.mxu0 %v2060
    %v3401 = vpop.f32.mrf.mxu0
    %v3402 = vadd.f32 %v3153, %v3401
    %v3403 = vpop.f32.mrf.mxu0
    %v3404 = vadd.f32 %v3155, %v3403
    %3405 = vmatmul.bf16.gmra.mxu0 %v2066
    %v3406 = vpop.f32.mrf.mxu0
    %v3407 = vadd.f32 %v3158, %v3406
    %v3408 = vpop.f32.mrf.mxu0
    %v3409 = vadd.f32 %v3160, %v3408
    %3410 = vmatmul.bf16.gmra.mxu0 %v2072
    %v3411 = vpop.f32.mrf.mxu0
    %v3412 = vadd.f32 %v3163, %v3411
    %v3413 = vpop.f32.mrf.mxu0
    %v3414 = vadd.f32 %v3165, %v3413
    %3415 = vmatmul.bf16.gmra.mxu0 %v2078
    %v3416 = vpop.f32.mrf.mxu0
    %v3417 = vadd.f32 %v3168, %v3416
    %v3418 = vpop.f32.mrf.mxu0
    %v3419 = vadd.f32 %v3170, %v3418
    %3420 = vmatmul.bf16.gmra.mxu0 %v2084
    %v3421 = vpop.f32.mrf.mxu0
    %v3422 = vadd.f32 %v3173, %v3421
    %v3423 = vpop.f32.mrf.mxu0
    %v3424 = vadd.f32 %v3175, %v3423
    %3425 = vmatmul.bf16.gmra.mxu0 %v2090
    %v3426 = vpop.f32.mrf.mxu0
    %v3427 = vadd.f32 %v3178, %v3426
    %v3428 = vpop.f32.mrf.mxu0
    %v3429 = vadd.f32 %v3180, %v3428
    %3430 = vmatmul.bf16.gmra.mxu0 %v2096
    %v3431 = vpop.f32.mrf.mxu0
    %v3432 = vadd.f32 %v3183, %v3431
    %v3433 = vpop.f32.mrf.mxu0
    %v3434 = vadd.f32 %v3185, %v3433
    %3435 = vmatmul.bf16.gmra.mxu0 %v2102
    %v3436 = vpop.f32.mrf.mxu0
    %v3437 = vadd.f32 %v3188, %v3436
    %v3438 = vpop.f32.mrf.mxu0
    %v3439 = vadd.f32 %v3190, %v3438
    %3440 = vmatmul.bf16.gmra.mxu0 %v2108
    %v3441 = vpop.f32.mrf.mxu0
    %v3442 = vadd.f32 %v3193, %v3441
    %v3443 = vpop.f32.mrf.mxu0
    %v3444 = vadd.f32 %v3195, %v3443
    %3445 = vmatmul.bf16.gmra.mxu0 %v2114
    %v3446 = vpop.f32.mrf.mxu0
    %v3447 = vadd.f32 %v3198, %v3446
    %v3448 = vpop.f32.mrf.mxu0
    %v3449 = vadd.f32 %v3200, %v3448
    %3450 = vmatmul.bf16.gmra.mxu0 %v2120
    %v3451 = vpop.f32.mrf.mxu0
    %v3452 = vadd.f32 %v3203, %v3451
    %v3453 = vpop.f32.mrf.mxu0
    %v3454 = vadd.f32 %v3205, %v3453
    %3455 = vmatmul.bf16.gmra.mxu0 %v2126
    %v3456 = vpop.f32.mrf.mxu0
    %v3457 = vadd.f32 %v3208, %v3456
    %v3458 = vpop.f32.mrf.mxu0
    %v3459 = vadd.f32 %v3210, %v3458
    %3460 = vmatmul.bf16.gmra.mxu0 %v2132
    %v3461 = vpop.f32.mrf.mxu0
    %v3462 = vadd.f32 %v3213, %v3461
    %v3463 = vpop.f32.mrf.mxu0
    %v3464 = vadd.f32 %v3215, %v3463
    %3465 = vmatmul.bf16.gmra.mxu0 %v2138
    %v3466 = vpop.f32.mrf.mxu0
    %v3467 = vadd.f32 %v3218, %v3466
    %v3468 = vpop.f32.mrf.mxu0
    %v3469 = vadd.f32 %v3220, %v3468
    %3470 = vmatmul.bf16.gmra.mxu0 %v2144
    %v3471 = vpop.f32.mrf.mxu0
    %v3472 = vadd.f32 %v3223, %v3471
    %v3473 = vpop.f32.mrf.mxu0
    %v3474 = vadd.f32 %v3225, %v3473
    %3475 = vmatmul.bf16.gmra.mxu0 %v2150
    %v3476 = vpop.f32.mrf.mxu0
    %v3477 = vadd.f32 %v3228, %v3476
    %v3478 = vpop.f32.mrf.mxu0
    %v3479 = vadd.f32 %v3230, %v3478
    %3480 = vmatmul.bf16.gmra.mxu0 %v2156
    %v3481 = vpop.f32.mrf.mxu0
    %v3482 = vadd.f32 %v3233, %v3481
    %v3483 = vpop.f32.mrf.mxu0
    %v3484 = vadd.f32 %v3235, %v3483
    %3485 = vmatmul.bf16.gmra.mxu0 %v2162
    %v3486 = vpop.f32.mrf.mxu0
    %v3487 = vadd.f32 %v3238, %v3486
    %v3488 = vpop.f32.mrf.mxu0
    %v3489 = vadd.f32 %v3240, %v3488
    %3490 = vmatmul.bf16.gmra.mxu0 %v2168
    %v3491 = vpop.f32.mrf.mxu0
    %v3492 = vadd.f32 %v3243, %v3491
    %v3493 = vpop.f32.mrf.mxu0
    %v3494 = vadd.f32 %v3245, %v3493
    %3495 = vmatmul.bf16.gmra.mxu0 %v2174
    %v3496 = vpop.f32.mrf.mxu0
    %v3497 = vadd.f32 %v3248, %v3496
    %v3498 = vpop.f32.mrf.mxu0
    %v3499 = vadd.f32 %v3250, %v3498
    %3500 = vdwg.mxu0
    %3501 = vmatpush.bf16.msra.mxu0 %v2689
    %3502 = vmatpush.bf16.msra.mxu0 %v2688
    %3503 = vmatpush.bf16.msra.mxu0 %v2687
    %3504 = vmatpush.bf16.msra.mxu0 %v2686
    %3505 = vmatpush.bf16.msra.mxu0 %v2685
    %3506 = vmatpush.bf16.msra.mxu0 %v2684
    %3507 = vmatpush.bf16.msra.mxu0 %v2683
    %3508 = vmatpush.bf16.msra.mxu0 %v2682
    %3509 = vmatmul.bf16.gmra.mxu0 %v1893
    %v3510 = vpop.f32.mrf.mxu0
    %v3511 = vadd.f32 %v3262, %v3510
    %v3512 = vpop.f32.mrf.mxu0
    %v3513 = vadd.f32 %v3264, %v3512
    %3514 = vmatmul.bf16.gmra.mxu0 %v1899
    %v3515 = vpop.f32.mrf.mxu0
    %v3516 = vadd.f32 %v3267, %v3515
    %v3517 = vpop.f32.mrf.mxu0
    %v3518 = vadd.f32 %v3269, %v3517
    %3519 = vmatmul.bf16.gmra.mxu0 %v1905
    %v3520 = vpop.f32.mrf.mxu0
    %v3521 = vadd.f32 %v3272, %v3520
    %v3522 = vpop.f32.mrf.mxu0
    %v3523 = vadd.f32 %v3274, %v3522
    %3524 = vmatmul.bf16.gmra.mxu0 %v1911
    %v3525 = vpop.f32.mrf.mxu0
    %v3526 = vadd.f32 %v3277, %v3525
    %v3527 = vpop.f32.mrf.mxu0
    %v3528 = vadd.f32 %v3279, %v3527
    %3529 = vmatmul.bf16.gmra.mxu0 %v1917
    %v3530 = vpop.f32.mrf.mxu0
    %v3531 = vadd.f32 %v3282, %v3530
    %v3532 = vpop.f32.mrf.mxu0
    %v3533 = vadd.f32 %v3284, %v3532
    %3534 = vmatmul.bf16.gmra.mxu0 %v1923
    %v3535 = vpop.f32.mrf.mxu0
    %v3536 = vadd.f32 %v3287, %v3535
    %v3537 = vpop.f32.mrf.mxu0
    %v3538 = vadd.f32 %v3289, %v3537
    %3539 = vmatmul.bf16.gmra.mxu0 %v1929
    %v3540 = vpop.f32.mrf.mxu0
    %v3541 = vadd.f32 %v3292, %v3540
    %v3542 = vpop.f32.mrf.mxu0
    %v3543 = vadd.f32 %v3294, %v3542
    %3544 = vmatmul.bf16.gmra.mxu0 %v1935
    %v3545 = vpop.f32.mrf.mxu0
    %v3546 = vadd.f32 %v3297, %v3545
    %v3547 = vpop.f32.mrf.mxu0
    %v3548 = vadd.f32 %v3299, %v3547
    %3549 = vmatmul.bf16.gmra.mxu0 %v1941
    %v3550 = vpop.f32.mrf.mxu0
    %v3551 = vadd.f32 %v3302, %v3550
    %v3552 = vpop.f32.mrf.mxu0
    %v3553 = vadd.f32 %v3304, %v3552
    %3554 = vmatmul.bf16.gmra.mxu0 %v1947
    %v3555 = vpop.f32.mrf.mxu0
    %v3556 = vadd.f32 %v3307, %v3555
    %v3557 = vpop.f32.mrf.mxu0
    %v3558 = vadd.f32 %v3309, %v3557
    %3559 = vmatmul.bf16.gmra.mxu0 %v1953
    %v3560 = vpop.f32.mrf.mxu0
    %v3561 = vadd.f32 %v3312, %v3560
    %v3562 = vpop.f32.mrf.mxu0
    %v3563 = vadd.f32 %v3314, %v3562
    %3564 = vmatmul.bf16.gmra.mxu0 %v1959
    %v3565 = vpop.f32.mrf.mxu0
    %v3566 = vadd.f32 %v3317, %v3565
    %v3567 = vpop.f32.mrf.mxu0
    %v3568 = vadd.f32 %v3319, %v3567
    %3569 = vmatmul.bf16.gmra.mxu0 %v1965
    %v3570 = vpop.f32.mrf.mxu0
    %v3571 = vadd.f32 %v3322, %v3570
    %v3572 = vpop.f32.mrf.mxu0
    %v3573 = vadd.f32 %v3324, %v3572
    %3574 = vmatmul.bf16.gmra.mxu0 %v1971
    %v3575 = vpop.f32.mrf.mxu0
    %v3576 = vadd.f32 %v3327, %v3575
    %v3577 = vpop.f32.mrf.mxu0
    %v3578 = vadd.f32 %v3329, %v3577
    %3579 = vmatmul.bf16.gmra.mxu0 %v1977
    %v3580 = vpop.f32.mrf.mxu0
    %v3581 = vadd.f32 %v3332, %v3580
    %v3582 = vpop.f32.mrf.mxu0
    %v3583 = vadd.f32 %v3334, %v3582
    %3584 = vmatmul.bf16.gmra.mxu0 %v1983
    %v3585 = vpop.f32.mrf.mxu0
    %v3586 = vadd.f32 %v3337, %v3585
    %v3587 = vpop.f32.mrf.mxu0
    %v3588 = vadd.f32 %v3339, %v3587
    %3589 = vmatmul.bf16.gmra.mxu0 %v1989
    %v3590 = vpop.f32.mrf.mxu0
    %v3591 = vadd.f32 %v3342, %v3590
    %v3592 = vpop.f32.mrf.mxu0
    %v3593 = vadd.f32 %v3344, %v3592
    %3594 = vmatmul.bf16.gmra.mxu0 %v1995
    %v3595 = vpop.f32.mrf.mxu0
    %v3596 = vadd.f32 %v3347, %v3595
    %v3597 = vpop.f32.mrf.mxu0
    %v3598 = vadd.f32 %v3349, %v3597
    %3599 = vmatmul.bf16.gmra.mxu0 %v2001
    %v3600 = vpop.f32.mrf.mxu0
    %v3601 = vadd.f32 %v3352, %v3600
    %v3602 = vpop.f32.mrf.mxu0
    %v3603 = vadd.f32 %v3354, %v3602
    %3604 = vmatmul.bf16.gmra.mxu0 %v2007
    %v3605 = vpop.f32.mrf.mxu0
    %v3606 = vadd.f32 %v3357, %v3605
    %v3607 = vpop.f32.mrf.mxu0
    %v3608 = vadd.f32 %v3359, %v3607
    %3609 = vmatmul.bf16.gmra.mxu0 %v2013
    %v3610 = vpop.f32.mrf.mxu0
    %v3611 = vadd.f32 %v3362, %v3610
    %v3612 = vpop.f32.mrf.mxu0
    %v3613 = vadd.f32 %v3364, %v3612
    %3614 = vmatmul.bf16.gmra.mxu0 %v2019
    %v3615 = vpop.f32.mrf.mxu0
    %v3616 = vadd.f32 %v3367, %v3615
    %v3617 = vpop.f32.mrf.mxu0
    %v3618 = vadd.f32 %v3369, %v3617
    %3619 = vmatmul.bf16.gmra.mxu0 %v2025
    %v3620 = vpop.f32.mrf.mxu0
    %v3621 = vadd.f32 %v3372, %v3620
    %v3622 = vpop.f32.mrf.mxu0
    %v3623 = vadd.f32 %v3374, %v3622
    %3624 = vmatmul.bf16.gmra.mxu0 %v2031
    %v3625 = vpop.f32.mrf.mxu0
    %v3626 = vadd.f32 %v3377, %v3625
    %v3627 = vpop.f32.mrf.mxu0
    %v3628 = vadd.f32 %v3379, %v3627
    %3629 = vmatmul.bf16.gmra.mxu0 %v2037
    %v3630 = vpop.f32.mrf.mxu0
    %v3631 = vadd.f32 %v3382, %v3630
    %v3632 = vpop.f32.mrf.mxu0
    %v3633 = vadd.f32 %v3384, %v3632
    %3634 = vmatmul.bf16.gmra.mxu0 %v2043
    %v3635 = vpop.f32.mrf.mxu0
    %v3636 = vadd.f32 %v3387, %v3635
    %v3637 = vpop.f32.mrf.mxu0
    %v3638 = vadd.f32 %v3389, %v3637
    %3639 = vmatmul.bf16.gmra.mxu0 %v2049
    %v3640 = vpop.f32.mrf.mxu0
    %v3641 = vadd.f32 %v3392, %v3640
    %v3642 = vpop.f32.mrf.mxu0
    %v3643 = vadd.f32 %v3394, %v3642
    %3644 = vmatmul.bf16.gmra.mxu0 %v2055
    %v3645 = vpop.f32.mrf.mxu0
    %v3646 = vadd.f32 %v3397, %v3645
    %v3647 = vpop.f32.mrf.mxu0
    %v3648 = vadd.f32 %v3399, %v3647
    %3649 = vmatmul.bf16.gmra.mxu0 %v2061
    %v3650 = vpop.f32.mrf.mxu0
    %v3651 = vadd.f32 %v3402, %v3650
    %v3652 = vpop.f32.mrf.mxu0
    %v3653 = vadd.f32 %v3404, %v3652
    %3654 = vmatmul.bf16.gmra.mxu0 %v2067
    %v3655 = vpop.f32.mrf.mxu0
    %v3656 = vadd.f32 %v3407, %v3655
    %v3657 = vpop.f32.mrf.mxu0
    %v3658 = vadd.f32 %v3409, %v3657
    %3659 = vmatmul.bf16.gmra.mxu0 %v2073
    %v3660 = vpop.f32.mrf.mxu0
    %v3661 = vadd.f32 %v3412, %v3660
    %v3662 = vpop.f32.mrf.mxu0
    %v3663 = vadd.f32 %v3414, %v3662
    %3664 = vmatmul.bf16.gmra.mxu0 %v2079
    %v3665 = vpop.f32.mrf.mxu0
    %v3666 = vadd.f32 %v3417, %v3665
    %v3667 = vpop.f32.mrf.mxu0
    %v3668 = vadd.f32 %v3419, %v3667
    %3669 = vmatmul.bf16.gmra.mxu0 %v2085
    %v3670 = vpop.f32.mrf.mxu0
    %v3671 = vadd.f32 %v3422, %v3670
    %v3672 = vpop.f32.mrf.mxu0
    %v3673 = vadd.f32 %v3424, %v3672
    %3674 = vmatmul.bf16.gmra.mxu0 %v2091
    %v3675 = vpop.f32.mrf.mxu0
    %v3676 = vadd.f32 %v3427, %v3675
    %v3677 = vpop.f32.mrf.mxu0
    %v3678 = vadd.f32 %v3429, %v3677
    %3679 = vmatmul.bf16.gmra.mxu0 %v2097
    %v3680 = vpop.f32.mrf.mxu0
    %v3681 = vadd.f32 %v3432, %v3680
    %v3682 = vpop.f32.mrf.mxu0
    %v3683 = vadd.f32 %v3434, %v3682
    %3684 = vmatmul.bf16.gmra.mxu0 %v2103
    %v3685 = vpop.f32.mrf.mxu0
    %v3686 = vadd.f32 %v3437, %v3685
    %v3687 = vpop.f32.mrf.mxu0
    %v3688 = vadd.f32 %v3439, %v3687
    %3689 = vmatmul.bf16.gmra.mxu0 %v2109
    %v3690 = vpop.f32.mrf.mxu0
    %v3691 = vadd.f32 %v3442, %v3690
    %v3692 = vpop.f32.mrf.mxu0
    %v3693 = vadd.f32 %v3444, %v3692
    %3694 = vmatmul.bf16.gmra.mxu0 %v2115
    %v3695 = vpop.f32.mrf.mxu0
    %v3696 = vadd.f32 %v3447, %v3695
    %v3697 = vpop.f32.mrf.mxu0
    %v3698 = vadd.f32 %v3449, %v3697
    %3699 = vmatmul.bf16.gmra.mxu0 %v2121
    %v3700 = vpop.f32.mrf.mxu0
    %v3701 = vadd.f32 %v3452, %v3700
    %v3702 = vpop.f32.mrf.mxu0
    %v3703 = vadd.f32 %v3454, %v3702
    %3704 = vmatmul.bf16.gmra.mxu0 %v2127
    %v3705 = vpop.f32.mrf.mxu0
    %v3706 = vadd.f32 %v3457, %v3705
    %v3707 = vpop.f32.mrf.mxu0
    %v3708 = vadd.f32 %v3459, %v3707
    %3709 = vmatmul.bf16.gmra.mxu0 %v2133
    %v3710 = vpop.f32.mrf.mxu0
    %v3711 = vadd.f32 %v3462, %v3710
    %v3712 = vpop.f32.mrf.mxu0
    %v3713 = vadd.f32 %v3464, %v3712
    %3714 = vmatmul.bf16.gmra.mxu0 %v2139
    %v3715 = vpop.f32.mrf.mxu0
    %v3716 = vadd.f32 %v3467, %v3715
    %v3717 = vpop.f32.mrf.mxu0
    %v3718 = vadd.f32 %v3469, %v3717
    %3719 = vmatmul.bf16.gmra.mxu0 %v2145
    %v3720 = vpop.f32.mrf.mxu0
    %v3721 = vadd.f32 %v3472, %v3720
    %v3722 = vpop.f32.mrf.mxu0
    %v3723 = vadd.f32 %v3474, %v3722
    %3724 = vmatmul.bf16.gmra.mxu0 %v2151
    %v3725 = vpop.f32.mrf.mxu0
    %v3726 = vadd.f32 %v3477, %v3725
    %v3727 = vpop.f32.mrf.mxu0
    %v3728 = vadd.f32 %v3479, %v3727
    %3729 = vmatmul.bf16.gmra.mxu0 %v2157
    %v3730 = vpop.f32.mrf.mxu0
    %v3731 = vadd.f32 %v3482, %v3730
    %v3732 = vpop.f32.mrf.mxu0
    %v3733 = vadd.f32 %v3484, %v3732
    %3734 = vmatmul.bf16.gmra.mxu0 %v2163
    %v3735 = vpop.f32.mrf.mxu0
    %v3736 = vadd.f32 %v3487, %v3735
    %v3737 = vpop.f32.mrf.mxu0
    %v3738 = vadd.f32 %v3489, %v3737
    %3739 = vmatmul.bf16.gmra.mxu0 %v2169
    %v3740 = vpop.f32.mrf.mxu0
    %v3741 = vadd.f32 %v3492, %v3740
    %v3742 = vpop.f32.mrf.mxu0
    %v3743 = vadd.f32 %v3494, %v3742
    %3744 = vmatmul.bf16.gmra.mxu0 %v2175
    %v3745 = vpop.f32.mrf.mxu0
    %v3746 = vadd.f32 %v3497, %v3745
    %v3747 = vpop.f32.mrf.mxu0
    %v3748 = vadd.f32 %v3499, %v3747
    %3749 = vdwg.mxu0
    %3750 = vmatpush.bf16.msra.mxu0 %v2697
    %3751 = vmatpush.bf16.msra.mxu0 %v2696
    %3752 = vmatpush.bf16.msra.mxu0 %v2695
    %3753 = vmatpush.bf16.msra.mxu0 %v2694
    %3754 = vmatpush.bf16.msra.mxu0 %v2693
    %3755 = vmatpush.bf16.msra.mxu0 %v2692
    %3756 = vmatpush.bf16.msra.mxu0 %v2691
    %3757 = vmatpush.bf16.msra.mxu0 %v2690
    %3758 = vmatmul.bf16.gmra.mxu0 %v1894
    %v3759 = vpop.f32.mrf.mxu0
    %v3760 = vadd.f32 %v3511, %v3759
    %v3761 = vpop.f32.mrf.mxu0
    %v3762 = vadd.f32 %v3513, %v3761
    %3763 = vmatmul.bf16.gmra.mxu0 %v1900
    %v3764 = vpop.f32.mrf.mxu0
    %v3765 = vadd.f32 %v3516, %v3764
    %v3766 = vpop.f32.mrf.mxu0
    %v3767 = vadd.f32 %v3518, %v3766
    %3768 = vmatmul.bf16.gmra.mxu0 %v1906
    %v3769 = vpop.f32.mrf.mxu0
    %v3770 = vadd.f32 %v3521, %v3769
    %v3771 = vpop.f32.mrf.mxu0
    %v3772 = vadd.f32 %v3523, %v3771
    %3773 = vmatmul.bf16.gmra.mxu0 %v1912
    %v3774 = vpop.f32.mrf.mxu0
    %v3775 = vadd.f32 %v3526, %v3774
    %v3776 = vpop.f32.mrf.mxu0
    %v3777 = vadd.f32 %v3528, %v3776
    %3778 = vmatmul.bf16.gmra.mxu0 %v1918
    %v3779 = vpop.f32.mrf.mxu0
    %v3780 = vadd.f32 %v3531, %v3779
    %v3781 = vpop.f32.mrf.mxu0
    %v3782 = vadd.f32 %v3533, %v3781
    %3783 = vmatmul.bf16.gmra.mxu0 %v1924
    %v3784 = vpop.f32.mrf.mxu0
    %v3785 = vadd.f32 %v3536, %v3784
    %v3786 = vpop.f32.mrf.mxu0
    %v3787 = vadd.f32 %v3538, %v3786
    %3788 = vmatmul.bf16.gmra.mxu0 %v1930
    %v3789 = vpop.f32.mrf.mxu0
    %v3790 = vadd.f32 %v3541, %v3789
    %v3791 = vpop.f32.mrf.mxu0
    %v3792 = vadd.f32 %v3543, %v3791
    %3793 = vmatmul.bf16.gmra.mxu0 %v1936
    %v3794 = vpop.f32.mrf.mxu0
    %v3795 = vadd.f32 %v3546, %v3794
    %v3796 = vpop.f32.mrf.mxu0
    %v3797 = vadd.f32 %v3548, %v3796
    %3798 = vmatmul.bf16.gmra.mxu0 %v1942
    %v3799 = vpop.f32.mrf.mxu0
    %v3800 = vadd.f32 %v3551, %v3799
    %v3801 = vpop.f32.mrf.mxu0
    %v3802 = vadd.f32 %v3553, %v3801
    %3803 = vmatmul.bf16.gmra.mxu0 %v1948
    %v3804 = vpop.f32.mrf.mxu0
    %v3805 = vadd.f32 %v3556, %v3804
    %v3806 = vpop.f32.mrf.mxu0
    %v3807 = vadd.f32 %v3558, %v3806
    %3808 = vmatmul.bf16.gmra.mxu0 %v1954
    %v3809 = vpop.f32.mrf.mxu0
    %v3810 = vadd.f32 %v3561, %v3809
    %v3811 = vpop.f32.mrf.mxu0
    %v3812 = vadd.f32 %v3563, %v3811
    %3813 = vmatmul.bf16.gmra.mxu0 %v1960
    %v3814 = vpop.f32.mrf.mxu0
    %v3815 = vadd.f32 %v3566, %v3814
    %v3816 = vpop.f32.mrf.mxu0
    %v3817 = vadd.f32 %v3568, %v3816
    %3818 = vmatmul.bf16.gmra.mxu0 %v1966
    %v3819 = vpop.f32.mrf.mxu0
    %v3820 = vadd.f32 %v3571, %v3819
    %v3821 = vpop.f32.mrf.mxu0
    %v3822 = vadd.f32 %v3573, %v3821
    %3823 = vmatmul.bf16.gmra.mxu0 %v1972
    %v3824 = vpop.f32.mrf.mxu0
    %v3825 = vadd.f32 %v3576, %v3824
    %v3826 = vpop.f32.mrf.mxu0
    %v3827 = vadd.f32 %v3578, %v3826
    %3828 = vmatmul.bf16.gmra.mxu0 %v1978
    %v3829 = vpop.f32.mrf.mxu0
    %v3830 = vadd.f32 %v3581, %v3829
    %v3831 = vpop.f32.mrf.mxu0
    %v3832 = vadd.f32 %v3583, %v3831
    %3833 = vmatmul.bf16.gmra.mxu0 %v1984
    %v3834 = vpop.f32.mrf.mxu0
    %v3835 = vadd.f32 %v3586, %v3834
    %v3836 = vpop.f32.mrf.mxu0
    %v3837 = vadd.f32 %v3588, %v3836
    %3838 = vmatmul.bf16.gmra.mxu0 %v1990
    %v3839 = vpop.f32.mrf.mxu0
    %v3840 = vadd.f32 %v3591, %v3839
    %v3841 = vpop.f32.mrf.mxu0
    %v3842 = vadd.f32 %v3593, %v3841
    %3843 = vmatmul.bf16.gmra.mxu0 %v1996
    %v3844 = vpop.f32.mrf.mxu0
    %v3845 = vadd.f32 %v3596, %v3844
    %v3846 = vpop.f32.mrf.mxu0
    %v3847 = vadd.f32 %v3598, %v3846
    %3848 = vmatmul.bf16.gmra.mxu0 %v2002
    %v3849 = vpop.f32.mrf.mxu0
    %v3850 = vadd.f32 %v3601, %v3849
    %v3851 = vpop.f32.mrf.mxu0
    %v3852 = vadd.f32 %v3603, %v3851
    %3853 = vmatmul.bf16.gmra.mxu0 %v2008
    %v3854 = vpop.f32.mrf.mxu0
    %v3855 = vadd.f32 %v3606, %v3854
    %v3856 = vpop.f32.mrf.mxu0
    %v3857 = vadd.f32 %v3608, %v3856
    %3858 = vmatmul.bf16.gmra.mxu0 %v2014
    %v3859 = vpop.f32.mrf.mxu0
    %v3860 = vadd.f32 %v3611, %v3859
    %v3861 = vpop.f32.mrf.mxu0
    %v3862 = vadd.f32 %v3613, %v3861
    %3863 = vmatmul.bf16.gmra.mxu0 %v2020
    %v3864 = vpop.f32.mrf.mxu0
    %v3865 = vadd.f32 %v3616, %v3864
    %v3866 = vpop.f32.mrf.mxu0
    %v3867 = vadd.f32 %v3618, %v3866
    %3868 = vmatmul.bf16.gmra.mxu0 %v2026
    %v3869 = vpop.f32.mrf.mxu0
    %v3870 = vadd.f32 %v3621, %v3869
    %v3871 = vpop.f32.mrf.mxu0
    %v3872 = vadd.f32 %v3623, %v3871
    %3873 = vmatmul.bf16.gmra.mxu0 %v2032
    %v3874 = vpop.f32.mrf.mxu0
    %v3875 = vadd.f32 %v3626, %v3874
    %v3876 = vpop.f32.mrf.mxu0
    %v3877 = vadd.f32 %v3628, %v3876
    %3878 = vmatmul.bf16.gmra.mxu0 %v2038
    %v3879 = vpop.f32.mrf.mxu0
    %v3880 = vadd.f32 %v3631, %v3879
    %v3881 = vpop.f32.mrf.mxu0
    %v3882 = vadd.f32 %v3633, %v3881
    %3883 = vmatmul.bf16.gmra.mxu0 %v2044
    %v3884 = vpop.f32.mrf.mxu0
    %v3885 = vadd.f32 %v3636, %v3884
    %v3886 = vpop.f32.mrf.mxu0
    %v3887 = vadd.f32 %v3638, %v3886
    %3888 = vmatmul.bf16.gmra.mxu0 %v2050
    %v3889 = vpop.f32.mrf.mxu0
    %v3890 = vadd.f32 %v3641, %v3889
    %v3891 = vpop.f32.mrf.mxu0
    %v3892 = vadd.f32 %v3643, %v3891
    %3893 = vmatmul.bf16.gmra.mxu0 %v2056
    %v3894 = vpop.f32.mrf.mxu0
    %v3895 = vadd.f32 %v3646, %v3894
    %v3896 = vpop.f32.mrf.mxu0
    %v3897 = vadd.f32 %v3648, %v3896
    %3898 = vmatmul.bf16.gmra.mxu0 %v2062
    %v3899 = vpop.f32.mrf.mxu0
    %v3900 = vadd.f32 %v3651, %v3899
    %v3901 = vpop.f32.mrf.mxu0
    %v3902 = vadd.f32 %v3653, %v3901
    %3903 = vmatmul.bf16.gmra.mxu0 %v2068
    %v3904 = vpop.f32.mrf.mxu0
    %v3905 = vadd.f32 %v3656, %v3904
    %v3906 = vpop.f32.mrf.mxu0
    %v3907 = vadd.f32 %v3658, %v3906
    %3908 = vmatmul.bf16.gmra.mxu0 %v2074
    %v3909 = vpop.f32.mrf.mxu0
    %v3910 = vadd.f32 %v3661, %v3909
    %v3911 = vpop.f32.mrf.mxu0
    %v3912 = vadd.f32 %v3663, %v3911
    %3913 = vmatmul.bf16.gmra.mxu0 %v2080
    %v3914 = vpop.f32.mrf.mxu0
    %v3915 = vadd.f32 %v3666, %v3914
    %v3916 = vpop.f32.mrf.mxu0
    %v3917 = vadd.f32 %v3668, %v3916
    %3918 = vmatmul.bf16.gmra.mxu0 %v2086
    %v3919 = vpop.f32.mrf.mxu0
    %v3920 = vadd.f32 %v3671, %v3919
    %v3921 = vpop.f32.mrf.mxu0
    %v3922 = vadd.f32 %v3673, %v3921
    %3923 = vmatmul.bf16.gmra.mxu0 %v2092
    %v3924 = vpop.f32.mrf.mxu0
    %v3925 = vadd.f32 %v3676, %v3924
    %v3926 = vpop.f32.mrf.mxu0
    %v3927 = vadd.f32 %v3678, %v3926
    %3928 = vmatmul.bf16.gmra.mxu0 %v2098
    %v3929 = vpop.f32.mrf.mxu0
    %v3930 = vadd.f32 %v3681, %v3929
    %v3931 = vpop.f32.mrf.mxu0
    %v3932 = vadd.f32 %v3683, %v3931
    %3933 = vmatmul.bf16.gmra.mxu0 %v2104
    %v3934 = vpop.f32.mrf.mxu0
    %v3935 = vadd.f32 %v3686, %v3934
    %v3936 = vpop.f32.mrf.mxu0
    %v3937 = vadd.f32 %v3688, %v3936
    %3938 = vmatmul.bf16.gmra.mxu0 %v2110
    %v3939 = vpop.f32.mrf.mxu0
    %v3940 = vadd.f32 %v3691, %v3939
    %v3941 = vpop.f32.mrf.mxu0
    %v3942 = vadd.f32 %v3693, %v3941
    %3943 = vmatmul.bf16.gmra.mxu0 %v2116
    %v3944 = vpop.f32.mrf.mxu0
    %v3945 = vadd.f32 %v3696, %v3944
    %v3946 = vpop.f32.mrf.mxu0
    %v3947 = vadd.f32 %v3698, %v3946
    %3948 = vmatmul.bf16.gmra.mxu0 %v2122
    %v3949 = vpop.f32.mrf.mxu0
    %v3950 = vadd.f32 %v3701, %v3949
    %v3951 = vpop.f32.mrf.mxu0
    %v3952 = vadd.f32 %v3703, %v3951
    %3953 = vmatmul.bf16.gmra.mxu0 %v2128
    %v3954 = vpop.f32.mrf.mxu0
    %v3955 = vadd.f32 %v3706, %v3954
    %v3956 = vpop.f32.mrf.mxu0
    %v3957 = vadd.f32 %v3708, %v3956
    %3958 = vmatmul.bf16.gmra.mxu0 %v2134
    %v3959 = vpop.f32.mrf.mxu0
    %v3960 = vadd.f32 %v3711, %v3959
    %v3961 = vpop.f32.mrf.mxu0
    %v3962 = vadd.f32 %v3713, %v3961
    %3963 = vmatmul.bf16.gmra.mxu0 %v2140
    %v3964 = vpop.f32.mrf.mxu0
    %v3965 = vadd.f32 %v3716, %v3964
    %v3966 = vpop.f32.mrf.mxu0
    %v3967 = vadd.f32 %v3718, %v3966
    %3968 = vmatmul.bf16.gmra.mxu0 %v2146
    %v3969 = vpop.f32.mrf.mxu0
    %v3970 = vadd.f32 %v3721, %v3969
    %v3971 = vpop.f32.mrf.mxu0
    %v3972 = vadd.f32 %v3723, %v3971
    %3973 = vmatmul.bf16.gmra.mxu0 %v2152
    %v3974 = vpop.f32.mrf.mxu0
    %v3975 = vadd.f32 %v3726, %v3974
    %v3976 = vpop.f32.mrf.mxu0
    %v3977 = vadd.f32 %v3728, %v3976
    %3978 = vmatmul.bf16.gmra.mxu0 %v2158
    %v3979 = vpop.f32.mrf.mxu0
    %v3980 = vadd.f32 %v3731, %v3979
    %v3981 = vpop.f32.mrf.mxu0
    %v3982 = vadd.f32 %v3733, %v3981
    %3983 = vmatmul.bf16.gmra.mxu0 %v2164
    %v3984 = vpop.f32.mrf.mxu0
    %v3985 = vadd.f32 %v3736, %v3984
    %v3986 = vpop.f32.mrf.mxu0
    %v3987 = vadd.f32 %v3738, %v3986
    %3988 = vmatmul.bf16.gmra.mxu0 %v2170
    %v3989 = vpop.f32.mrf.mxu0
    %v3990 = vadd.f32 %v3741, %v3989
    %v3991 = vpop.f32.mrf.mxu0
    %v3992 = vadd.f32 %v3743, %v3991
    %3993 = vmatmul.bf16.gmra.mxu0 %v2176
    %v3994 = vpop.f32.mrf.mxu0
    %v3995 = vadd.f32 %v3746, %v3994
    %v3996 = vpop.f32.mrf.mxu0
    %v3997 = vadd.f32 %v3748, %v3996
    %3998 = vdwg.mxu0
    %3999 = vmatpush.bf16.msra.mxu0 %v2705
    %4000 = vmatpush.bf16.msra.mxu0 %v2704
    %4001 = vmatpush.bf16.msra.mxu0 %v2703
    %4002 = vmatpush.bf16.msra.mxu0 %v2702
    %4003 = vmatpush.bf16.msra.mxu0 %v2701
    %4004 = vmatpush.bf16.msra.mxu0 %v2700
    %4005 = vmatpush.bf16.msra.mxu0 %v2699
    %4006 = vmatpush.bf16.msra.mxu0 %v2698
    %4007 = vmatmul.bf16.gmra.mxu0 %v1895
    %v4008 = vpop.f32.mrf.mxu0
    %v4009 = vadd.f32 %v3760, %v4008
    %v4010 = vpop.f32.mrf.mxu0
    %v4011 = vadd.f32 %v3762, %v4010
    %4012 = vmatmul.bf16.gmra.mxu0 %v1901
    %v4013 = vpop.f32.mrf.mxu0
    %v4014 = vadd.f32 %v3765, %v4013
    %v4015 = vpop.f32.mrf.mxu0
    %v4016 = vadd.f32 %v3767, %v4015
    %4017 = vmatmul.bf16.gmra.mxu0 %v1907
    %v4018 = vpop.f32.mrf.mxu0
    %v4019 = vadd.f32 %v3770, %v4018
    %v4020 = vpop.f32.mrf.mxu0
    %v4021 = vadd.f32 %v3772, %v4020
    %4022 = vmatmul.bf16.gmra.mxu0 %v1913
    %v4023 = vpop.f32.mrf.mxu0
    %v4024 = vadd.f32 %v3775, %v4023
    %v4025 = vpop.f32.mrf.mxu0
    %v4026 = vadd.f32 %v3777, %v4025
    %4027 = vmatmul.bf16.gmra.mxu0 %v1919
    %v4028 = vpop.f32.mrf.mxu0
    %v4029 = vadd.f32 %v3780, %v4028
    %v4030 = vpop.f32.mrf.mxu0
    %v4031 = vadd.f32 %v3782, %v4030
    %4032 = vmatmul.bf16.gmra.mxu0 %v1925
    %v4033 = vpop.f32.mrf.mxu0
    %v4034 = vadd.f32 %v3785, %v4033
    %v4035 = vpop.f32.mrf.mxu0
    %v4036 = vadd.f32 %v3787, %v4035
    %4037 = vmatmul.bf16.gmra.mxu0 %v1931
    %v4038 = vpop.f32.mrf.mxu0
    %v4039 = vadd.f32 %v3790, %v4038
    %v4040 = vpop.f32.mrf.mxu0
    %v4041 = vadd.f32 %v3792, %v4040
    %4042 = vmatmul.bf16.gmra.mxu0 %v1937
    %v4043 = vpop.f32.mrf.mxu0
    %v4044 = vadd.f32 %v3795, %v4043
    %v4045 = vpop.f32.mrf.mxu0
    %v4046 = vadd.f32 %v3797, %v4045
    %4047 = vmatmul.bf16.gmra.mxu0 %v1943
    %v4048 = vpop.f32.mrf.mxu0
    %v4049 = vadd.f32 %v3800, %v4048
    %v4050 = vpop.f32.mrf.mxu0
    %v4051 = vadd.f32 %v3802, %v4050
    %4052 = vmatmul.bf16.gmra.mxu0 %v1949
    %v4053 = vpop.f32.mrf.mxu0
    %v4054 = vadd.f32 %v3805, %v4053
    %v4055 = vpop.f32.mrf.mxu0
    %v4056 = vadd.f32 %v3807, %v4055
    %4057 = vmatmul.bf16.gmra.mxu0 %v1955
    %v4058 = vpop.f32.mrf.mxu0
    %v4059 = vadd.f32 %v3810, %v4058
    %v4060 = vpop.f32.mrf.mxu0
    %v4061 = vadd.f32 %v3812, %v4060
    %4062 = vmatmul.bf16.gmra.mxu0 %v1961
    %v4063 = vpop.f32.mrf.mxu0
    %v4064 = vadd.f32 %v3815, %v4063
    %v4065 = vpop.f32.mrf.mxu0
    %v4066 = vadd.f32 %v3817, %v4065
    %4067 = vmatmul.bf16.gmra.mxu0 %v1967
    %v4068 = vpop.f32.mrf.mxu0
    %v4069 = vadd.f32 %v3820, %v4068
    %v4070 = vpop.f32.mrf.mxu0
    %v4071 = vadd.f32 %v3822, %v4070
    %4072 = vmatmul.bf16.gmra.mxu0 %v1973
    %v4073 = vpop.f32.mrf.mxu0
    %v4074 = vadd.f32 %v3825, %v4073
    %v4075 = vpop.f32.mrf.mxu0
    %v4076 = vadd.f32 %v3827, %v4075
    %4077 = vmatmul.bf16.gmra.mxu0 %v1979
    %v4078 = vpop.f32.mrf.mxu0
    %v4079 = vadd.f32 %v3830, %v4078
    %v4080 = vpop.f32.mrf.mxu0
    %v4081 = vadd.f32 %v3832, %v4080
    %4082 = vmatmul.bf16.gmra.mxu0 %v1985
    %v4083 = vpop.f32.mrf.mxu0
    %v4084 = vadd.f32 %v3835, %v4083
    %v4085 = vpop.f32.mrf.mxu0
    %v4086 = vadd.f32 %v3837, %v4085
    %4087 = vmatmul.bf16.gmra.mxu0 %v1991
    %v4088 = vpop.f32.mrf.mxu0
    %v4089 = vadd.f32 %v3840, %v4088
    %v4090 = vpop.f32.mrf.mxu0
    %v4091 = vadd.f32 %v3842, %v4090
    %4092 = vmatmul.bf16.gmra.mxu0 %v1997
    %v4093 = vpop.f32.mrf.mxu0
    %v4094 = vadd.f32 %v3845, %v4093
    %v4095 = vpop.f32.mrf.mxu0
    %v4096 = vadd.f32 %v3847, %v4095
    %4097 = vmatmul.bf16.gmra.mxu0 %v2003
    %v4098 = vpop.f32.mrf.mxu0
    %v4099 = vadd.f32 %v3850, %v4098
    %v4100 = vpop.f32.mrf.mxu0
    %v4101 = vadd.f32 %v3852, %v4100
    %4102 = vmatmul.bf16.gmra.mxu0 %v2009
    %v4103 = vpop.f32.mrf.mxu0
    %v4104 = vadd.f32 %v3855, %v4103
    %v4105 = vpop.f32.mrf.mxu0
    %v4106 = vadd.f32 %v3857, %v4105
    %4107 = vmatmul.bf16.gmra.mxu0 %v2015
    %v4108 = vpop.f32.mrf.mxu0
    %v4109 = vadd.f32 %v3860, %v4108
    %v4110 = vpop.f32.mrf.mxu0
    %v4111 = vadd.f32 %v3862, %v4110
    %4112 = vmatmul.bf16.gmra.mxu0 %v2021
    %v4113 = vpop.f32.mrf.mxu0
    %v4114 = vadd.f32 %v3865, %v4113
    %v4115 = vpop.f32.mrf.mxu0
    %v4116 = vadd.f32 %v3867, %v4115
    %4117 = vmatmul.bf16.gmra.mxu0 %v2027
    %v4118 = vpop.f32.mrf.mxu0
    %v4119 = vadd.f32 %v3870, %v4118
    %v4120 = vpop.f32.mrf.mxu0
    %v4121 = vadd.f32 %v3872, %v4120
    %4122 = vmatmul.bf16.gmra.mxu0 %v2033
    %v4123 = vpop.f32.mrf.mxu0
    %v4124 = vadd.f32 %v3875, %v4123
    %v4125 = vpop.f32.mrf.mxu0
    %v4126 = vadd.f32 %v3877, %v4125
    %4127 = vmatmul.bf16.gmra.mxu0 %v2039
    %v4128 = vpop.f32.mrf.mxu0
    %v4129 = vadd.f32 %v3880, %v4128
    %v4130 = vpop.f32.mrf.mxu0
    %v4131 = vadd.f32 %v3882, %v4130
    %4132 = vmatmul.bf16.gmra.mxu0 %v2045
    %v4133 = vpop.f32.mrf.mxu0
    %v4134 = vadd.f32 %v3885, %v4133
    %v4135 = vpop.f32.mrf.mxu0
    %v4136 = vadd.f32 %v3887, %v4135
    %4137 = vmatmul.bf16.gmra.mxu0 %v2051
    %v4138 = vpop.f32.mrf.mxu0
    %v4139 = vadd.f32 %v3890, %v4138
    %v4140 = vpop.f32.mrf.mxu0
    %v4141 = vadd.f32 %v3892, %v4140
    %4142 = vmatmul.bf16.gmra.mxu0 %v2057
    %v4143 = vpop.f32.mrf.mxu0
    %v4144 = vadd.f32 %v3895, %v4143
    %v4145 = vpop.f32.mrf.mxu0
    %v4146 = vadd.f32 %v3897, %v4145
    %4147 = vmatmul.bf16.gmra.mxu0 %v2063
    %v4148 = vpop.f32.mrf.mxu0
    %v4149 = vadd.f32 %v3900, %v4148
    %v4150 = vpop.f32.mrf.mxu0
    %v4151 = vadd.f32 %v3902, %v4150
    %4152 = vmatmul.bf16.gmra.mxu0 %v2069
    %v4153 = vpop.f32.mrf.mxu0
    %v4154 = vadd.f32 %v3905, %v4153
    %v4155 = vpop.f32.mrf.mxu0
    %v4156 = vadd.f32 %v3907, %v4155
    %4157 = vmatmul.bf16.gmra.mxu0 %v2075
    %v4158 = vpop.f32.mrf.mxu0
    %v4159 = vadd.f32 %v3910, %v4158
    %v4160 = vpop.f32.mrf.mxu0
    %v4161 = vadd.f32 %v3912, %v4160
    %4162 = vmatmul.bf16.gmra.mxu0 %v2081
    %v4163 = vpop.f32.mrf.mxu0
    %v4164 = vadd.f32 %v3915, %v4163
    %v4165 = vpop.f32.mrf.mxu0
    %v4166 = vadd.f32 %v3917, %v4165
    %4167 = vmatmul.bf16.gmra.mxu0 %v2087
    %v4168 = vpop.f32.mrf.mxu0
    %v4169 = vadd.f32 %v3920, %v4168
    %v4170 = vpop.f32.mrf.mxu0
    %v4171 = vadd.f32 %v3922, %v4170
    %4172 = vmatmul.bf16.gmra.mxu0 %v2093
    %v4173 = vpop.f32.mrf.mxu0
    %v4174 = vadd.f32 %v3925, %v4173
    %v4175 = vpop.f32.mrf.mxu0
    %v4176 = vadd.f32 %v3927, %v4175
    %4177 = vmatmul.bf16.gmra.mxu0 %v2099
    %v4178 = vpop.f32.mrf.mxu0
    %v4179 = vadd.f32 %v3930, %v4178
    %v4180 = vpop.f32.mrf.mxu0
    %v4181 = vadd.f32 %v3932, %v4180
    %4182 = vmatmul.bf16.gmra.mxu0 %v2105
    %v4183 = vpop.f32.mrf.mxu0
    %v4184 = vadd.f32 %v3935, %v4183
    %v4185 = vpop.f32.mrf.mxu0
    %v4186 = vadd.f32 %v3937, %v4185
    %4187 = vmatmul.bf16.gmra.mxu0 %v2111
    %v4188 = vpop.f32.mrf.mxu0
    %v4189 = vadd.f32 %v3940, %v4188
    %v4190 = vpop.f32.mrf.mxu0
    %v4191 = vadd.f32 %v3942, %v4190
    %4192 = vmatmul.bf16.gmra.mxu0 %v2117
    %v4193 = vpop.f32.mrf.mxu0
    %v4194 = vadd.f32 %v3945, %v4193
    %v4195 = vpop.f32.mrf.mxu0
    %v4196 = vadd.f32 %v3947, %v4195
    %4197 = vmatmul.bf16.gmra.mxu0 %v2123
    %v4198 = vpop.f32.mrf.mxu0
    %v4199 = vadd.f32 %v3950, %v4198
    %v4200 = vpop.f32.mrf.mxu0
    %v4201 = vadd.f32 %v3952, %v4200
    %4202 = vmatmul.bf16.gmra.mxu0 %v2129
    %v4203 = vpop.f32.mrf.mxu0
    %v4204 = vadd.f32 %v3955, %v4203
    %v4205 = vpop.f32.mrf.mxu0
    %v4206 = vadd.f32 %v3957, %v4205
    %4207 = vmatmul.bf16.gmra.mxu0 %v2135
    %v4208 = vpop.f32.mrf.mxu0
    %v4209 = vadd.f32 %v3960, %v4208
    %v4210 = vpop.f32.mrf.mxu0
    %v4211 = vadd.f32 %v3962, %v4210
    %4212 = vmatmul.bf16.gmra.mxu0 %v2141
    %v4213 = vpop.f32.mrf.mxu0
    %v4214 = vadd.f32 %v3965, %v4213
    %v4215 = vpop.f32.mrf.mxu0
    %v4216 = vadd.f32 %v3967, %v4215
    %4217 = vmatmul.bf16.gmra.mxu0 %v2147
    %v4218 = vpop.f32.mrf.mxu0
    %v4219 = vadd.f32 %v3970, %v4218
    %v4220 = vpop.f32.mrf.mxu0
    %v4221 = vadd.f32 %v3972, %v4220
    %4222 = vmatmul.bf16.gmra.mxu0 %v2153
    %v4223 = vpop.f32.mrf.mxu0
    %v4224 = vadd.f32 %v3975, %v4223
    %v4225 = vpop.f32.mrf.mxu0
    %v4226 = vadd.f32 %v3977, %v4225
    %4227 = vmatmul.bf16.gmra.mxu0 %v2159
    %v4228 = vpop.f32.mrf.mxu0
    %v4229 = vadd.f32 %v3980, %v4228
    %v4230 = vpop.f32.mrf.mxu0
    %v4231 = vadd.f32 %v3982, %v4230
    %4232 = vmatmul.bf16.gmra.mxu0 %v2165
    %v4233 = vpop.f32.mrf.mxu0
    %v4234 = vadd.f32 %v3985, %v4233
    %v4235 = vpop.f32.mrf.mxu0
    %v4236 = vadd.f32 %v3987, %v4235
    %4237 = vmatmul.bf16.gmra.mxu0 %v2171
    %v4238 = vpop.f32.mrf.mxu0
    %v4239 = vadd.f32 %v3990, %v4238
    %v4240 = vpop.f32.mrf.mxu0
    %v4241 = vadd.f32 %v3992, %v4240
    %4242 = vmatmul.bf16.gmra.mxu0 %v2177
    %v4243 = vpop.f32.mrf.mxu0
    %v4244 = vadd.f32 %v3995, %v4243
    %v4245 = vpop.f32.mrf.mxu0
    %v4246 = vadd.f32 %v3997, %v4245
    %4247 = vdwg.mxu0
    %v4248 = vtanh.pop %v4009
    %v4249 = vtanh.pop %v4011
    %v4250 = vtanh.pop %v4014
    %v4251 = vtanh.pop %v4016
    %v4252 = vtanh.pop %v4019
    %v4253 = vtanh.pop %v4021
    %v4254 = vtanh.pop %v4024
    %v4255 = vtanh.pop %v4026
    %v4256 = vtanh.pop %v4029
    %v4257 = vtanh.pop %v4031
    %v4258 = vtanh.pop %v4034
    %v4259 = vtanh.pop %v4036
    %v4260 = vtanh.pop %v4039
    %v4261 = vtanh.pop %v4041
    %v4262 = vtanh.pop %v4044
    %v4263 = vtanh.pop %v4046
    %v4264 = vtanh.pop %v4049
    %v4265 = vtanh.pop %v4051
    %v4266 = vtanh.pop %v4054
    %v4267 = vtanh.pop %v4056
    %v4268 = vtanh.pop %v4059
    %v4269 = vtanh.pop %v4061
    %v4270 = vtanh.pop %v4064
    %v4271 = vtanh.pop %v4066
    %v4272 = vtanh.pop %v4069
    %v4273 = vtanh.pop %v4071
    %v4274 = vtanh.pop %v4074
    %v4275 = vtanh.pop %v4076
    %v4276 = vtanh.pop %v4079
    %v4277 = vtanh.pop %v4081
    %v4278 = vtanh.pop %v4084
    %v4279 = vtanh.pop %v4086
    %v4280 = vtanh.pop %v4089
    %v4281 = vtanh.pop %v4091
    %v4282 = vtanh.pop %v4094
    %v4283 = vtanh.pop %v4096
    %v4284 = vtanh.pop %v4099
    %v4285 = vtanh.pop %v4101
    %v4286 = vtanh.pop %v4104
    %v4287 = vtanh.pop %v4106
    %v4288 = vtanh.pop %v4109
    %v4289 = vtanh.pop %v4111
    %v4290 = vtanh.pop %v4114
    %v4291 = vtanh.pop %v4116
    %v4292 = vtanh.pop %v4119
    %v4293 = vtanh.pop %v4121
    %v4294 = vtanh.pop %v4124
    %v4295 = vtanh.pop %v4126
    %v4296 = vtanh.pop %v4129
    %v4297 = vtanh.pop %v4131
    %v4298 = vtanh.pop %v4134
    %v4299 = vtanh.pop %v4136
    %v4300 = vtanh.pop %v4139
    %v4301 = vtanh.pop %v4141
    %v4302 = vtanh.pop %v4144
    %v4303 = vtanh.pop %v4146
    %v4304 = vtanh.pop %v4149
    %v4305 = vtanh.pop %v4151
    %v4306 = vtanh.pop %v4154
    %v4307 = vtanh.pop %v4156
    %v4308 = vtanh.pop %v4159
    %v4309 = vtanh.pop %v4161
    %v4310 = vtanh.pop %v4164
    %v4311 = vtanh.pop %v4166
    %v4312 = vtanh.pop %v4169
    %v4313 = vtanh.pop %v4171
    %v4314 = vtanh.pop %v4174
    %v4315 = vtanh.pop %v4176
    %v4316 = vtanh.pop %v4179
    %v4317 = vtanh.pop %v4181
    %v4318 = vtanh.pop %v4184
    %v4319 = vtanh.pop %v4186
    %v4320 = vtanh.pop %v4189
    %v4321 = vtanh.pop %v4191
    %v4322 = vtanh.pop %v4194
    %v4323 = vtanh.pop %v4196
    %v4324 = vtanh.pop %v4199
    %v4325 = vtanh.pop %v4201
    %v4326 = vtanh.pop %v4204
    %v4327 = vtanh.pop %v4206
    %v4328 = vtanh.pop %v4209
    %v4329 = vtanh.pop %v4211
    %v4330 = vtanh.pop %v4214
    %v4331 = vtanh.pop %v4216
    %v4332 = vtanh.pop %v4219
    %v4333 = vtanh.pop %v4221
    %v4334 = vtanh.pop %v4224
    %v4335 = vtanh.pop %v4226
    %v4336 = vtanh.pop %v4229
    %v4337 = vtanh.pop %v4231
    %v4338 = vtanh.pop %v4234
    %v4339 = vtanh.pop %v4236
    %v4340 = vtanh.pop %v4239
    %v4341 = vtanh.pop %v4241
    %v4342 = vtanh.pop %v4244
    %v4343 = vtanh.pop %v4246
    %v4344 = vld [vmem:[#allocation7] sm:$0x3f]
    %v4345 = vpack.c.bf16 %v4249, %v4248
    %v4346 = vpack.c.bf16 %v4251, %v4250
    %v4347 = vpack.c.bf16 %v4253, %v4252
    %v4348 = vpack.c.bf16 %v4255, %v4254
    %v4349 = vpack.c.bf16 %v4257, %v4256
    %v4350 = vpack.c.bf16 %v4259, %v4258
    %v4351 = vpack.c.bf16 %v4261, %v4260
    %v4352 = vpack.c.bf16 %v4263, %v4262
    %v4353 = vpack.c.bf16 %v4265, %v4264
    %v4354 = vpack.c.bf16 %v4267, %v4266
    %v4355 = vpack.c.bf16 %v4269, %v4268
    %v4356 = vpack.c.bf16 %v4271, %v4270
    %v4357 = vpack.c.bf16 %v4273, %v4272
    %v4358 = vpack.c.bf16 %v4275, %v4274
    %v4359 = vpack.c.bf16 %v4277, %v4276
    %v4360 = vpack.c.bf16 %v4279, %v4278
    %v4361 = vpack.c.bf16 %v4281, %v4280
    %v4362 = vpack.c.bf16 %v4283, %v4282
    %v4363 = vpack.c.bf16 %v4285, %v4284
    %v4364 = vpack.c.bf16 %v4287, %v4286
    %v4365 = vpack.c.bf16 %v4289, %v4288
    %v4366 = vpack.c.bf16 %v4291, %v4290
    %v4367 = vpack.c.bf16 %v4293, %v4292
    %v4368 = vpack.c.bf16 %v4295, %v4294
    %v4369 = vpack.c.bf16 %v4297, %v4296
    %v4370 = vpack.c.bf16 %v4299, %v4298
    %v4371 = vpack.c.bf16 %v4301, %v4300
    %v4372 = vpack.c.bf16 %v4303, %v4302
    %v4373 = vpack.c.bf16 %v4305, %v4304
    %v4374 = vpack.c.bf16 %v4307, %v4306
    %v4375 = vpack.c.bf16 %v4309, %v4308
    %v4376 = vpack.c.bf16 %v4311, %v4310
    %v4377 = vpack.c.bf16 %v4313, %v4312
    %v4378 = vpack.c.bf16 %v4315, %v4314
    %v4379 = vpack.c.bf16 %v4317, %v4316
    %v4380 = vpack.c.bf16 %v4319, %v4318
    %v4381 = vpack.c.bf16 %v4321, %v4320
    %v4382 = vpack.c.bf16 %v4323, %v4322
    %v4383 = vpack.c.bf16 %v4325, %v4324
    %v4384 = vpack.c.bf16 %v4327, %v4326
    %v4385 = vpack.c.bf16 %v4329, %v4328
    %v4386 = vpack.c.bf16 %v4331, %v4330
    %v4387 = vpack.c.bf16 %v4333, %v4332
    %v4388 = vpack.c.bf16 %v4335, %v4334
    %v4389 = vpack.c.bf16 %v4337, %v4336
    %v4390 = vpack.c.bf16 %v4339, %v4338
    %v4391 = vpack.c.bf16 %v4341, %v4340
    %v4392 = vpack.c.bf16 %v4343, %v4342
    %v4393 = vld [vmem:[%s4] sm:$0x3]
    %4395 = vset.pattern.permute.xlu0 0
    %4396 = vperm.xlu0 %4395, %v4393
    %v4397 = vpop.permute.xlu0 %4396
    %4400 = vst [vmem:[#allocation1] ss:$9 sm:$0xff] %v4344
    %v4401 = vld [vmem:[#allocation1] sm:$0xff]
    %v4402 = vld [vmem:[#allocation1 + $0x9] sm:$0xff]
    %v4403 = vld [vmem:[#allocation1 + $0x12] sm:$0xff]
    %v4404 = vld [vmem:[#allocation1 + $0x1b] sm:$0xff]
    %v4405 = vld [vmem:[#allocation1 + $0x24] sm:$0xff]
    %v4406 = vld [vmem:[#allocation1 + $0x2d] sm:$0xff]
    %4413 = vmatpush.bf16.msra.mxu0 %v4352
    %4414 = vmatpush.bf16.msra.mxu0 %v4351
    %4415 = vmatpush.bf16.msra.mxu0 %v4350
    %4416 = vmatpush.bf16.msra.mxu0 %v4349
    %4417 = vmatpush.bf16.msra.mxu0 %v4348
    %4418 = vmatpush.bf16.msra.mxu0 %v4347
    %4419 = vmatpush.bf16.msra.mxu0 %v4346
    %4420 = vmatpush.bf16.msra.mxu0 %v4345
    %4421 = vmatmul.bf16.gmra.mxu0 %v4401
    %v4422 = vpop.f32.mrf.mxu0
    %v4423 = vadd.f32 %v4397, %v4422
    %v4424 = vpop.f32.mrf.mxu0
    %4425 = vdwg.mxu0
    %4426 = vmatpush.bf16.msra.mxu0 %v4360
    %4427 = vmatpush.bf16.msra.mxu0 %v4359
    %4428 = vmatpush.bf16.msra.mxu0 %v4358
    %4429 = vmatpush.bf16.msra.mxu0 %v4357
    %4430 = vmatpush.bf16.msra.mxu0 %v4356
    %4431 = vmatpush.bf16.msra.mxu0 %v4355
    %4432 = vmatpush.bf16.msra.mxu0 %v4354
    %4433 = vmatpush.bf16.msra.mxu0 %v4353
    %4434 = vmatmul.bf16.gmra.mxu0 %v4402
    %v4435 = vpop.f32.mrf.mxu0
    %v4436 = vadd.f32 %v4423, %v4435
    %v4437 = vpop.f32.mrf.mxu0
    %4438 = vdwg.mxu0
    %4439 = vmatpush.bf16.msra.mxu0 %v4368
    %4440 = vmatpush.bf16.msra.mxu0 %v4367
    %4441 = vmatpush.bf16.msra.mxu0 %v4366
    %4442 = vmatpush.bf16.msra.mxu0 %v4365
    %4443 = vmatpush.bf16.msra.mxu0 %v4364
    %4444 = vmatpush.bf16.msra.mxu0 %v4363
    %4445 = vmatpush.bf16.msra.mxu0 %v4362
    %4446 = vmatpush.bf16.msra.mxu0 %v4361
    %4447 = vmatmul.bf16.gmra.mxu0 %v4403
    %v4448 = vpop.f32.mrf.mxu0
    %v4449 = vadd.f32 %v4436, %v4448
    %v4450 = vpop.f32.mrf.mxu0
    %4451 = vdwg.mxu0
    %4452 = vmatpush.bf16.msra.mxu0 %v4376
    %4453 = vmatpush.bf16.msra.mxu0 %v4375
    %4454 = vmatpush.bf16.msra.mxu0 %v4374
    %4455 = vmatpush.bf16.msra.mxu0 %v4373
    %4456 = vmatpush.bf16.msra.mxu0 %v4372
    %4457 = vmatpush.bf16.msra.mxu0 %v4371
    %4458 = vmatpush.bf16.msra.mxu0 %v4370
    %4459 = vmatpush.bf16.msra.mxu0 %v4369
    %4460 = vmatmul.bf16.gmra.mxu0 %v4404
    %v4461 = vpop.f32.mrf.mxu0
    %v4462 = vadd.f32 %v4449, %v4461
    %v4463 = vpop.f32.mrf.mxu0
    %4464 = vdwg.mxu0
    %4465 = vmatpush.bf16.msra.mxu0 %v4384
    %4466 = vmatpush.bf16.msra.mxu0 %v4383
    %4467 = vmatpush.bf16.msra.mxu0 %v4382
    %4468 = vmatpush.bf16.msra.mxu0 %v4381
    %4469 = vmatpush.bf16.msra.mxu0 %v4380
    %4470 = vmatpush.bf16.msra.mxu0 %v4379
    %4471 = vmatpush.bf16.msra.mxu0 %v4378
    %4472 = vmatpush.bf16.msra.mxu0 %v4377
    %4473 = vmatmul.bf16.gmra.mxu0 %v4405
    %v4474 = vpop.f32.mrf.mxu0
    %v4475 = vadd.f32 %v4462, %v4474
    %v4476 = vpop.f32.mrf.mxu0
    %4477 = vdwg.mxu0
    %4478 = vmatpush.bf16.msra.mxu0 %v4392
    %4479 = vmatpush.bf16.msra.mxu0 %v4391
    %4480 = vmatpush.bf16.msra.mxu0 %v4390
    %4481 = vmatpush.bf16.msra.mxu0 %v4389
    %4482 = vmatpush.bf16.msra.mxu0 %v4388
    %4483 = vmatpush.bf16.msra.mxu0 %v4387
    %4484 = vmatpush.bf16.msra.mxu0 %v4386
    %4485 = vmatpush.bf16.msra.mxu0 %v4385
    %4486 = vmatmul.bf16.gmra.mxu0 %v4406
    %v4487 = vpop.f32.mrf.mxu0
    %v4488 = vadd.f32 %v4475, %v4487
    %v4489 = vpop.f32.mrf.mxu0
    %4490 = vdwg.mxu0
    %4491 = vst [vmem:[#allocation8] sm:$0x3] %v4488
    // Predicated region
    $region34: #{tpu_custom_call.1} parent=1 // pred_check
      _
    $region35: #{tpu_custom_call.1} parent=1 // pred_check_branch
      %4493 = sbr.rel (0) target = $region37
    $region36: #{tpu_custom_call.1} parent=1 // pred_region
      %4495 = vsyncadd [#allocation4], 0
      %s4497 = sshll.u32 [#allocation8], 4
      %s4498 = int_to_ptr.vmem [resolvable:$true] %s4497
      %s4499 = sshll.u32 %s5, 4
      %s4500 = int_to_ptr.hbm [resolvable:$true] %s4499
      %4502 = dma.vmem_to_hbm [thread:$0]  %s4498, 32, %s4500, [#allocation4]
    $region37: #{tpu_custom_call.1} parent=1 // pred_fallthru
      _
    // Predicated region
    $region38: #{tpu_custom_call.1} parent=1 // pred_check
      _
    $region39: #{tpu_custom_call.1} parent=1 // pred_check_branch
      %4504 = sbr.rel (0) target = $region41
    $region40: #{tpu_custom_call.1} parent=1 // pred_region
      %4506 = dma.done [#allocation4], 32
    $region41: #{tpu_custom_call.1} parent=1 // pred_fallthru
      _
    %4507 = vsyncpa [#allocation3], 1
    %4508 = vsyncpa [#allocation6], 1
    %4509 = vsyncpa [#allocation4], 1

</llo_original>
